<compile_context>
chip_gen: v7x
topology: tpu7x:2x2x1
jax: 0.10.0
libtpu: 0.0.40
codegen_flags: <defaults>
</compile_context>

<pallas_src>
import jax
import jax.numpy as jnp
from jax.experimental import pallas as pl
from jax.experimental.pallas import tpu as pltpu


NUM_ACTIONS = 4
KSIZE = 3          # conv kernel size (both convs)
C_IN = 3           # input channels
C1 = 16            # conv1 output channels
C2 = 32            # conv2 output channels
HIDDEN = 256       # fc1 output features
LANE = 128         # TPU lane width


def _round_up(x, m):
    return (x + m - 1) // m * m


# ----------------------------------------------------------------------------
# Fused forward kernel: one grid step == one batch tile (B_TILE elements).
#   x_ref : (BT, H0, W0*C_IN)         bf16  rows = h, lanes = w*C_IN + c
#   m1    : (3,  W0*C_IN, W1*C1)      bf16  conv1 kw-summed block-diag taps
#   m2    : (3,  W1*C1,  W2*C2)       bf16  conv2 kw-summed block-diag taps
#   w3    : (H2, W2*C2, HIDDEN)       bf16  fc1 (PyTorch flatten folded in)
#   w4    : (HIDDEN, NPAD)            bf16  fc2 (transposed, padded to 128 lanes)
#   b*    : f32 biases pre-broadcast to the lane layouts above
#   o_ref : (BT, NPAD)                f32   Q-values (first NUM_ACTIONS valid)
# ----------------------------------------------------------------------------
def _dqn_fused_kernel(x_ref, m1_ref, b1_ref, m2_ref, b2_ref,
                      w3_ref, b3_ref, w4_ref, b4_ref, o_ref):
    BT, H0, KX = x_ref.shape
    H1 = H0 - KSIZE + 1          # conv1 output height
    H2 = H1 - KSIZE + 1          # conv2 output height
    N1 = m1_ref.shape[2]         # W1*C1
    N2 = m2_ref.shape[2]         # W2*C2

    # ---- conv1 + bias + ReLU: 3 accumulating 2D matmuls (kw folded into taps)
    acc1 = jnp.zeros((BT * H1, N1), jnp.float32)
    for kh in range(KSIZE):
        lhs = x_ref[:, kh:kh + H1, :].reshape(BT * H1, KX)      # bf16, M=BT*H1
        acc1 += jnp.dot(lhs, m1_ref[kh], preferred_element_type=jnp.float32)
    r1 = jnp.maximum(acc1 + b1_ref[...], 0.0).astype(jnp.bfloat16)
    r1 = r1.reshape(BT, H1, N1)                                  # cast once

    # ---- conv2 + bias + ReLU ------------------------------------------------
    acc2 = jnp.zeros((BT * H2, N2), jnp.float32)
    for kh in range(KSIZE):
        lhs = r1[:, kh:kh + H2, :].reshape(BT * H2, N1)          # M = BT*H2
        acc2 += jnp.dot(lhs, m2_ref[kh], preferred_element_type=jnp.float32)
    r2 = jnp.maximum(acc2 + b2_ref[...], 0.0).astype(jnp.bfloat16)
    r2 = r2.reshape(BT, H2, N2)

    # ---- fc1 + bias + ReLU (channel-major flatten folded into w3) -----------
    acc3 = jnp.zeros((BT, w3_ref.shape[2]), jnp.float32)
    for h in range(H2):
        acc3 += jnp.dot(r2[:, h, :], w3_ref[h],                  # (BT,192)x(192,256)
                        preferred_element_type=jnp.float32)
    r3 = jnp.maximum(acc3 + b3_ref[...], 0.0).astype(jnp.bfloat16)

    # ---- fc2 + bias: lane-dense unmasked (BT, 128) store ---------------------
    out = jnp.dot(r3, w4_ref[...], preferred_element_type=jnp.float32) + b4_ref[...]
    o_ref[...] = out.astype(o_ref.dtype)


# ----------------------------------------------------------------------------
# One-time parameter preprocessing (outside the forward hot path).
# ----------------------------------------------------------------------------
def preprocess_params(params, grid_size=10, dtype=jnp.bfloat16):
    w1, b1 = params["w1"], params["b1"]              # (C1, C_IN, 3, 3), (C1,)
    w2, b2 = params["w2"], params["b2"]              # (C2, C1, 3, 3),  (C2,)
    fc1_w, fc1_b = params["fc1_w"], params["fc1_b"]  # (HIDDEN, C2*H2*W2)
    fc2_w, fc2_b = params["fc2_w"], params["fc2_b"]  # (NUM_ACTIONS, HIDDEN)

    W0 = grid_size
    W1 = W0 - KSIZE + 1
    W2 = W1 - KSIZE + 1
    H2 = W2

    def conv_taps(w, w_in, w_out):
        # Block-diagonal "tap" matrices pre-summed over kw (exact: the LHS row
        # window x[kh:kh+Hout, :] depends only on kh; the kw shift lives in the
        # matrix):  M_kh[win*cin + c, wo*cout + o] = sum_kw w[o,c,kh,kw]*[win==wo+kw]
        cout, cin = w.shape[0], w.shape[1]
        taps = []
        for kh in range(KSIZE):
            m = jnp.zeros((w_in * cin, w_out * cout), jnp.float32)
            for kw in range(KSIZE):                       # sum over kw ONLY
                a = w[:, :, kh, kw].astype(jnp.float32)                  # (o, c)
                sel = (jnp.arange(w_in)[:, None]
                       == jnp.arange(w_out)[None, :] + kw)              # (win, wo)
                blk = jnp.einsum("oc,wv->wcvo", a, sel.astype(jnp.float32))
                m = m + blk.reshape(w_in * cin, w_out * cout)
            taps.append(m)
        return jnp.stack(taps).astype(dtype)

    m1 = conv_taps(w1, W0, W1)                            # (3, W0*3,  W1*16)
    m2 = conv_taps(w2, W1, W2)                            # (3, W1*16, W2*32)
    b1l = jnp.tile(b1, W1).reshape(1, W1 * C1).astype(jnp.float32)
    b2l = jnp.tile(b2, W2).reshape(1, W2 * C2).astype(jnp.float32)

    # fc1: fc1_w[n, c*H2*W2 + h*W2 + w] -> w3[h, w*C2 + c, n]
    w3 = fc1_w.reshape(HIDDEN, C2, H2, W2)
    w3 = jnp.transpose(w3, (2, 3, 1, 0)).reshape(H2, W2 * C2, HIDDEN).astype(dtype)
    b3 = fc1_b.reshape(1, HIDDEN).astype(jnp.float32)

    # fc2: transpose + zero-pad the action dim to a full 128-lane tile.
    na = fc2_w.shape[0]
    npad = max(LANE, _round_up(na, LANE))
    w4 = jnp.zeros((HIDDEN, npad), jnp.float32).at[:, :na].set(fc2_w.T).astype(dtype)
    b4 = jnp.zeros((1, npad), jnp.float32).at[0, :na].set(fc2_b)

    return {"m1": m1, "b1": b1l, "m2": m2, "b2": b2l,
            "w3": w3, "b3": b3, "w4": w4, "b4": b4}


def _batch_tiling(batch, target_tile=64):
    # Sublane-aligned batch tile (multiple of 8 -> unmasked (BT,128) output
    # stores).  Keep >= 2 grid steps when the batch is large enough so v7x's
    # two TensorCores both get work; v5e/v6e are single-core and unaffected.
    bt = min(target_tile, _round_up(batch, 8))
    if batch <= bt and batch > 8:
        bt = _round_up(pl.cdiv(batch, 2), 8)
    b_pad = _round_up(batch, bt)
    return bt, b_pad


# ----------------------------------------------------------------------------
# Forward wrapper: one pallas_call for the whole network.
# ----------------------------------------------------------------------------
def dqn_forward(x_nchw, kp, num_actions=NUM_ACTIONS, batch_tile=64):
    B, c_in, H0, W0 = x_nchw.shape
    assert c_in == C_IN, (c_in, C_IN)
    H1, W1 = H0 - KSIZE + 1, W0 - KSIZE + 1
    H2, W2 = H1 - KSIZE + 1, W1 - KSIZE + 1
    npad = kp["w4"].shape[1]

    bt, b_pad = _batch_tiling(B, batch_tile)
    grid = (b_pad // bt,)

    # NCHW -> (B, H, W*C) lane-major layout, bf16 (MXU-native), batch zero-padded
    # to a whole number of tiles.  This is the only XLA glue in the hot path.
    x2d = jnp.transpose(x_nchw, (0, 2, 3, 1)).reshape(B, H0, W0 * c_in)
    x2d = x2d.astype(jnp.bfloat16)
    if b_pad != B:
        x2d = jnp.pad(x2d, ((0, b_pad - B), (0, 0), (0, 0)))

    flops = 2 * b_pad * (KSIZE * H1 * (W0 * c_in) * (W1 * C1)
                         + KSIZE * H2 * (W1 * C1) * (W2 * C2)
                         + H2 * (W2 * C2) * HIDDEN
                         + HIDDEN * npad)
    bytes_accessed = int(x2d.size) * 2 + b_pad * npad * 4 + sum(
        int(kp[k].size) * kp[k].dtype.itemsize
        for k in ("m1", "b1", "m2", "b2", "w3", "b3", "w4", "b4"))

    out = pl.pallas_call(
        _dqn_fused_kernel,
        grid=grid,
        in_specs=[
            pl.BlockSpec((bt, H0, W0 * c_in), lambda b: (b, 0, 0)),   # x tile
            pl.BlockSpec(kp["m1"].shape, lambda b: (0, 0, 0)),        # conv1 taps
            pl.BlockSpec(kp["b1"].shape, lambda b: (0, 0)),
            pl.BlockSpec(kp["m2"].shape, lambda b: (0, 0, 0)),        # conv2 taps
            pl.BlockSpec(kp["b2"].shape, lambda b: (0, 0)),
            pl.BlockSpec(kp["w3"].shape, lambda b: (0, 0, 0)),        # fc1
            pl.BlockSpec(kp["b3"].shape, lambda b: (0, 0)),
            pl.BlockSpec(kp["w4"].shape, lambda b: (0, 0)),           # fc2
            pl.BlockSpec(kp["b4"].shape, lambda b: (0, 0)),
        ],
        out_specs=pl.BlockSpec((bt, npad), lambda b: (b, 0)),
        out_shape=jax.ShapeDtypeStruct((b_pad, npad), jnp.float32),
        compiler_params=pltpu.CompilerParams(
            dimension_semantics=("parallel",)),     # shards tiles over v7x's 2 TCs
        cost_estimate=pl.CostEstimate(flops=flops, transcendentals=0,
                                      bytes_accessed=int(bytes_accessed)),
    )(x2d, kp["m1"], kp["b1"], kp["m2"], kp["b2"],
      kp["w3"], kp["b3"], kp["w4"], kp["b4"])

    return out[:B, :num_actions]


# ----------------------------------------------------------------------------
# Pure-JAX reference (mirrors the PyTorch module exactly, f32 everywhere).
# ----------------------------------------------------------------------------
def dqn_reference(x_nchw, params):
    dn = ("NCHW", "OIHW", "NCHW")
    h = jax.lax.conv_general_dilated(x_nchw, params["w1"], (1, 1), "VALID",
                                     dimension_numbers=dn)
    h = jax.nn.relu(h + params["b1"][None, :, None, None])
    h = jax.lax.conv_general_dilated(h, params["w2"], (1, 1), "VALID",
                                     dimension_numbers=dn)
    h = jax.nn.relu(h + params["b2"][None, :, None, None])
    h = h.reshape(h.shape[0], -1)
    h = jax.nn.relu(h @ params["fc1_w"].T + params["fc1_b"])
    return h @ params["fc2_w"].T + params["fc2_b"]


def init_params(key, grid_size=10):
    fdim = C2 * (grid_size - 4) * (grid_size - 4)         # 1152 for grid_size=10
    ks = jax.random.split(key, 8)
    s = 0.05
    return {
        "w1": s * jax.random.normal(ks[0], (C1, C_IN, 3, 3), jnp.float32),
        "b1": s * jax.random.normal(ks[1], (C1,), jnp.float32),
        "w2": s * jax.random.normal(ks[2], (C2, C1, 3, 3), jnp.float32),
        "b2": s * jax.random.normal(ks[3], (C2,), jnp.float32),
        "fc1_w": s * jax.random.normal(ks[4], (HIDDEN, fdim), jnp.float32),
        "fc1_b": s * jax.random.normal(ks[5], (HIDDEN,), jnp.float32),
        "fc2_w": s * jax.random.normal(ks[6], (NUM_ACTIONS, HIDDEN), jnp.float32),
        "fc2_b": s * jax.random.normal(ks[7], (NUM_ACTIONS,), jnp.float32),
    }


if __name__ == "__main__":
    key = jax.random.PRNGKey(0)
    k_params, k_x = jax.random.split(key)

    grid_size = 10                 # fixed by fc1's input dim in the spec
    batch = 10                     # small; exercises batch padding and a 2-step grid
    params = init_params(k_params, grid_size)
    kparams = preprocess_params(params, grid_size)    # one-time repack (bf16)
    x = jax.random.normal(k_x, (batch, C_IN, grid_size, grid_size), jnp.float32)

    fwd = jax.jit(dqn_forward)
    out = jax.block_until_ready(fwd(x, kparams))
    assert out.shape == (batch, NUM_ACTIONS), out.shape

    ref = jax.block_until_ready(dqn_reference(x, params))
    max_err = float(jnp.max(jnp.abs(out - ref)))
    # bf16 input/weights with f32 accumulation and f32 bias/ReLU: small
    # quantization tolerance.  A layout/permutation bug would produce errors on
    # the scale of the outputs (~1e-1), far above this threshold.
    assert jnp.allclose(out, ref, rtol=2e-2, atol=2e-2), (
        "mismatch vs reference", max_err)

    print("KERNEL_OK")
</pallas_src>

<mosaic_0001>
module attributes {stable_mosaic.version = 11 : i64} {
  func.func @_dqn_fused_kernel(%arg0: i32, %arg1: memref<8x10x30xbf16, #tpu.memory_space<vmem>>, %arg2: memref<3x30x128xbf16, #tpu.memory_space<vmem>>, %arg3: memref<1x128xf32, #tpu.memory_space<vmem>>, %arg4: memref<3x128x192xbf16, #tpu.memory_space<vmem>>, %arg5: memref<1x192xf32, #tpu.memory_space<vmem>>, %arg6: memref<6x192x256xbf16, #tpu.memory_space<vmem>>, %arg7: memref<1x256xf32, #tpu.memory_space<vmem>>, %arg8: memref<256x128xbf16, #tpu.memory_space<vmem>>, %arg9: memref<1x128xf32, #tpu.memory_space<vmem>>, %arg10: memref<8x128xf32, #tpu.memory_space<vmem>>) attributes {dimension_semantics = [#tpu.dimension_semantics<parallel>], iteration_bounds = array<i64: 2>, scalar_prefetch = 0 : i64, scratch_operands = 0 : i64, tpu.core_type = #tpu.core_type<tc>, window_params = [{transform_indices = @transform_0, window_bounds = array<i64: 8, 10, 30>}, {pipeline_mode = #tpu.pipeline_mode<synchronous>, transform_indices = @transform_1, window_bounds = array<i64: 3, 30, 128>}, {pipeline_mode = #tpu.pipeline_mode<synchronous>, transform_indices = @transform_2, window_bounds = array<i64: 1, 128>}, {pipeline_mode = #tpu.pipeline_mode<synchronous>, transform_indices = @transform_3, window_bounds = array<i64: 3, 128, 192>}, {pipeline_mode = #tpu.pipeline_mode<synchronous>, transform_indices = @transform_4, window_bounds = array<i64: 1, 192>}, {pipeline_mode = #tpu.pipeline_mode<synchronous>, transform_indices = @transform_5, window_bounds = array<i64: 6, 192, 256>}, {pipeline_mode = #tpu.pipeline_mode<synchronous>, transform_indices = @transform_6, window_bounds = array<i64: 1, 256>}, {pipeline_mode = #tpu.pipeline_mode<synchronous>, transform_indices = @transform_7, window_bounds = array<i64: 256, 128>}, {pipeline_mode = #tpu.pipeline_mode<synchronous>, transform_indices = @transform_8, window_bounds = array<i64: 1, 128>}, {transform_indices = @transform_9, window_bounds = array<i64: 8, 128>}]} {
    %cst = arith.constant 0.000000e+00 : f32
    %0 = vector.broadcast %cst : f32 to vector<64x128xf32>
    %c0 = arith.constant 0 : index
    %c0_0 = arith.constant 0 : index
    %c0_1 = arith.constant 0 : index
    %1 = vector.load %arg1[%c0, %c0_0, %c0_1] : memref<8x10x30xbf16, #tpu.memory_space<vmem>>, vector<8x8x30xbf16>
    %2 = vector.shape_cast %1 : vector<8x8x30xbf16> to vector<64x30xbf16>
    %c0_2 = arith.constant 0 : index
    %c0_3 = arith.constant 0 : index
    %c0_4 = arith.constant 0 : index
    %3 = vector.load %arg2[%c0_2, %c0_3, %c0_4] : memref<3x30x128xbf16, #tpu.memory_space<vmem>>, vector<1x30x128xbf16>
    %4 = vector.shape_cast %3 : vector<1x30x128xbf16> to vector<30x128xbf16>
    %cst_5 = arith.constant dense<0.000000e+00> : vector<64x128xf32>
    %5 = tpu.matmul %2, %4, %cst_5 {dimension_numbers = #tpu.dot_dimension_numbers<[1], [0], [0], [1], [0, 0, 1, 1], [], []>} : vector<64x30xbf16>, vector<30x128xbf16>, vector<64x128xf32> -> vector<64x128xf32>
    %6 = arith.addf %0, %5 : vector<64x128xf32>
    %c0_6 = arith.constant 0 : index
    %c1 = arith.constant 1 : index
    %c0_7 = arith.constant 0 : index
    %7 = vector.load %arg1[%c0_6, %c1, %c0_7] : memref<8x10x30xbf16, #tpu.memory_space<vmem>>, vector<8x8x30xbf16>
    %8 = vector.shape_cast %7 : vector<8x8x30xbf16> to vector<64x30xbf16>
    %c1_8 = arith.constant 1 : index
    %c0_9 = arith.constant 0 : index
    %c0_10 = arith.constant 0 : index
    %9 = vector.load %arg2[%c1_8, %c0_9, %c0_10] : memref<3x30x128xbf16, #tpu.memory_space<vmem>>, vector<1x30x128xbf16>
    %10 = vector.shape_cast %9 : vector<1x30x128xbf16> to vector<30x128xbf16>
    %cst_11 = arith.constant dense<0.000000e+00> : vector<64x128xf32>
    %11 = tpu.matmul %8, %10, %cst_11 {dimension_numbers = #tpu.dot_dimension_numbers<[1], [0], [0], [1], [0, 0, 1, 1], [], []>} : vector<64x30xbf16>, vector<30x128xbf16>, vector<64x128xf32> -> vector<64x128xf32>
    %12 = arith.addf %6, %11 : vector<64x128xf32>
    %c0_12 = arith.constant 0 : index
    %c2 = arith.constant 2 : index
    %c0_13 = arith.constant 0 : index
    %13 = vector.load %arg1[%c0_12, %c2, %c0_13] : memref<8x10x30xbf16, #tpu.memory_space<vmem>>, vector<8x8x30xbf16>
    %14 = vector.shape_cast %13 : vector<8x8x30xbf16> to vector<64x30xbf16>
    %c2_14 = arith.constant 2 : index
    %c0_15 = arith.constant 0 : index
    %c0_16 = arith.constant 0 : index
    %15 = vector.load %arg2[%c2_14, %c0_15, %c0_16] : memref<3x30x128xbf16, #tpu.memory_space<vmem>>, vector<1x30x128xbf16>
    %16 = vector.shape_cast %15 : vector<1x30x128xbf16> to vector<30x128xbf16>
    %cst_17 = arith.constant dense<0.000000e+00> : vector<64x128xf32>
    %17 = tpu.matmul %14, %16, %cst_17 {dimension_numbers = #tpu.dot_dimension_numbers<[1], [0], [0], [1], [0, 0, 1, 1], [], []>} : vector<64x30xbf16>, vector<30x128xbf16>, vector<64x128xf32> -> vector<64x128xf32>
    %18 = arith.addf %12, %17 : vector<64x128xf32>
    %c0_18 = arith.constant 0 : index
    %c0_19 = arith.constant 0 : index
    %19 = vector.load %arg3[%c0_18, %c0_19] : memref<1x128xf32, #tpu.memory_space<vmem>>, vector<1x128xf32>
    %20 = vector.broadcast %19 : vector<1x128xf32> to vector<64x128xf32>
    %21 = arith.addf %18, %20 : vector<64x128xf32>
    %cst_20 = arith.constant 0.000000e+00 : f32
    %22 = vector.broadcast %cst_20 : f32 to vector<64x128xf32>
    %23 = arith.maximumf %21, %22 : vector<64x128xf32>
    %24 = arith.truncf %23 : vector<64x128xf32> to vector<64x128xbf16>
    %25 = vector.shape_cast %24 : vector<64x128xbf16> to vector<8x8x128xbf16>
    %cst_21 = arith.constant 0.000000e+00 : f32
    %26 = vector.broadcast %cst_21 : f32 to vector<48x192xf32>
    %27 = vector.extract_strided_slice %25 {offsets = [0, 0, 0], sizes = [8, 6, 128], strides = [1, 1, 1]} : vector<8x8x128xbf16> to vector<8x6x128xbf16>
    %28 = vector.shape_cast %27 : vector<8x6x128xbf16> to vector<48x128xbf16>
    %c0_22 = arith.constant 0 : index
    %c0_23 = arith.constant 0 : index
    %c0_24 = arith.constant 0 : index
    %29 = vector.load %arg4[%c0_22, %c0_23, %c0_24] : memref<3x128x192xbf16, #tpu.memory_space<vmem>>, vector<1x128x192xbf16>
    %30 = vector.shape_cast %29 : vector<1x128x192xbf16> to vector<128x192xbf16>
    %cst_25 = arith.constant dense<0.000000e+00> : vector<48x192xf32>
    %31 = tpu.matmul %28, %30, %cst_25 {dimension_numbers = #tpu.dot_dimension_numbers<[1], [0], [0], [1], [0, 0, 1, 1], [], []>} : vector<48x128xbf16>, vector<128x192xbf16>, vector<48x192xf32> -> vector<48x192xf32>
    %32 = arith.addf %26, %31 : vector<48x192xf32>
    %33 = vector.extract_strided_slice %25 {offsets = [0, 1, 0], sizes = [8, 6, 128], strides = [1, 1, 1]} : vector<8x8x128xbf16> to vector<8x6x128xbf16>
    %34 = vector.shape_cast %33 : vector<8x6x128xbf16> to vector<48x128xbf16>
    %c1_26 = arith.constant 1 : index
    %c0_27 = arith.constant 0 : index
    %c0_28 = arith.constant 0 : index
    %35 = vector.load %arg4[%c1_26, %c0_27, %c0_28] : memref<3x128x192xbf16, #tpu.memory_space<vmem>>, vector<1x128x192xbf16>
    %36 = vector.shape_cast %35 : vector<1x128x192xbf16> to vector<128x192xbf16>
    %cst_29 = arith.constant dense<0.000000e+00> : vector<48x192xf32>
    %37 = tpu.matmul %34, %36, %cst_29 {dimension_numbers = #tpu.dot_dimension_numbers<[1], [0], [0], [1], [0, 0, 1, 1], [], []>} : vector<48x128xbf16>, vector<128x192xbf16>, vector<48x192xf32> -> vector<48x192xf32>
    %38 = arith.addf %32, %37 : vector<48x192xf32>
    %39 = vector.extract_strided_slice %25 {offsets = [0, 2, 0], sizes = [8, 6, 128], strides = [1, 1, 1]} : vector<8x8x128xbf16> to vector<8x6x128xbf16>
    %40 = vector.shape_cast %39 : vector<8x6x128xbf16> to vector<48x128xbf16>
    %c2_30 = arith.constant 2 : index
    %c0_31 = arith.constant 0 : index
    %c0_32 = arith.constant 0 : index
    %41 = vector.load %arg4[%c2_30, %c0_31, %c0_32] : memref<3x128x192xbf16, #tpu.memory_space<vmem>>, vector<1x128x192xbf16>
    %42 = vector.shape_cast %41 : vector<1x128x192xbf16> to vector<128x192xbf16>
    %cst_33 = arith.constant dense<0.000000e+00> : vector<48x192xf32>
    %43 = tpu.matmul %40, %42, %cst_33 {dimension_numbers = #tpu.dot_dimension_numbers<[1], [0], [0], [1], [0, 0, 1, 1], [], []>} : vector<48x128xbf16>, vector<128x192xbf16>, vector<48x192xf32> -> vector<48x192xf32>
    %44 = arith.addf %38, %43 : vector<48x192xf32>
    %c0_34 = arith.constant 0 : index
    %c0_35 = arith.constant 0 : index
    %45 = vector.load %arg5[%c0_34, %c0_35] : memref<1x192xf32, #tpu.memory_space<vmem>>, vector<1x192xf32>
    %46 = vector.broadcast %45 : vector<1x192xf32> to vector<48x192xf32>
    %47 = arith.addf %44, %46 : vector<48x192xf32>
    %cst_36 = arith.constant 0.000000e+00 : f32
    %48 = vector.broadcast %cst_36 : f32 to vector<48x192xf32>
    %49 = arith.maximumf %47, %48 : vector<48x192xf32>
    %50 = arith.truncf %49 : vector<48x192xf32> to vector<48x192xbf16>
    %51 = vector.shape_cast %50 : vector<48x192xbf16> to vector<8x6x192xbf16>
    %cst_37 = arith.constant 0.000000e+00 : f32
    %52 = vector.broadcast %cst_37 : f32 to vector<8x256xf32>
    %53 = vector.extract_strided_slice %51 {offsets = [0, 0, 0], sizes = [8, 1, 192], strides = [1, 1, 1]} : vector<8x6x192xbf16> to vector<8x1x192xbf16>
    %54 = vector.shape_cast %53 : vector<8x1x192xbf16> to vector<8x192xbf16>
    %c0_38 = arith.constant 0 : index
    %c0_39 = arith.constant 0 : index
    %c0_40 = arith.constant 0 : index
    %55 = vector.load %arg6[%c0_38, %c0_39, %c0_40] : memref<6x192x256xbf16, #tpu.memory_space<vmem>>, vector<1x192x256xbf16>
    %56 = vector.shape_cast %55 : vector<1x192x256xbf16> to vector<192x256xbf16>
    %cst_41 = arith.constant dense<0.000000e+00> : vector<8x256xf32>
    %57 = tpu.matmul %54, %56, %cst_41 {dimension_numbers = #tpu.dot_dimension_numbers<[1], [0], [0], [1], [0, 0, 1, 1], [], []>} : vector<8x192xbf16>, vector<192x256xbf16>, vector<8x256xf32> -> vector<8x256xf32>
    %58 = arith.addf %52, %57 : vector<8x256xf32>
    %59 = vector.extract_strided_slice %51 {offsets = [0, 1, 0], sizes = [8, 1, 192], strides = [1, 1, 1]} : vector<8x6x192xbf16> to vector<8x1x192xbf16>
    %60 = vector.shape_cast %59 : vector<8x1x192xbf16> to vector<8x192xbf16>
    %c1_42 = arith.constant 1 : index
    %c0_43 = arith.constant 0 : index
    %c0_44 = arith.constant 0 : index
    %61 = vector.load %arg6[%c1_42, %c0_43, %c0_44] : memref<6x192x256xbf16, #tpu.memory_space<vmem>>, vector<1x192x256xbf16>
    %62 = vector.shape_cast %61 : vector<1x192x256xbf16> to vector<192x256xbf16>
    %cst_45 = arith.constant dense<0.000000e+00> : vector<8x256xf32>
    %63 = tpu.matmul %60, %62, %cst_45 {dimension_numbers = #tpu.dot_dimension_numbers<[1], [0], [0], [1], [0, 0, 1, 1], [], []>} : vector<8x192xbf16>, vector<192x256xbf16>, vector<8x256xf32> -> vector<8x256xf32>
    %64 = arith.addf %58, %63 : vector<8x256xf32>
    %65 = vector.extract_strided_slice %51 {offsets = [0, 2, 0], sizes = [8, 1, 192], strides = [1, 1, 1]} : vector<8x6x192xbf16> to vector<8x1x192xbf16>
    %66 = vector.shape_cast %65 : vector<8x1x192xbf16> to vector<8x192xbf16>
    %c2_46 = arith.constant 2 : index
    %c0_47 = arith.constant 0 : index
    %c0_48 = arith.constant 0 : index
    %67 = vector.load %arg6[%c2_46, %c0_47, %c0_48] : memref<6x192x256xbf16, #tpu.memory_space<vmem>>, vector<1x192x256xbf16>
    %68 = vector.shape_cast %67 : vector<1x192x256xbf16> to vector<192x256xbf16>
    %cst_49 = arith.constant dense<0.000000e+00> : vector<8x256xf32>
    %69 = tpu.matmul %66, %68, %cst_49 {dimension_numbers = #tpu.dot_dimension_numbers<[1], [0], [0], [1], [0, 0, 1, 1], [], []>} : vector<8x192xbf16>, vector<192x256xbf16>, vector<8x256xf32> -> vector<8x256xf32>
    %70 = arith.addf %64, %69 : vector<8x256xf32>
    %71 = vector.extract_strided_slice %51 {offsets = [0, 3, 0], sizes = [8, 1, 192], strides = [1, 1, 1]} : vector<8x6x192xbf16> to vector<8x1x192xbf16>
    %72 = vector.shape_cast %71 : vector<8x1x192xbf16> to vector<8x192xbf16>
    %c3 = arith.constant 3 : index
    %c0_50 = arith.constant 0 : index
    %c0_51 = arith.constant 0 : index
    %73 = vector.load %arg6[%c3, %c0_50, %c0_51] : memref<6x192x256xbf16, #tpu.memory_space<vmem>>, vector<1x192x256xbf16>
    %74 = vector.shape_cast %73 : vector<1x192x256xbf16> to vector<192x256xbf16>
    %cst_52 = arith.constant dense<0.000000e+00> : vector<8x256xf32>
    %75 = tpu.matmul %72, %74, %cst_52 {dimension_numbers = #tpu.dot_dimension_numbers<[1], [0], [0], [1], [0, 0, 1, 1], [], []>} : vector<8x192xbf16>, vector<192x256xbf16>, vector<8x256xf32> -> vector<8x256xf32>
    %76 = arith.addf %70, %75 : vector<8x256xf32>
    %77 = vector.extract_strided_slice %51 {offsets = [0, 4, 0], sizes = [8, 1, 192], strides = [1, 1, 1]} : vector<8x6x192xbf16> to vector<8x1x192xbf16>
    %78 = vector.shape_cast %77 : vector<8x1x192xbf16> to vector<8x192xbf16>
    %c4 = arith.constant 4 : index
    %c0_53 = arith.constant 0 : index
    %c0_54 = arith.constant 0 : index
    %79 = vector.load %arg6[%c4, %c0_53, %c0_54] : memref<6x192x256xbf16, #tpu.memory_space<vmem>>, vector<1x192x256xbf16>
    %80 = vector.shape_cast %79 : vector<1x192x256xbf16> to vector<192x256xbf16>
    %cst_55 = arith.constant dense<0.000000e+00> : vector<8x256xf32>
    %81 = tpu.matmul %78, %80, %cst_55 {dimension_numbers = #tpu.dot_dimension_numbers<[1], [0], [0], [1], [0, 0, 1, 1], [], []>} : vector<8x192xbf16>, vector<192x256xbf16>, vector<8x256xf32> -> vector<8x256xf32>
    %82 = arith.addf %76, %81 : vector<8x256xf32>
    %83 = vector.extract_strided_slice %51 {offsets = [0, 5, 0], sizes = [8, 1, 192], strides = [1, 1, 1]} : vector<8x6x192xbf16> to vector<8x1x192xbf16>
    %84 = vector.shape_cast %83 : vector<8x1x192xbf16> to vector<8x192xbf16>
    %c5 = arith.constant 5 : index
    %c0_56 = arith.constant 0 : index
    %c0_57 = arith.constant 0 : index
    %85 = vector.load %arg6[%c5, %c0_56, %c0_57] : memref<6x192x256xbf16, #tpu.memory_space<vmem>>, vector<1x192x256xbf16>
    %86 = vector.shape_cast %85 : vector<1x192x256xbf16> to vector<192x256xbf16>
    %cst_58 = arith.constant dense<0.000000e+00> : vector<8x256xf32>
    %87 = tpu.matmul %84, %86, %cst_58 {dimension_numbers = #tpu.dot_dimension_numbers<[1], [0], [0], [1], [0, 0, 1, 1], [], []>} : vector<8x192xbf16>, vector<192x256xbf16>, vector<8x256xf32> -> vector<8x256xf32>
    %88 = arith.addf %82, %87 : vector<8x256xf32>
    %c0_59 = arith.constant 0 : index
    %c0_60 = arith.constant 0 : index
    %89 = vector.load %arg7[%c0_59, %c0_60] : memref<1x256xf32, #tpu.memory_space<vmem>>, vector<1x256xf32>
    %90 = vector.broadcast %89 : vector<1x256xf32> to vector<8x256xf32>
    %91 = arith.addf %88, %90 : vector<8x256xf32>
    %cst_61 = arith.constant 0.000000e+00 : f32
    %92 = vector.broadcast %cst_61 : f32 to vector<8x256xf32>
    %93 = arith.maximumf %91, %92 : vector<8x256xf32>
    %94 = arith.truncf %93 : vector<8x256xf32> to vector<8x256xbf16>
    %c0_62 = arith.constant 0 : index
    %c0_63 = arith.constant 0 : index
    %95 = vector.load %arg8[%c0_62, %c0_63] : memref<256x128xbf16, #tpu.memory_space<vmem>>, vector<256x128xbf16>
    %cst_64 = arith.constant dense<0.000000e+00> : vector<8x128xf32>
    %96 = tpu.matmul %94, %95, %cst_64 {dimension_numbers = #tpu.dot_dimension_numbers<[1], [0], [0], [1], [0, 0, 1, 1], [], []>} : vector<8x256xbf16>, vector<256x128xbf16>, vector<8x128xf32> -> vector<8x128xf32>
    %c0_65 = arith.constant 0 : index
    %c0_66 = arith.constant 0 : index
    %97 = vector.load %arg9[%c0_65, %c0_66] : memref<1x128xf32, #tpu.memory_space<vmem>>, vector<1x128xf32>
    %98 = vector.broadcast %97 : vector<1x128xf32> to vector<8x128xf32>
    %99 = arith.addf %96, %98 : vector<8x128xf32>
    %c0_67 = arith.constant 0 : index
    %c0_68 = arith.constant 0 : index
    %100 = vector.load %arg10[%c0_67, %c0_68] : memref<8x128xf32, #tpu.memory_space<vmem>>, vector<8x128xf32>
    tpu.vector_store %arg10[%c0_67, %c0_68], %99 {strides = array<i32>} : memref<8x128xf32, #tpu.memory_space<vmem>>, vector<8x128xf32>,
    return
  }
  func.func @transform_0(%arg0: i32) -> (i32, i32, i32) {
    %c0_i32 = arith.constant 0 : i32
    %c0_i32_0 = arith.constant 0 : i32
    %c0_i32_1 = arith.constant 0 : i32
    return %arg0, %c0_i32, %c0_i32_0 : i32, i32, i32
  }
  func.func @transform_1(%arg0: i32) -> (i32, i32, i32) {
    %c0_i32 = arith.constant 0 : i32
    %c0_i32_0 = arith.constant 0 : i32
    %c0_i32_1 = arith.constant 0 : i32
    %c0_i32_2 = arith.constant 0 : i32
    return %c0_i32, %c0_i32_0, %c0_i32_1 : i32, i32, i32
  }
  func.func @transform_2(%arg0: i32) -> (i32, i32) {
    %c0_i32 = arith.constant 0 : i32
    %c0_i32_0 = arith.constant 0 : i32
    %c0_i32_1 = arith.constant 0 : i32
    return %c0_i32, %c0_i32_0 : i32, i32
  }
  func.func @transform_3(%arg0: i32) -> (i32, i32, i32) {
    %c0_i32 = arith.constant 0 : i32
    %c0_i32_0 = arith.constant 0 : i32
    %c0_i32_1 = arith.constant 0 : i32
    %c0_i32_2 = arith.constant 0 : i32
    return %c0_i32, %c0_i32_0, %c0_i32_1 : i32, i32, i32
  }
  func.func @transform_4(%arg0: i32) -> (i32, i32) {
    %c0_i32 = arith.constant 0 : i32
    %c0_i32_0 = arith.constant 0 : i32
    %c0_i32_1 = arith.constant 0 : i32
    return %c0_i32, %c0_i32_0 : i32, i32
  }
  func.func @transform_5(%arg0: i32) -> (i32, i32, i32) {
    %c0_i32 = arith.constant 0 : i32
    %c0_i32_0 = arith.constant 0 : i32
    %c0_i32_1 = arith.constant 0 : i32
    %c0_i32_2 = arith.constant 0 : i32
    return %c0_i32, %c0_i32_0, %c0_i32_1 : i32, i32, i32
  }
  func.func @transform_6(%arg0: i32) -> (i32, i32) {
    %c0_i32 = arith.constant 0 : i32
    %c0_i32_0 = arith.constant 0 : i32
    %c0_i32_1 = arith.constant 0 : i32
    return %c0_i32, %c0_i32_0 : i32, i32
  }
  func.func @transform_7(%arg0: i32) -> (i32, i32) {
    %c0_i32 = arith.constant 0 : i32
    %c0_i32_0 = arith.constant 0 : i32
    %c0_i32_1 = arith.constant 0 : i32
    return %c0_i32, %c0_i32_0 : i32, i32
  }
  func.func @transform_8(%arg0: i32) -> (i32, i32) {
    %c0_i32 = arith.constant 0 : i32
    %c0_i32_0 = arith.constant 0 : i32
    %c0_i32_1 = arith.constant 0 : i32
    return %c0_i32, %c0_i32_0 : i32, i32
  }
  func.func @transform_9(%arg0: i32) -> (i32, i32) {
    %c0_i32 = arith.constant 0 : i32
    %c0_i32_0 = arith.constant 0 : i32
    return %arg0, %c0_i32 : i32, i32
  }
}

</mosaic_0001>

<llo_original>
// kernel: dqn_forward.1
$region0: #{dqn_forward.1}
  #allocation0 [shape = 'u32[]', space=smem, size = 0x4, offset = 0x4, fixed_abs, tag = 'smem constant byte address 0x4 - core index']
  #allocation1 [shape = 'u32[144,128]{1,0:T(1,128)}', space=vmem, size = 0x12000, scoped, tag = 'internal scratch']
  %s0 = inlined_call_operand.vmem [shape: bf16[16,10,30], index: 0, kind: input, shape index: {}]
  %s1 = inlined_call_operand.vmem [shape: bf16[3,30,128], index: 1, kind: input, shape index: {}]
  %s2 = inlined_call_operand.vmem [shape: f32[1,128], index: 2, kind: input, shape index: {}]
  %s3 = inlined_call_operand.vmem [shape: bf16[3,128,192], index: 3, kind: input, shape index: {}]
  %s4 = inlined_call_operand.vmem [shape: f32[1,192], index: 4, kind: input, shape index: {}]
  %s5 = inlined_call_operand.vmem [shape: bf16[6,192,256], index: 5, kind: input, shape index: {}]
  %s6 = inlined_call_operand.vmem [shape: f32[1,256], index: 6, kind: input, shape index: {}]
  %s7 = inlined_call_operand.vmem [shape: bf16[256,128], index: 7, kind: input, shape index: {}]
  %s8 = inlined_call_operand.vmem [shape: f32[1,128], index: 8, kind: input, shape index: {}]
  %s9 = inlined_call_operand.vmem [shape: f32[16,128], index: 9, kind: output, shape index: {}]
  %s10 = sld [smem:[#allocation0]]
  $region69: #{dqn_forward.1} parent=0
    _
  %s12 = ssub.s32 1, %s10
  %s13 = scalar_select 0, %s12, %s10
  loop: start=0, step=1, limit=4
  $region2: #{dqn_forward.1} parent=0 // loop_pre_header
    _
  $region3: #{dqn_forward.1} parent=0 // loop_header
    %s15 = sphi 0, %s19
    %p16 = scmp.ge.s32.totalorder %s15, 4
    %s25 = sphi 0, %s27
    %s28 = sphi 0, %s25
    %s29 = sphi 0, %s28
    %s45 = sphi 0, %s29
    %s49 = sphi 0, %s49
    %s51 = sphi 0, %s49
    %s52 = sphi 0, %s51
    %s66 = sphi 0, %s52
    %s70 = sphi 0, %s70
    %s72 = sphi 0, %s70
    %s73 = sphi 0, %s72
    %s87 = sphi 0, %s73
    %s91 = sphi 0, %s91
    %s93 = sphi 0, %s91
    %s94 = sphi 0, %s93
    %s108 = sphi 0, %s94
    %s112 = sphi 0, %s112
    %s114 = sphi 0, %s112
    %s115 = sphi 0, %s114
    %s129 = sphi 0, %s115
    %s133 = sphi 0, %s133
    %s135 = sphi 0, %s133
    %s136 = sphi 0, %s135
    %s150 = sphi 0, %s136
    %s154 = sphi 0, %s154
    %s156 = sphi 0, %s154
    %s157 = sphi 0, %s156
    %s171 = sphi 0, %s157
    %s175 = sphi 0, %s175
    %s177 = sphi 0, %s175
    %s178 = sphi 0, %s177
    %s192 = sphi 0, %s178
    %s196 = sphi 0, %s196
    %s198 = sphi 0, %s196
    %s199 = sphi 0, %s198
    %s213 = sphi 0, %s199
    %s219 = sphi 0, %s221
    %s222 = sphi 0, %s219
    %s223 = sphi 0, %s222
    %s239 = sphi 0, %s223
  $region4: #{dqn_forward.1} parent=0 // loop_header_branch
    %18 = sbr.rel (%p16) target = $region8
  $region5: #{dqn_forward.1} parent=0 // loop_body
    %s20 = ssub.s32 %s15, 1
    %s21 = ssub.s32 %s15, 2
    %s22 = sadd.s32 %s15, 1
    %s23 = ssub.s32 %s15, %s22
    %p24 = scmp.eq.s32.totalorder %s23, 0
    %s26 = sadd.s32 %s25, 1
    %s27 = scalar_select %p24, %s25, %s26
    %p30 = pneg %p24
    %p31 = scmp.eq.s32.totalorder %s15, 1
    %p32 = por %p30, %p31
    %p33 = scmp.ne.s32.totalorder %s25, %s28
    %p34 = scmp.eq.s32.totalorder %s15, 0
    %p35 = por %p33, %p34
    %p36 = scmp.ne.s32.totalorder %s25, %s28
    %p37 = scmp.eq.s32.totalorder %s20, 1
    %p38 = por %p36, %p37
    %p39 = scmp.ne.s32.totalorder %s28, %s29
    %p40 = scmp.eq.s32.totalorder %s20, 0
    %p41 = por %p39, %p40
    %p42 = scmp.ne.s32.totalorder %s28, %s29
    %p43 = scmp.eq.s32.totalorder %s21, 1
    %p44 = por %p42, %p43
    %p46 = scmp.ne.s32.totalorder %s29, %s45
    %p47 = scmp.eq.s32.totalorder %s21, 0
    %p48 = por %p46, %p47
    %s50 = sadd.s32 %s49, 1
    %p53 = scmp.eq.s32.totalorder %s15, 1
    %p54 = scmp.ne.s32.totalorder %s49, %s51
    %p55 = scmp.eq.s32.totalorder %s15, 0
    %p56 = por %p54, %p55
    %p57 = scmp.ne.s32.totalorder %s49, %s51
    %p58 = scmp.eq.s32.totalorder %s20, 1
    %p59 = por %p57, %p58
    %p60 = scmp.ne.s32.totalorder %s51, %s52
    %p61 = scmp.eq.s32.totalorder %s20, 0
    %p62 = por %p60, %p61
    %p63 = scmp.ne.s32.totalorder %s51, %s52
    %p64 = scmp.eq.s32.totalorder %s21, 1
    %p65 = por %p63, %p64
    %p67 = scmp.ne.s32.totalorder %s52, %s66
    %p68 = scmp.eq.s32.totalorder %s21, 0
    %p69 = por %p67, %p68
    %s71 = sadd.s32 %s70, 1
    %p74 = scmp.eq.s32.totalorder %s15, 1
    %p75 = scmp.ne.s32.totalorder %s70, %s72
    %p76 = scmp.eq.s32.totalorder %s15, 0
    %p77 = por %p75, %p76
    %p78 = scmp.ne.s32.totalorder %s70, %s72
    %p79 = scmp.eq.s32.totalorder %s20, 1
    %p80 = por %p78, %p79
    %p81 = scmp.ne.s32.totalorder %s72, %s73
    %p82 = scmp.eq.s32.totalorder %s20, 0
    %p83 = por %p81, %p82
    %p84 = scmp.ne.s32.totalorder %s72, %s73
    %p85 = scmp.eq.s32.totalorder %s21, 1
    %p86 = por %p84, %p85
    %p88 = scmp.ne.s32.totalorder %s73, %s87
    %p89 = scmp.eq.s32.totalorder %s21, 0
    %p90 = por %p88, %p89
    %s92 = sadd.s32 %s91, 1
    %p95 = scmp.eq.s32.totalorder %s15, 1
    %p96 = scmp.ne.s32.totalorder %s91, %s93
    %p97 = scmp.eq.s32.totalorder %s15, 0
    %p98 = por %p96, %p97
    %p99 = scmp.ne.s32.totalorder %s91, %s93
    %p100 = scmp.eq.s32.totalorder %s20, 1
    %p101 = por %p99, %p100
    %p102 = scmp.ne.s32.totalorder %s93, %s94
    %p103 = scmp.eq.s32.totalorder %s20, 0
    %p104 = por %p102, %p103
    %p105 = scmp.ne.s32.totalorder %s93, %s94
    %p106 = scmp.eq.s32.totalorder %s21, 1
    %p107 = por %p105, %p106
    %p109 = scmp.ne.s32.totalorder %s94, %s108
    %p110 = scmp.eq.s32.totalorder %s21, 0
    %p111 = por %p109, %p110
    %s113 = sadd.s32 %s112, 1
    %p116 = scmp.eq.s32.totalorder %s15, 1
    %p117 = scmp.ne.s32.totalorder %s112, %s114
    %p118 = scmp.eq.s32.totalorder %s15, 0
    %p119 = por %p117, %p118
    %p120 = scmp.ne.s32.totalorder %s112, %s114
    %p121 = scmp.eq.s32.totalorder %s20, 1
    %p122 = por %p120, %p121
    %p123 = scmp.ne.s32.totalorder %s114, %s115
    %p124 = scmp.eq.s32.totalorder %s20, 0
    %p125 = por %p123, %p124
    %p126 = scmp.ne.s32.totalorder %s114, %s115
    %p127 = scmp.eq.s32.totalorder %s21, 1
    %p128 = por %p126, %p127
    %p130 = scmp.ne.s32.totalorder %s115, %s129
    %p131 = scmp.eq.s32.totalorder %s21, 0
    %p132 = por %p130, %p131
    %s134 = sadd.s32 %s133, 1
    %p137 = scmp.eq.s32.totalorder %s15, 1
    %p138 = scmp.ne.s32.totalorder %s133, %s135
    %p139 = scmp.eq.s32.totalorder %s15, 0
    %p140 = por %p138, %p139
    %p141 = scmp.ne.s32.totalorder %s133, %s135
    %p142 = scmp.eq.s32.totalorder %s20, 1
    %p143 = por %p141, %p142
    %p144 = scmp.ne.s32.totalorder %s135, %s136
    %p145 = scmp.eq.s32.totalorder %s20, 0
    %p146 = por %p144, %p145
    %p147 = scmp.ne.s32.totalorder %s135, %s136
    %p148 = scmp.eq.s32.totalorder %s21, 1
    %p149 = por %p147, %p148
    %p151 = scmp.ne.s32.totalorder %s136, %s150
    %p152 = scmp.eq.s32.totalorder %s21, 0
    %p153 = por %p151, %p152
    %s155 = sadd.s32 %s154, 1
    %p158 = scmp.eq.s32.totalorder %s15, 1
    %p159 = scmp.ne.s32.totalorder %s154, %s156
    %p160 = scmp.eq.s32.totalorder %s15, 0
    %p161 = por %p159, %p160
    %p162 = scmp.ne.s32.totalorder %s154, %s156
    %p163 = scmp.eq.s32.totalorder %s20, 1
    %p164 = por %p162, %p163
    %p165 = scmp.ne.s32.totalorder %s156, %s157
    %p166 = scmp.eq.s32.totalorder %s20, 0
    %p167 = por %p165, %p166
    %p168 = scmp.ne.s32.totalorder %s156, %s157
    %p169 = scmp.eq.s32.totalorder %s21, 1
    %p170 = por %p168, %p169
    %p172 = scmp.ne.s32.totalorder %s157, %s171
    %p173 = scmp.eq.s32.totalorder %s21, 0
    %p174 = por %p172, %p173
    %s176 = sadd.s32 %s175, 1
    %p179 = scmp.eq.s32.totalorder %s15, 1
    %p180 = scmp.ne.s32.totalorder %s175, %s177
    %p181 = scmp.eq.s32.totalorder %s15, 0
    %p182 = por %p180, %p181
    %p183 = scmp.ne.s32.totalorder %s175, %s177
    %p184 = scmp.eq.s32.totalorder %s20, 1
    %p185 = por %p183, %p184
    %p186 = scmp.ne.s32.totalorder %s177, %s178
    %p187 = scmp.eq.s32.totalorder %s20, 0
    %p188 = por %p186, %p187
    %p189 = scmp.ne.s32.totalorder %s177, %s178
    %p190 = scmp.eq.s32.totalorder %s21, 1
    %p191 = por %p189, %p190
    %p193 = scmp.ne.s32.totalorder %s178, %s192
    %p194 = scmp.eq.s32.totalorder %s21, 0
    %p195 = por %p193, %p194
    %s197 = sadd.s32 %s196, 1
    %p200 = scmp.eq.s32.totalorder %s15, 1
    %p201 = scmp.ne.s32.totalorder %s196, %s198
    %p202 = scmp.eq.s32.totalorder %s15, 0
    %p203 = por %p201, %p202
    %p204 = scmp.ne.s32.totalorder %s196, %s198
    %p205 = scmp.eq.s32.totalorder %s20, 1
    %p206 = por %p204, %p205
    %p207 = scmp.ne.s32.totalorder %s198, %s199
    %p208 = scmp.eq.s32.totalorder %s20, 0
    %p209 = por %p207, %p208
    %p210 = scmp.ne.s32.totalorder %s198, %s199
    %p211 = scmp.eq.s32.totalorder %s21, 1
    %p212 = por %p210, %p211
    %p214 = scmp.ne.s32.totalorder %s199, %s213
    %p215 = scmp.eq.s32.totalorder %s21, 0
    %p216 = por %p214, %p215
    %s217 = ssub.s32 %s15, %s22
    %p218 = scmp.eq.s32.totalorder %s217, 0
    %s220 = sadd.s32 %s219, 1
    %s221 = scalar_select %p218, %s219, %s220
    %p224 = pneg %p218
    %p225 = scmp.eq.s32.totalorder %s15, 1
    %p226 = por %p224, %p225
    %p227 = scmp.ne.s32.totalorder %s219, %s222
    %p228 = scmp.eq.s32.totalorder %s15, 0
    %p229 = por %p227, %p228
    %p230 = scmp.ne.s32.totalorder %s219, %s222
    %p231 = scmp.eq.s32.totalorder %s20, 1
    %p232 = por %p230, %p231
    %p233 = scmp.ne.s32.totalorder %s222, %s223
    %p234 = scmp.eq.s32.totalorder %s20, 0
    %p235 = por %p233, %p234
    %p236 = scmp.ne.s32.totalorder %s222, %s223
    %p237 = scmp.eq.s32.totalorder %s21, 1
    %p238 = por %p236, %p237
    %p240 = scmp.ne.s32.totalorder %s223, %s239
    %p241 = scmp.eq.s32.totalorder %s21, 0
    %p242 = por %p240, %p241
    %p243 = scmp.le.s32.totalorder 1, %s15
    %p244 = scmp.lt.s32.totalorder %s15, 3
    %p245 = pnand %p243, %p244
    %p246 = pneg %p245
    // Predicated region
    $region9: #{dqn_forward.1} parent=5 // pred_check
      _
    $region10: #{dqn_forward.1} parent=5 // pred_check_branch
      %248 = sbr.rel (%p245) target = $region12
    $region11: #{dqn_forward.1} parent=5 // pred_region
      %s249 = ssub.s32 %s15, 1
      // Predicated region
      $region13: #{dqn_forward.1} parent=11 // pred_check
        %p250 = pneg %p62
      $region14: #{dqn_forward.1} parent=11 // pred_check_branch
        %252 = sbr.rel (%p250) target = $region16
      $region15: #{dqn_forward.1} parent=11 // pred_region
        _
      $region16: #{dqn_forward.1} parent=11 // pred_fallthru
        _
      // Predicated region
      $region17: #{dqn_forward.1} parent=11 // pred_check
        %p253 = pneg %p83
      $region18: #{dqn_forward.1} parent=11 // pred_check_branch
        %255 = sbr.rel (%p253) target = $region20
      $region19: #{dqn_forward.1} parent=11 // pred_region
        _
      $region20: #{dqn_forward.1} parent=11 // pred_fallthru
        _
      // Predicated region
      $region21: #{dqn_forward.1} parent=11 // pred_check
        %p256 = pneg %p104
      $region22: #{dqn_forward.1} parent=11 // pred_check_branch
        %258 = sbr.rel (%p256) target = $region24
      $region23: #{dqn_forward.1} parent=11 // pred_region
        _
      $region24: #{dqn_forward.1} parent=11 // pred_fallthru
        _
      // Predicated region
      $region25: #{dqn_forward.1} parent=11 // pred_check
        %p259 = pneg %p125
      $region26: #{dqn_forward.1} parent=11 // pred_check_branch
        %261 = sbr.rel (%p259) target = $region28
      $region27: #{dqn_forward.1} parent=11 // pred_region
        _
      $region28: #{dqn_forward.1} parent=11 // pred_fallthru
        _
      // Predicated region
      $region29: #{dqn_forward.1} parent=11 // pred_check
        %p262 = pneg %p146
      $region30: #{dqn_forward.1} parent=11 // pred_check_branch
        %264 = sbr.rel (%p262) target = $region32
      $region31: #{dqn_forward.1} parent=11 // pred_region
        _
      $region32: #{dqn_forward.1} parent=11 // pred_fallthru
        _
      // Predicated region
      $region33: #{dqn_forward.1} parent=11 // pred_check
        %p265 = pneg %p167
      $region34: #{dqn_forward.1} parent=11 // pred_check_branch
        %267 = sbr.rel (%p265) target = $region36
      $region35: #{dqn_forward.1} parent=11 // pred_region
        _
      $region36: #{dqn_forward.1} parent=11 // pred_fallthru
        _
      // Predicated region
      $region37: #{dqn_forward.1} parent=11 // pred_check
        %p268 = pneg %p188
      $region38: #{dqn_forward.1} parent=11 // pred_check_branch
        %270 = sbr.rel (%p268) target = $region40
      $region39: #{dqn_forward.1} parent=11 // pred_region
        _
      $region40: #{dqn_forward.1} parent=11 // pred_fallthru
        _
      // Predicated region
      $region41: #{dqn_forward.1} parent=11 // pred_check
        %p271 = pneg %p209
      $region42: #{dqn_forward.1} parent=11 // pred_check_branch
        %273 = sbr.rel (%p271) target = $region44
      $region43: #{dqn_forward.1} parent=11 // pred_region
        _
      $region44: #{dqn_forward.1} parent=11 // pred_fallthru
        _
    $region12: #{dqn_forward.1} parent=5 // pred_fallthru
      _
    %p274 = scmp.lt.s32.totalorder %s15, 2
    // Predicated region
    $region45: #{dqn_forward.1} parent=5 // pred_check
      %p275 = pneg %p274
    $region46: #{dqn_forward.1} parent=5 // pred_check_branch
      %277 = sbr.rel (%p275) target = $region48
    $region47: #{dqn_forward.1} parent=5 // pred_region
      // Predicated region
      $region49: #{dqn_forward.1} parent=47 // pred_check
        %p278 = pneg %p35
      $region50: #{dqn_forward.1} parent=47 // pred_check_branch
        %280 = sbr.rel (%p278) target = $region52
      $region51: #{dqn_forward.1} parent=47 // pred_region
        %s281 = smul.u32 8, %s15
        %p282 = scmp.lt.s32.totalorder %s281, 15
        %s283 = scalar_select %p282, %s281, 15
        %s284 = smul.addr %s283, 2
        %s285 = smul.addr %s284, 4
        %s286 = scalar_lea.vmem %s0, %s285
        %s287 = smul.u32 8, %s15
      $region52: #{dqn_forward.1} parent=47 // pred_fallthru
        _
    $region48: #{dqn_forward.1} parent=5 // pred_fallthru
      _
    %p288 = scmp.le.s32.totalorder 1, %s15
    %p289 = scmp.lt.s32.totalorder %s15, 3
    %p290 = pnand %p288, %p289
    %p291 = pneg %p290
    // Predicated region
    $region53: #{dqn_forward.1} parent=5 // pred_check
      _
    $region54: #{dqn_forward.1} parent=5 // pred_check_branch
      %293 = sbr.rel (%p290) target = $region56
    $region55: #{dqn_forward.1} parent=5 // pred_region
      %s294 = ssub.s32 %s15, 1
      %s295 = smul.u32 8, %s20
      %p296 = scmp.lt.s32.totalorder %s295, 15
      %s297 = scalar_select %p296, %s295, 15
      %s298 = smul.addr %s297, 2
      %s299 = smul.addr %s298, 4
      %s300 = scalar_lea.vmem %s0, %s299
      %p301 = pneg %p41
      %p302 = pneg %p38
      %p303 = pneg %p62
      %p304 = pneg %p59
      %p305 = pneg %p83
      %p306 = pneg %p80
      %p307 = pneg %p104
      %p308 = pneg %p101
      %p309 = pneg %p125
      %p310 = pneg %p122
      %p311 = pneg %p146
      %p312 = pneg %p143
      %p313 = pneg %p167
      %p314 = pneg %p164
      %p315 = pneg %p188
      %p316 = pneg %p185
      %p317 = pneg %p209
      %p318 = pneg %p206
      %p319 = pneg %p235
      %p320 = pneg %p232
      %p321 = scmp.lt.s32.totalorder %s20, 1
      %s322 = scalar_select %p321, %s20, 1
      %s323 = smul.addr %s322, 8
      %s324 = scalar_lea.vmem %s9, %s323
      %s325 = smul.u32 8, %s20
      %p326 = scmp.lt.s32.totalorder %s325, 15
      %s327 = scalar_select %p326, %s325, 15
      %s328 = smul.addr %s327, 2
      %s329 = smul.addr %s328, 4
      %s330 = scalar_lea.vmem %s0, %s329
      %s331 = smul.u32 8, %s20
      %p332 = scmp.lt.s32.totalorder %s20, 1
      %s333 = scalar_select %p332, %s20, 1
      %s334 = smul.addr %s333, 8
      %s335 = scalar_lea.vmem %s9, %s334
      %v337 = vld [vmem:[%s330] sm:$0xf]
      %v338 = vld [vmem:[%s330 + $0x8] sm:$0xf]
      %v339 = vld [vmem:[%s330 + $0x10] sm:$0xf]
      %v340 = vld [vmem:[%s330 + $0x18] sm:$0xf]
      %v341 = vld [vmem:[%s330 + $0x20] sm:$0xf]
      %v342 = vld [vmem:[%s330 + $0x28] sm:$0xf]
      %v343 = vld [vmem:[%s330 + $0x30] sm:$0xf]
      %v344 = vld [vmem:[%s330 + $0x38] sm:$0xf]
      %v345 = vld [vmem:[%s1] sm:$0xf]
      %v346 = vld [vmem:[%s1 + $0x4] sm:$0xf]
      %v347 = vld [vmem:[%s1 + $0x8] sm:$0xf]
      %v348 = vld [vmem:[%s1 + $0xc] sm:$0x7]
      %v349 = vld [vmem:[%s330 + $0x4] sm:$0x1]
      %v350 = vld [vmem:[%s330 + $0xc] sm:$0x1]
      %v351 = vld [vmem:[%s330 + $0x14] sm:$0x1]
      %v352 = vld [vmem:[%s330 + $0x1c] sm:$0x1]
      %v353 = vld [vmem:[%s330 + $0x24] sm:$0x1]
      %v354 = vld [vmem:[%s330 + $0x2c] sm:$0x1]
      %v355 = vld [vmem:[%s330 + $0x34] sm:$0x1]
      %v356 = vld [vmem:[%s330 + $0x3c] sm:$0x1]
      %vm357 = vsmask.f32 3328
      %vm358 = vsmask.f32 7440
      %vm359 = vmor %vm357, %vm358
      %v361 = vshrl.u32 %v337, 16
      %v363 = vrot.slane %v361, 4
      %v364 = vshll.u32 %v337, 16
      %v366 = vrot.slane %v364, 5
      %v367 = vor.u32 %v363, %v366
      %v368 = vrot.slane %v367, 4
      %v370 = vshll.u32 %v349, 16
      %v372 = vrot.slane %v370, 5
      %v373 = vsel %vm359, %v368, %v372
      %v375 = vshrl.u32 %v338, 16
      %v377 = vrot.slane %v375, 4
      %v378 = vshll.u32 %v338, 16
      %v380 = vrot.slane %v378, 5
      %v381 = vor.u32 %v377, %v380
      %v382 = vrot.slane %v381, 4
      %v384 = vshll.u32 %v350, 16
      %v386 = vrot.slane %v384, 5
      %v387 = vsel %vm359, %v382, %v386
      %v389 = vshrl.u32 %v339, 16
      %v391 = vrot.slane %v389, 4
      %v392 = vshll.u32 %v339, 16
      %v394 = vrot.slane %v392, 5
      %v395 = vor.u32 %v391, %v394
      %v396 = vrot.slane %v395, 4
      %v398 = vshll.u32 %v351, 16
      %v400 = vrot.slane %v398, 5
      %v401 = vsel %vm359, %v396, %v400
      %v403 = vshrl.u32 %v340, 16
      %v405 = vrot.slane %v403, 4
      %v406 = vshll.u32 %v340, 16
      %v408 = vrot.slane %v406, 5
      %v409 = vor.u32 %v405, %v408
      %v410 = vrot.slane %v409, 4
      %v412 = vshll.u32 %v352, 16
      %v414 = vrot.slane %v412, 5
      %v415 = vsel %vm359, %v410, %v414
      %v417 = vshrl.u32 %v341, 16
      %v419 = vrot.slane %v417, 4
      %v420 = vshll.u32 %v341, 16
      %v422 = vrot.slane %v420, 5
      %v423 = vor.u32 %v419, %v422
      %v424 = vrot.slane %v423, 4
      %v426 = vshll.u32 %v353, 16
      %v428 = vrot.slane %v426, 5
      %v429 = vsel %vm359, %v424, %v428
      %v431 = vshrl.u32 %v342, 16
      %v433 = vrot.slane %v431, 4
      %v434 = vshll.u32 %v342, 16
      %v436 = vrot.slane %v434, 5
      %v437 = vor.u32 %v433, %v436
      %v438 = vrot.slane %v437, 4
      %v440 = vshll.u32 %v354, 16
      %v442 = vrot.slane %v440, 5
      %v443 = vsel %vm359, %v438, %v442
      %v445 = vshrl.u32 %v343, 16
      %v447 = vrot.slane %v445, 4
      %v448 = vshll.u32 %v343, 16
      %v450 = vrot.slane %v448, 5
      %v451 = vor.u32 %v447, %v450
      %v452 = vrot.slane %v451, 4
      %v454 = vshll.u32 %v355, 16
      %v456 = vrot.slane %v454, 5
      %v457 = vsel %vm359, %v452, %v456
      %v459 = vshrl.u32 %v344, 16
      %v461 = vrot.slane %v459, 4
      %v462 = vshll.u32 %v344, 16
      %v464 = vrot.slane %v462, 5
      %v465 = vor.u32 %v461, %v464
      %v466 = vrot.slane %v465, 4
      %v468 = vshll.u32 %v356, 16
      %v470 = vrot.slane %v468, 5
      %v471 = vsel %vm359, %v466, %v470
      %s472 = scalar_lea.vmem %s1, 16
      %v473 = vld [vmem:[%s472] sm:$0xf]
      %v474 = vld [vmem:[%s472 + $0x4] sm:$0xf]
      %v475 = vld [vmem:[%s472 + $0x8] sm:$0xf]
      %v476 = vld [vmem:[%s472 + $0xc] sm:$0x7]
      %v477 = vunpack.c.l.b16 %v373
      %v478 = vunpack.c.l.b16 %v387
      %v479 = vunpack.c.l.b16 %v401
      %v480 = vunpack.c.l.b16 %v415
      %v481 = vunpack.c.l.b16 %v429
      %v482 = vunpack.c.l.b16 %v443
      %v483 = vunpack.c.l.b16 %v457
      %v484 = vunpack.c.l.b16 %v471
      %v485 = vpack.c.b16 %v478, %v477
      %v486 = vpack.c.b16 %v480, %v479
      %v487 = vpack.c.b16 %v482, %v481
      %v488 = vpack.c.b16 %v484, %v483
      %v493 = vunpack.c.l.b16 %v473
      %v494 = vunpack.c.l.b16 %v474
      %v495 = vunpack.c.l.b16 %v475
      %v496 = vunpack.c.l.b16 %v476
      %v497 = vpack.c.b16 %v494, %v493
      %v498 = vpack.c.b16 %v496, %v495
      %vm500 = vcmask 244736
      %v502 = vsel %vm500, %v485, 0
      %v505 = vsel %vm500, %v486, 0
      %v508 = vsel %vm500, %v487, 0
      %v511 = vsel %vm500, %v488, 0
      %vm513 = vcmask 1046528
      %v515 = vsel %vm513, %v498, 0
      %517 = vmatprep.subr.bf16.mxu0 0
      %518 = vmatpush1.bf16.msra.mxu0 %v497
      %519 = vmatprep.subr.bf16.mxu0 0
      %520 = vmatpush1.bf16.msra.mxu0 %v515
      %521 = vmatprep.subr.bf16.mxu0 0
      %522 = vmatpush1.bf16.msra.mxu0 0
      %523 = vmatprep.subr.bf16.mxu0 0
      %524 = vmatpush1.bf16.msra.mxu0 0
      %525 = vmatprep.subr.bf16.mxu0 0
      %526 = vmatpush1.bf16.msra.mxu0 0
      %527 = vmatprep.subr.bf16.mxu0 0
      %528 = vmatpush1.bf16.msra.mxu0 0
      %529 = vmatprep.subr.bf16.mxu0 0
      %530 = vmatpush1.bf16.msra.mxu0 0
      %531 = vmatprep.subr.bf16.mxu0 0
      %532 = vmatpush1.bf16.msra.mxu0 0
      %533 = vmatprep.subr.bf16.mxu0 0
      %534 = vmatpush1.bf16.msra.mxu0 0
      %535 = vmatprep.subr.bf16.mxu0 0
      %536 = vmatpush1.bf16.msra.mxu0 0
      %537 = vmatprep.subr.bf16.mxu0 0
      %538 = vmatpush1.bf16.msra.mxu0 0
      %539 = vmatprep.subr.bf16.mxu0 0
      %540 = vmatpush1.bf16.msra.mxu0 0
      %541 = vmatprep.subr.bf16.mxu0 0
      %542 = vmatpush1.bf16.msra.mxu0 0
      %543 = vmatprep.subr.bf16.mxu0 0
      %544 = vmatpush1.bf16.msra.mxu0 0
      %545 = vmatprep.subr.bf16.mxu0 0
      %546 = vmatpush1.bf16.msra.mxu0 0
      %547 = vmatprep.subr.bf16.mxu0 0
      %548 = vmatpush1.bf16.msra.mxu0 0
      %549 = vmatprep.mubr.bf16.mxu0 0
      %550 = vmatmul.mubr.bf16.gmra.mrb[0].mxu0 %v502
      %v551 = vpop.f32.mrb[0].mxu0
      %v552 = vadd.f32 0.0, %v551
      %v553 = vpop.f32.mrb[0].mxu0
      %v554 = vpop.f32.mrb[0].mxu0
      %v555 = vadd.f32 0.0, %v554
      %v556 = vpop.f32.mrb[0].mxu0
      %557 = vmatprep.mubr.bf16.mxu0 0
      %558 = vmatmul.mubr.bf16.gmra.mrb[0].mxu0 %v505
      %v559 = vpop.f32.mrb[0].mxu0
      %v560 = vadd.f32 0.0, %v559
      %v561 = vpop.f32.mrb[0].mxu0
      %v562 = vpop.f32.mrb[0].mxu0
      %v563 = vadd.f32 0.0, %v562
      %v564 = vpop.f32.mrb[0].mxu0
      %565 = vmatprep.mubr.bf16.mxu0 0
      %566 = vmatmul.mubr.bf16.gmra.mrb[0].mxu0 %v508
      %v567 = vpop.f32.mrb[0].mxu0
      %v568 = vadd.f32 0.0, %v567
      %v569 = vpop.f32.mrb[0].mxu0
      %v570 = vpop.f32.mrb[0].mxu0
      %v571 = vadd.f32 0.0, %v570
      %v572 = vpop.f32.mrb[0].mxu0
      %573 = vmatprep.mubr.bf16.mxu0 0
      %574 = vmatmul.mubr.bf16.gmra.mrb[0].mxu0 %v511
      %v575 = vpop.f32.mrb[0].mxu0
      %v576 = vadd.f32 0.0, %v575
      %v577 = vpop.f32.mrb[0].mxu0
      %v578 = vpop.f32.mrb[0].mxu0
      %v579 = vadd.f32 0.0, %v578
      %v580 = vpop.f32.mrb[0].mxu0
      %581 = vdwg.mxu0
      %v590 = vunpack.c.l.b16 %v337
      %v591 = vunpack.c.l.b16 %v338
      %v592 = vunpack.c.l.b16 %v339
      %v593 = vunpack.c.l.b16 %v340
      %v594 = vunpack.c.l.b16 %v341
      %v595 = vunpack.c.l.b16 %v342
      %v596 = vunpack.c.l.b16 %v343
      %v597 = vunpack.c.l.b16 %v344
      %v598 = vpack.c.b16 %v591, %v590
      %v599 = vpack.c.b16 %v593, %v592
      %v600 = vpack.c.b16 %v595, %v594
      %v601 = vpack.c.b16 %v597, %v596
      %v606 = vunpack.c.l.b16 %v345
      %v607 = vunpack.c.l.b16 %v346
      %v608 = vunpack.c.l.b16 %v347
      %v609 = vunpack.c.l.b16 %v348
      %v610 = vpack.c.b16 %v607, %v606
      %v611 = vpack.c.b16 %v609, %v608
      %v614 = vsel %vm500, %v598, 0
      %v617 = vsel %vm500, %v599, 0
      %v620 = vsel %vm500, %v600, 0
      %v623 = vsel %vm500, %v601, 0
      %v626 = vsel %vm513, %v611, 0
      %628 = vmatprep.subr.bf16.mxu0 0
      %629 = vmatpush1.bf16.msra.mxu0 %v610
      %630 = vmatprep.subr.bf16.mxu0 0
      %631 = vmatpush1.bf16.msra.mxu0 %v626
      %632 = vmatprep.subr.bf16.mxu0 0
      %633 = vmatpush1.bf16.msra.mxu0 0
      %634 = vmatprep.subr.bf16.mxu0 0
      %635 = vmatpush1.bf16.msra.mxu0 0
      %636 = vmatprep.subr.bf16.mxu0 0
      %637 = vmatpush1.bf16.msra.mxu0 0
      %638 = vmatprep.subr.bf16.mxu0 0
      %639 = vmatpush1.bf16.msra.mxu0 0
      %640 = vmatprep.subr.bf16.mxu0 0
      %641 = vmatpush1.bf16.msra.mxu0 0
      %642 = vmatprep.subr.bf16.mxu0 0
      %643 = vmatpush1.bf16.msra.mxu0 0
      %644 = vmatprep.subr.bf16.mxu0 0
      %645 = vmatpush1.bf16.msra.mxu0 0
      %646 = vmatprep.subr.bf16.mxu0 0
      %647 = vmatpush1.bf16.msra.mxu0 0
      %648 = vmatprep.subr.bf16.mxu0 0
      %649 = vmatpush1.bf16.msra.mxu0 0
      %650 = vmatprep.subr.bf16.mxu0 0
      %651 = vmatpush1.bf16.msra.mxu0 0
      %652 = vmatprep.subr.bf16.mxu0 0
      %653 = vmatpush1.bf16.msra.mxu0 0
      %654 = vmatprep.subr.bf16.mxu0 0
      %655 = vmatpush1.bf16.msra.mxu0 0
      %656 = vmatprep.subr.bf16.mxu0 0
      %657 = vmatpush1.bf16.msra.mxu0 0
      %658 = vmatprep.subr.bf16.mxu0 0
      %659 = vmatpush1.bf16.msra.mxu0 0
      %660 = vmatprep.mubr.bf16.mxu0 0
      %661 = vmatmul.mubr.bf16.gmra.mrb[0].mxu0 %v614
      %v662 = vpop.f32.mrb[0].mxu0
      %v663 = vadd.f32 %v552, %v662
      %v664 = vpop.f32.mrb[0].mxu0
      %v665 = vpop.f32.mrb[0].mxu0
      %v666 = vadd.f32 %v555, %v665
      %v667 = vpop.f32.mrb[0].mxu0
      %668 = vmatprep.mubr.bf16.mxu0 0
      %669 = vmatmul.mubr.bf16.gmra.mrb[0].mxu0 %v617
      %v670 = vpop.f32.mrb[0].mxu0
      %v671 = vadd.f32 %v560, %v670
      %v672 = vpop.f32.mrb[0].mxu0
      %v673 = vpop.f32.mrb[0].mxu0
      %v674 = vadd.f32 %v563, %v673
      %v675 = vpop.f32.mrb[0].mxu0
      %676 = vmatprep.mubr.bf16.mxu0 0
      %677 = vmatmul.mubr.bf16.gmra.mrb[0].mxu0 %v620
      %v678 = vpop.f32.mrb[0].mxu0
      %v679 = vadd.f32 %v568, %v678
      %v680 = vpop.f32.mrb[0].mxu0
      %v681 = vpop.f32.mrb[0].mxu0
      %v682 = vadd.f32 %v571, %v681
      %v683 = vpop.f32.mrb[0].mxu0
      %684 = vmatprep.mubr.bf16.mxu0 0
      %685 = vmatmul.mubr.bf16.gmra.mrb[0].mxu0 %v623
      %v686 = vpop.f32.mrb[0].mxu0
      %v687 = vadd.f32 %v576, %v686
      %v688 = vpop.f32.mrb[0].mxu0
      %v689 = vpop.f32.mrb[0].mxu0
      %v690 = vadd.f32 %v579, %v689
      %v691 = vpop.f32.mrb[0].mxu0
      %692 = vdwg.mxu0
      %v693 = vld [vmem:[%s330] sm:$0xe]
      %v694 = vld [vmem:[%s330 + $0x8] sm:$0xe]
      %v695 = vld [vmem:[%s330 + $0x10] sm:$0xe]
      %v696 = vld [vmem:[%s330 + $0x18] sm:$0xe]
      %v697 = vld [vmem:[%s330 + $0x20] sm:$0xe]
      %v698 = vld [vmem:[%s330 + $0x28] sm:$0xe]
      %v699 = vld [vmem:[%s330 + $0x30] sm:$0xe]
      %v700 = vld [vmem:[%s330 + $0x38] sm:$0xe]
      %vm717 = vcmask 1042432
      %vm718 = vcmask 1046532
      %vm719 = vmor %vm717, %vm718
      %v720 = vrot.slane %v693, 5
      %v721 = vrot.slane %v720, 4
      %v722 = vrot.slane %v349, 5
      %v723 = vsel %vm719, %v721, %v722
      %v724 = vrot.slane %v694, 5
      %v725 = vrot.slane %v724, 4
      %v726 = vrot.slane %v350, 5
      %v727 = vsel %vm719, %v725, %v726
      %v728 = vrot.slane %v695, 5
      %v729 = vrot.slane %v728, 4
      %v730 = vrot.slane %v351, 5
      %v731 = vsel %vm719, %v729, %v730
      %v732 = vrot.slane %v696, 5
      %v733 = vrot.slane %v732, 4
      %v734 = vrot.slane %v352, 5
      %v735 = vsel %vm719, %v733, %v734
      %v736 = vrot.slane %v697, 5
      %v737 = vrot.slane %v736, 4
      %v738 = vrot.slane %v353, 5
      %v739 = vsel %vm719, %v737, %v738
      %v740 = vrot.slane %v698, 5
      %v741 = vrot.slane %v740, 4
      %v742 = vrot.slane %v354, 5
      %v743 = vsel %vm719, %v741, %v742
      %v744 = vrot.slane %v699, 5
      %v745 = vrot.slane %v744, 4
      %v746 = vrot.slane %v355, 5
      %v747 = vsel %vm719, %v745, %v746
      %v748 = vrot.slane %v700, 5
      %v749 = vrot.slane %v748, 4
      %v750 = vrot.slane %v356, 5
      %v751 = vsel %vm719, %v749, %v750
      %s752 = scalar_lea.vmem %s1, 32
      %v753 = vld [vmem:[%s752] sm:$0xf]
      %v754 = vld [vmem:[%s752 + $0x4] sm:$0xf]
      %v755 = vld [vmem:[%s752 + $0x8] sm:$0xf]
      %v756 = vld [vmem:[%s752 + $0xc] sm:$0x7]
      %v757 = vunpack.c.l.b16 %v723
      %v758 = vunpack.c.l.b16 %v727
      %v759 = vunpack.c.l.b16 %v731
      %v760 = vunpack.c.l.b16 %v735
      %v761 = vunpack.c.l.b16 %v739
      %v762 = vunpack.c.l.b16 %v743
      %v763 = vunpack.c.l.b16 %v747
      %v764 = vunpack.c.l.b16 %v751
      %v765 = vpack.c.b16 %v758, %v757
      %v766 = vpack.c.b16 %v760, %v759
      %v767 = vpack.c.b16 %v762, %v761
      %v768 = vpack.c.b16 %v764, %v763
      %v773 = vunpack.c.l.b16 %v753
      %v774 = vunpack.c.l.b16 %v754
      %v775 = vunpack.c.l.b16 %v755
      %v776 = vunpack.c.l.b16 %v756
      %v777 = vpack.c.b16 %v774, %v773
      %v778 = vpack.c.b16 %v776, %v775
      %v781 = vsel %vm500, %v765, 0
      %v784 = vsel %vm500, %v766, 0
      %v787 = vsel %vm500, %v767, 0
      %v790 = vsel %vm500, %v768, 0
      %v793 = vsel %vm513, %v778, 0
      %795 = vmatprep.subr.bf16.mxu0 0
      %796 = vmatpush1.bf16.msra.mxu0 %v777
      %797 = vmatprep.subr.bf16.mxu0 0
      %798 = vmatpush1.bf16.msra.mxu0 %v793
      %799 = vmatprep.subr.bf16.mxu0 0
      %800 = vmatpush1.bf16.msra.mxu0 0
      %801 = vmatprep.subr.bf16.mxu0 0
      %802 = vmatpush1.bf16.msra.mxu0 0
      %803 = vmatprep.subr.bf16.mxu0 0
      %804 = vmatpush1.bf16.msra.mxu0 0
      %805 = vmatprep.subr.bf16.mxu0 0
      %806 = vmatpush1.bf16.msra.mxu0 0
      %807 = vmatprep.subr.bf16.mxu0 0
      %808 = vmatpush1.bf16.msra.mxu0 0
      %809 = vmatprep.subr.bf16.mxu0 0
      %810 = vmatpush1.bf16.msra.mxu0 0
      %811 = vmatprep.subr.bf16.mxu0 0
      %812 = vmatpush1.bf16.msra.mxu0 0
      %813 = vmatprep.subr.bf16.mxu0 0
      %814 = vmatpush1.bf16.msra.mxu0 0
      %815 = vmatprep.subr.bf16.mxu0 0
      %816 = vmatpush1.bf16.msra.mxu0 0
      %817 = vmatprep.subr.bf16.mxu0 0
      %818 = vmatpush1.bf16.msra.mxu0 0
      %819 = vmatprep.subr.bf16.mxu0 0
      %820 = vmatpush1.bf16.msra.mxu0 0
      %821 = vmatprep.subr.bf16.mxu0 0
      %822 = vmatpush1.bf16.msra.mxu0 0
      %823 = vmatprep.subr.bf16.mxu0 0
      %824 = vmatpush1.bf16.msra.mxu0 0
      %825 = vmatprep.subr.bf16.mxu0 0
      %826 = vmatpush1.bf16.msra.mxu0 0
      %827 = vmatprep.mubr.bf16.mxu0 0
      %828 = vmatmul.mubr.bf16.gmra.mrb[0].mxu0 %v781
      %v829 = vpop.f32.mrb[0].mxu0
      %v830 = vadd.f32 0.0, %v829
      %v831 = vpop.f32.mrb[0].mxu0
      %v832 = vpop.f32.mrb[0].mxu0
      %v833 = vadd.f32 0.0, %v832
      %v834 = vpop.f32.mrb[0].mxu0
      %835 = vmatprep.mubr.bf16.mxu0 0
      %836 = vmatmul.mubr.bf16.gmra.mrb[0].mxu0 %v784
      %v837 = vpop.f32.mrb[0].mxu0
      %v838 = vadd.f32 0.0, %v837
      %v839 = vpop.f32.mrb[0].mxu0
      %v840 = vpop.f32.mrb[0].mxu0
      %v841 = vadd.f32 0.0, %v840
      %v842 = vpop.f32.mrb[0].mxu0
      %843 = vmatprep.mubr.bf16.mxu0 0
      %844 = vmatmul.mubr.bf16.gmra.mrb[0].mxu0 %v787
      %v845 = vpop.f32.mrb[0].mxu0
      %v846 = vadd.f32 0.0, %v845
      %v847 = vpop.f32.mrb[0].mxu0
      %v848 = vpop.f32.mrb[0].mxu0
      %v849 = vadd.f32 0.0, %v848
      %v850 = vpop.f32.mrb[0].mxu0
      %851 = vmatprep.mubr.bf16.mxu0 0
      %852 = vmatmul.mubr.bf16.gmra.mrb[0].mxu0 %v790
      %v853 = vpop.f32.mrb[0].mxu0
      %v854 = vadd.f32 0.0, %v853
      %v855 = vpop.f32.mrb[0].mxu0
      %v856 = vpop.f32.mrb[0].mxu0
      %v857 = vadd.f32 0.0, %v856
      %v858 = vpop.f32.mrb[0].mxu0
      %859 = vdwg.mxu0
      %v860 = vadd.f32 %v663, %v830
      %v861 = vadd.f32 %v666, %v833
      %v862 = vadd.f32 %v671, %v838
      %v863 = vadd.f32 %v674, %v841
      %v864 = vadd.f32 %v679, %v846
      %v865 = vadd.f32 %v682, %v849
      %v866 = vadd.f32 %v687, %v854
      %v867 = vadd.f32 %v690, %v857
      %v868 = vld [vmem:[%s2] sm:$0x1]
      %v870 = vlaneseq
      %v871 = vshrl.u32 %v870, 7
      %v872 = vsub.s32 0, %v871
      %v873 = vrot.slane %v868, %v872
      %v875 = vadd.f32 %v860, %v873
      %v876 = vadd.f32 %v861, %v873
      %v877 = vadd.f32 %v862, %v873
      %v878 = vadd.f32 %v863, %v873
      %v879 = vadd.f32 %v864, %v873
      %v880 = vadd.f32 %v865, %v873
      %v881 = vadd.f32 %v866, %v873
      %v882 = vadd.f32 %v867, %v873
      %v883 = vmax.f32 %v875, 0.0
      %v884 = vmax.f32 %v876, 0.0
      %v885 = vmax.f32 %v877, 0.0
      %v886 = vmax.f32 %v878, 0.0
      %v887 = vmax.f32 %v879, 0.0
      %v888 = vmax.f32 %v880, 0.0
      %v889 = vmax.f32 %v881, 0.0
      %v890 = vmax.f32 %v882, 0.0
      %v891 = vpack.c.bf16 %v884, %v883
      %v892 = vpack.c.bf16 %v886, %v885
      %v893 = vpack.c.bf16 %v888, %v887
      %v894 = vpack.c.bf16 %v890, %v889
      %v899 = vunpack.c.l.b16 %v891
      %v900 = vunpack.c.h.b16 %v891
      %v901 = vunpack.c.l.b16 %v892
      %v902 = vunpack.c.h.b16 %v892
      %v903 = vunpack.c.l.b16 %v893
      %v904 = vunpack.c.h.b16 %v893
      %v905 = vunpack.c.l.b16 %v894
      %v906 = vunpack.c.h.b16 %v894
      %v907 = vpack.c.b16 %v899, %v899
      %v908 = vpack.c.b16 %v900, %v900
      %v909 = vpack.c.b16 %v901, %v901
      %v910 = vpack.c.b16 %v902, %v902
      %v911 = vpack.c.b16 %v903, %v903
      %v912 = vpack.c.b16 %v904, %v904
      %v913 = vpack.c.b16 %v905, %v905
      %v914 = vpack.c.b16 %v906, %v906
      %v916 = vunpack.c.l.s4 1966171168
      %v917 = vunpack.c.0.s8 %v916
      %v918 = vlaneseq
      %v919 = vshrl.u32 %v918, 7
      %v920 = vsub.s32 %v917, %v919
      %v921 = vrot.slane %v907, %v920
      %v922 = vcombine.high %v921, %v921
      %v924 = vunpack.c.l.s4 1966171168
      %v925 = vunpack.c.0.s8 %v924
      %v926 = vlaneseq
      %v927 = vshrl.u32 %v926, 7
      %v928 = vsub.s32 %v925, %v927
      %v929 = vrot.slane %v921, %v928
      %v931 = vunpack.c.l.s4 1966171168
      %v932 = vunpack.c.0.s8 %v931
      %v933 = vlaneseq
      %v934 = vshrl.u32 %v933, 7
      %v935 = vsub.s32 %v932, %v934
      %v936 = vrot.slane %v922, %v935
      %v937 = vcombine.high %v929, %v929
      %v939 = vunpack.c.l.s4 1966171168
      %v940 = vunpack.c.0.s8 %v939
      %v941 = vlaneseq
      %v942 = vshrl.u32 %v941, 7
      %v943 = vsub.s32 %v940, %v942
      %v944 = vrot.slane %v908, %v943
      %v945 = vcombine.high %v944, %v944
      %v947 = vunpack.c.l.s4 1966171168
      %v948 = vunpack.c.0.s8 %v947
      %v949 = vlaneseq
      %v950 = vshrl.u32 %v949, 7
      %v951 = vsub.s32 %v948, %v950
      %v952 = vrot.slane %v944, %v951
      %v954 = vunpack.c.l.s4 1966171168
      %v955 = vunpack.c.0.s8 %v954
      %v956 = vlaneseq
      %v957 = vshrl.u32 %v956, 7
      %v958 = vsub.s32 %v955, %v957
      %v959 = vrot.slane %v945, %v958
      %v960 = vcombine.high %v952, %v952
      %v962 = vunpack.c.l.s4 1966171168
      %v963 = vunpack.c.0.s8 %v962
      %v964 = vlaneseq
      %v965 = vshrl.u32 %v964, 7
      %v966 = vsub.s32 %v963, %v965
      %v967 = vrot.slane %v909, %v966
      %v968 = vcombine.high %v967, %v967
      %v970 = vunpack.c.l.s4 1966171168
      %v971 = vunpack.c.0.s8 %v970
      %v972 = vlaneseq
      %v973 = vshrl.u32 %v972, 7
      %v974 = vsub.s32 %v971, %v973
      %v975 = vrot.slane %v967, %v974
      %v977 = vunpack.c.l.s4 1966171168
      %v978 = vunpack.c.0.s8 %v977
      %v979 = vlaneseq
      %v980 = vshrl.u32 %v979, 7
      %v981 = vsub.s32 %v978, %v980
      %v982 = vrot.slane %v968, %v981
      %v983 = vcombine.high %v975, %v975
      %v985 = vunpack.c.l.s4 1966171168
      %v986 = vunpack.c.0.s8 %v985
      %v987 = vlaneseq
      %v988 = vshrl.u32 %v987, 7
      %v989 = vsub.s32 %v986, %v988
      %v990 = vrot.slane %v910, %v989
      %v991 = vcombine.high %v990, %v990
      %v993 = vunpack.c.l.s4 1966171168
      %v994 = vunpack.c.0.s8 %v993
      %v995 = vlaneseq
      %v996 = vshrl.u32 %v995, 7
      %v997 = vsub.s32 %v994, %v996
      %v998 = vrot.slane %v990, %v997
      %v1000 = vunpack.c.l.s4 1966171168
      %v1001 = vunpack.c.0.s8 %v1000
      %v1002 = vlaneseq
      %v1003 = vshrl.u32 %v1002, 7
      %v1004 = vsub.s32 %v1001, %v1003
      %v1005 = vrot.slane %v991, %v1004
      %v1006 = vcombine.high %v998, %v998
      %v1008 = vunpack.c.l.s4 1966171168
      %v1009 = vunpack.c.0.s8 %v1008
      %v1010 = vlaneseq
      %v1011 = vshrl.u32 %v1010, 7
      %v1012 = vsub.s32 %v1009, %v1011
      %v1013 = vrot.slane %v911, %v1012
      %v1014 = vcombine.high %v1013, %v1013
      %v1016 = vunpack.c.l.s4 1966171168
      %v1017 = vunpack.c.0.s8 %v1016
      %v1018 = vlaneseq
      %v1019 = vshrl.u32 %v1018, 7
      %v1020 = vsub.s32 %v1017, %v1019
      %v1021 = vrot.slane %v1013, %v1020
      %v1023 = vunpack.c.l.s4 1966171168
      %v1024 = vunpack.c.0.s8 %v1023
      %v1025 = vlaneseq
      %v1026 = vshrl.u32 %v1025, 7
      %v1027 = vsub.s32 %v1024, %v1026
      %v1028 = vrot.slane %v1014, %v1027
      %v1029 = vcombine.high %v1021, %v1021
      %v1031 = vunpack.c.l.s4 1966171168
      %v1032 = vunpack.c.0.s8 %v1031
      %v1033 = vlaneseq
      %v1034 = vshrl.u32 %v1033, 7
      %v1035 = vsub.s32 %v1032, %v1034
      %v1036 = vrot.slane %v912, %v1035
      %v1037 = vcombine.high %v1036, %v1036
      %v1039 = vunpack.c.l.s4 1966171168
      %v1040 = vunpack.c.0.s8 %v1039
      %v1041 = vlaneseq
      %v1042 = vshrl.u32 %v1041, 7
      %v1043 = vsub.s32 %v1040, %v1042
      %v1044 = vrot.slane %v1036, %v1043
      %v1046 = vunpack.c.l.s4 1966171168
      %v1047 = vunpack.c.0.s8 %v1046
      %v1048 = vlaneseq
      %v1049 = vshrl.u32 %v1048, 7
      %v1050 = vsub.s32 %v1047, %v1049
      %v1051 = vrot.slane %v1037, %v1050
      %v1052 = vcombine.high %v1044, %v1044
      %v1054 = vunpack.c.l.s4 1966171168
      %v1055 = vunpack.c.0.s8 %v1054
      %v1056 = vlaneseq
      %v1057 = vshrl.u32 %v1056, 7
      %v1058 = vsub.s32 %v1055, %v1057
      %v1059 = vrot.slane %v913, %v1058
      %v1060 = vcombine.high %v1059, %v1059
      %v1062 = vunpack.c.l.s4 1966171168
      %v1063 = vunpack.c.0.s8 %v1062
      %v1064 = vlaneseq
      %v1065 = vshrl.u32 %v1064, 7
      %v1066 = vsub.s32 %v1063, %v1065
      %v1067 = vrot.slane %v1059, %v1066
      %v1069 = vunpack.c.l.s4 1966171168
      %v1070 = vunpack.c.0.s8 %v1069
      %v1071 = vlaneseq
      %v1072 = vshrl.u32 %v1071, 7
      %v1073 = vsub.s32 %v1070, %v1072
      %v1074 = vrot.slane %v1060, %v1073
      %v1075 = vcombine.high %v1067, %v1067
      %v1077 = vunpack.c.l.s4 1966171168
      %v1078 = vunpack.c.0.s8 %v1077
      %v1079 = vlaneseq
      %v1080 = vshrl.u32 %v1079, 7
      %v1081 = vsub.s32 %v1078, %v1080
      %v1082 = vrot.slane %v914, %v1081
      %v1083 = vcombine.high %v1082, %v1082
      %v1085 = vunpack.c.l.s4 1966171168
      %v1086 = vunpack.c.0.s8 %v1085
      %v1087 = vlaneseq
      %v1088 = vshrl.u32 %v1087, 7
      %v1089 = vsub.s32 %v1086, %v1088
      %v1090 = vrot.slane %v1082, %v1089
      %v1092 = vunpack.c.l.s4 1966171168
      %v1093 = vunpack.c.0.s8 %v1092
      %v1094 = vlaneseq
      %v1095 = vshrl.u32 %v1094, 7
      %v1096 = vsub.s32 %v1093, %v1095
      %v1097 = vrot.slane %v1083, %v1096
      %v1098 = vcombine.high %v1090, %v1090
      %v1099 = vld [vmem:[%s3] sm:$0xff]
      %v1100 = vld [vmem:[%s3 + $0x8] sm:$0xff]
      %v1101 = vld [vmem:[%s3 + $0x10] sm:$0xff]
      %v1102 = vld [vmem:[%s3 + $0x18] sm:$0xff]
      %v1103 = vld [vmem:[%s3 + $0x20] sm:$0xff]
      %v1104 = vld [vmem:[%s3 + $0x28] sm:$0xff]
      %v1105 = vld [vmem:[%s3 + $0x30] sm:$0xff]
      %v1106 = vld [vmem:[%s3 + $0x38] sm:$0xff]
      %v1107 = vld [vmem:[%s3 + $0x40] sm:$0xff]
      %v1108 = vld [vmem:[%s3 + $0x48] sm:$0xff]
      %v1109 = vld [vmem:[%s3 + $0x50] sm:$0xff]
      %v1110 = vld [vmem:[%s3 + $0x58] sm:$0xff]
      %v1111 = vld [vmem:[%s3 + $0x60] sm:$0xff]
      %v1112 = vld [vmem:[%s3 + $0x68] sm:$0xff]
      %v1113 = vld [vmem:[%s3 + $0x70] sm:$0xff]
      %v1114 = vld [vmem:[%s3 + $0x78] sm:$0xff]
      %v1115 = vcombine.high %v936, %v936
      %v1116 = vcombine.high %v959, %v959
      %v1117 = vcombine.high %v982, %v982
      %v1118 = vcombine.high %v1005, %v1005
      %v1119 = vcombine.high %v1028, %v1028
      %v1120 = vcombine.high %v1051, %v1051
      %v1121 = vcombine.high %v1074, %v1074
      %v1122 = vcombine.high %v1097, %v1097
      %vm1123 = vsmask.f32 256
      %vm1124 = vsmask.f32 1284
      %vm1125 = vmor %vm1123, %vm1124
      %vm1126 = vsmask.f32 2312
      %vm1127 = vmor %vm1125, %vm1126
      %vm1128 = vsmask.f32 3340
      %vm1129 = vmor %vm1127, %vm1128
      %vm1130 = vsmask.f32 4368
      %vm1131 = vmor %vm1129, %vm1130
      %vm1132 = vsmask.f32 5396
      %vm1133 = vmor %vm1131, %vm1132
      %vm1134 = vsmask.f32 6424
      %vm1135 = vmor %vm1133, %vm1134
      %vm1136 = vsmask.f32 7452
      %vm1137 = vmor %vm1135, %vm1136
      %v1139 = vshrl.u32 %v929, 16
      %v1141 = vrot.slane %v1139, 7
      %v1142 = vrot.slane %v1141, 1
      %v1144 = vshll.u32 %v936, 16
      %v1146 = vsel %vm1137, %v1142, %v1144
      %v1147 = vshrl.u32 %v936, 16
      %v1149 = vrot.slane %v1147, 7
      %v1150 = vrot.slane %v1149, 1
      %v1152 = vshll.u32 %v937, 16
      %v1154 = vsel %vm1137, %v1150, %v1152
      %v1155 = vshrl.u32 %v937, 16
      %v1157 = vrot.slane %v1155, 7
      %v1158 = vrot.slane %v1157, 1
      %v1160 = vshll.u32 %v1115, 16
      %v1162 = vsel %vm1137, %v1158, %v1160
      %v1164 = vshrl.u32 %v952, 16
      %v1166 = vrot.slane %v1164, 7
      %v1167 = vrot.slane %v1166, 1
      %v1169 = vshll.u32 %v959, 16
      %v1171 = vsel %vm1137, %v1167, %v1169
      %v1172 = vshrl.u32 %v959, 16
      %v1174 = vrot.slane %v1172, 7
      %v1175 = vrot.slane %v1174, 1
      %v1177 = vshll.u32 %v960, 16
      %v1179 = vsel %vm1137, %v1175, %v1177
      %v1180 = vshrl.u32 %v960, 16
      %v1182 = vrot.slane %v1180, 7
      %v1183 = vrot.slane %v1182, 1
      %v1185 = vshll.u32 %v1116, 16
      %v1187 = vsel %vm1137, %v1183, %v1185
      %v1189 = vshrl.u32 %v975, 16
      %v1191 = vrot.slane %v1189, 7
      %v1192 = vrot.slane %v1191, 1
      %v1194 = vshll.u32 %v982, 16
      %v1196 = vsel %vm1137, %v1192, %v1194
      %v1197 = vshrl.u32 %v982, 16
      %v1199 = vrot.slane %v1197, 7
      %v1200 = vrot.slane %v1199, 1
      %v1202 = vshll.u32 %v983, 16
      %v1204 = vsel %vm1137, %v1200, %v1202
      %v1205 = vshrl.u32 %v983, 16
      %v1207 = vrot.slane %v1205, 7
      %v1208 = vrot.slane %v1207, 1
      %v1210 = vshll.u32 %v1117, 16
      %v1212 = vsel %vm1137, %v1208, %v1210
      %v1214 = vshrl.u32 %v998, 16
      %v1216 = vrot.slane %v1214, 7
      %v1217 = vrot.slane %v1216, 1
      %v1219 = vshll.u32 %v1005, 16
      %v1221 = vsel %vm1137, %v1217, %v1219
      %v1222 = vshrl.u32 %v1005, 16
      %v1224 = vrot.slane %v1222, 7
      %v1225 = vrot.slane %v1224, 1
      %v1227 = vshll.u32 %v1006, 16
      %v1229 = vsel %vm1137, %v1225, %v1227
      %v1230 = vshrl.u32 %v1006, 16
      %v1232 = vrot.slane %v1230, 7
      %v1233 = vrot.slane %v1232, 1
      %v1235 = vshll.u32 %v1118, 16
      %v1237 = vsel %vm1137, %v1233, %v1235
      %v1239 = vshrl.u32 %v1021, 16
      %v1241 = vrot.slane %v1239, 7
      %v1242 = vrot.slane %v1241, 1
      %v1244 = vshll.u32 %v1028, 16
      %v1246 = vsel %vm1137, %v1242, %v1244
      %v1247 = vshrl.u32 %v1028, 16
      %v1249 = vrot.slane %v1247, 7
      %v1250 = vrot.slane %v1249, 1
      %v1252 = vshll.u32 %v1029, 16
      %v1254 = vsel %vm1137, %v1250, %v1252
      %v1255 = vshrl.u32 %v1029, 16
      %v1257 = vrot.slane %v1255, 7
      %v1258 = vrot.slane %v1257, 1
      %v1260 = vshll.u32 %v1119, 16
      %v1262 = vsel %vm1137, %v1258, %v1260
      %v1264 = vshrl.u32 %v1044, 16
      %v1266 = vrot.slane %v1264, 7
      %v1267 = vrot.slane %v1266, 1
      %v1269 = vshll.u32 %v1051, 16
      %v1271 = vsel %vm1137, %v1267, %v1269
      %v1272 = vshrl.u32 %v1051, 16
      %v1274 = vrot.slane %v1272, 7
      %v1275 = vrot.slane %v1274, 1
      %v1277 = vshll.u32 %v1052, 16
      %v1279 = vsel %vm1137, %v1275, %v1277
      %v1280 = vshrl.u32 %v1052, 16
      %v1282 = vrot.slane %v1280, 7
      %v1283 = vrot.slane %v1282, 1
      %v1285 = vshll.u32 %v1120, 16
      %v1287 = vsel %vm1137, %v1283, %v1285
      %v1289 = vshrl.u32 %v1067, 16
      %v1291 = vrot.slane %v1289, 7
      %v1292 = vrot.slane %v1291, 1
      %v1294 = vshll.u32 %v1074, 16
      %v1296 = vsel %vm1137, %v1292, %v1294
      %v1297 = vshrl.u32 %v1074, 16
      %v1299 = vrot.slane %v1297, 7
      %v1300 = vrot.slane %v1299, 1
      %v1302 = vshll.u32 %v1075, 16
      %v1304 = vsel %vm1137, %v1300, %v1302
      %v1305 = vshrl.u32 %v1075, 16
      %v1307 = vrot.slane %v1305, 7
      %v1308 = vrot.slane %v1307, 1
      %v1310 = vshll.u32 %v1121, 16
      %v1312 = vsel %vm1137, %v1308, %v1310
      %v1314 = vshrl.u32 %v1090, 16
      %v1316 = vrot.slane %v1314, 7
      %v1317 = vrot.slane %v1316, 1
      %v1319 = vshll.u32 %v1097, 16
      %v1321 = vsel %vm1137, %v1317, %v1319
      %v1322 = vshrl.u32 %v1097, 16
      %v1324 = vrot.slane %v1322, 7
      %v1325 = vrot.slane %v1324, 1
      %v1327 = vshll.u32 %v1098, 16
      %v1329 = vsel %vm1137, %v1325, %v1327
      %v1330 = vshrl.u32 %v1098, 16
      %v1332 = vrot.slane %v1330, 7
      %v1333 = vrot.slane %v1332, 1
      %v1335 = vshll.u32 %v1122, 16
      %v1337 = vsel %vm1137, %v1333, %v1335
      %s1338 = scalar_lea.vmem %s3, 128
      %v1339 = vld [vmem:[%s1338] sm:$0xff]
      %v1340 = vld [vmem:[%s1338 + $0x8] sm:$0xff]
      %v1341 = vld [vmem:[%s1338 + $0x10] sm:$0xff]
      %v1342 = vld [vmem:[%s1338 + $0x18] sm:$0xff]
      %v1343 = vld [vmem:[%s1338 + $0x20] sm:$0xff]
      %v1344 = vld [vmem:[%s1338 + $0x28] sm:$0xff]
      %v1345 = vld [vmem:[%s1338 + $0x30] sm:$0xff]
      %v1346 = vld [vmem:[%s1338 + $0x38] sm:$0xff]
      %v1347 = vld [vmem:[%s1338 + $0x40] sm:$0xff]
      %v1348 = vld [vmem:[%s1338 + $0x48] sm:$0xff]
      %v1349 = vld [vmem:[%s1338 + $0x50] sm:$0xff]
      %v1350 = vld [vmem:[%s1338 + $0x58] sm:$0xff]
      %v1351 = vld [vmem:[%s1338 + $0x60] sm:$0xff]
      %v1352 = vld [vmem:[%s1338 + $0x68] sm:$0xff]
      %v1353 = vld [vmem:[%s1338 + $0x70] sm:$0xff]
      %v1354 = vld [vmem:[%s1338 + $0x78] sm:$0xff]
      %v1355 = vcombine.low %v1146, %v1154
      %v1356 = vcombine.low %v1162, %v1171
      %v1357 = vcombine.low %v1179, %v1187
      %v1358 = vcombine.low %v1196, %v1204
      %v1360 = vunpack.c.l.s4 1966171168
      %v1361 = vunpack.c.0.s8 %v1360
      %v1362 = vlaneseq
      %v1363 = vshrl.u32 %v1362, 7
      %v1364 = vsub.s32 %v1361, %v1363
      %v1365 = vrot.slane %v1355, %v1364
      %v1367 = vunpack.c.l.s4 1966171168
      %v1368 = vunpack.c.0.s8 %v1367
      %v1369 = vlaneseq
      %v1370 = vshrl.u32 %v1369, 7
      %v1371 = vsub.s32 %v1368, %v1370
      %v1372 = vrot.slane %v1356, %v1371
      %v1374 = vunpack.c.l.s4 1966171168
      %v1375 = vunpack.c.0.s8 %v1374
      %v1376 = vlaneseq
      %v1377 = vshrl.u32 %v1376, 7
      %v1378 = vsub.s32 %v1375, %v1377
      %v1379 = vrot.slane %v1357, %v1378
      %v1381 = vunpack.c.l.s4 1966171168
      %v1382 = vunpack.c.0.s8 %v1381
      %v1383 = vlaneseq
      %v1384 = vshrl.u32 %v1383, 7
      %v1385 = vsub.s32 %v1382, %v1384
      %v1386 = vrot.slane %v1358, %v1385
      %v1387 = vcombine.low %v1365, %v1372
      %v1388 = vcombine.low %v1379, %v1386
      %v1390 = vunpack.c.l.s4 1966171168
      %v1391 = vunpack.c.0.s8 %v1390
      %v1392 = vlaneseq
      %v1393 = vshrl.u32 %v1392, 7
      %v1394 = vsub.s32 %v1391, %v1393
      %v1395 = vrot.slane %v1387, %v1394
      %v1397 = vunpack.c.l.s4 1966171168
      %v1398 = vunpack.c.0.s8 %v1397
      %v1399 = vlaneseq
      %v1400 = vshrl.u32 %v1399, 7
      %v1401 = vsub.s32 %v1398, %v1400
      %v1402 = vrot.slane %v1388, %v1401
      %v1403 = vcombine.low %v1395, %v1402
      %v1404 = vcombine.low %v1212, %v1221
      %v1405 = vcombine.low %v1229, %v1237
      %v1406 = vcombine.low %v1246, %v1254
      %v1407 = vcombine.low %v1262, %v1271
      %v1409 = vunpack.c.l.s4 1966171168
      %v1410 = vunpack.c.0.s8 %v1409
      %v1411 = vlaneseq
      %v1412 = vshrl.u32 %v1411, 7
      %v1413 = vsub.s32 %v1410, %v1412
      %v1414 = vrot.slane %v1404, %v1413
      %v1416 = vunpack.c.l.s4 1966171168
      %v1417 = vunpack.c.0.s8 %v1416
      %v1418 = vlaneseq
      %v1419 = vshrl.u32 %v1418, 7
      %v1420 = vsub.s32 %v1417, %v1419
      %v1421 = vrot.slane %v1405, %v1420
      %v1423 = vunpack.c.l.s4 1966171168
      %v1424 = vunpack.c.0.s8 %v1423
      %v1425 = vlaneseq
      %v1426 = vshrl.u32 %v1425, 7
      %v1427 = vsub.s32 %v1424, %v1426
      %v1428 = vrot.slane %v1406, %v1427
      %v1430 = vunpack.c.l.s4 1966171168
      %v1431 = vunpack.c.0.s8 %v1430
      %v1432 = vlaneseq
      %v1433 = vshrl.u32 %v1432, 7
      %v1434 = vsub.s32 %v1431, %v1433
      %v1435 = vrot.slane %v1407, %v1434
      %v1436 = vcombine.low %v1414, %v1421
      %v1437 = vcombine.low %v1428, %v1435
      %v1439 = vunpack.c.l.s4 1966171168
      %v1440 = vunpack.c.0.s8 %v1439
      %v1441 = vlaneseq
      %v1442 = vshrl.u32 %v1441, 7
      %v1443 = vsub.s32 %v1440, %v1442
      %v1444 = vrot.slane %v1436, %v1443
      %v1446 = vunpack.c.l.s4 1966171168
      %v1447 = vunpack.c.0.s8 %v1446
      %v1448 = vlaneseq
      %v1449 = vshrl.u32 %v1448, 7
      %v1450 = vsub.s32 %v1447, %v1449
      %v1451 = vrot.slane %v1437, %v1450
      %v1452 = vcombine.low %v1444, %v1451
      %v1453 = vcombine.low %v1279, %v1287
      %v1454 = vcombine.low %v1296, %v1304
      %v1455 = vcombine.low %v1312, %v1321
      %v1456 = vcombine.low %v1329, %v1337
      %v1458 = vunpack.c.l.s4 1966171168
      %v1459 = vunpack.c.0.s8 %v1458
      %v1460 = vlaneseq
      %v1461 = vshrl.u32 %v1460, 7
      %v1462 = vsub.s32 %v1459, %v1461
      %v1463 = vrot.slane %v1453, %v1462
      %v1465 = vunpack.c.l.s4 1966171168
      %v1466 = vunpack.c.0.s8 %v1465
      %v1467 = vlaneseq
      %v1468 = vshrl.u32 %v1467, 7
      %v1469 = vsub.s32 %v1466, %v1468
      %v1470 = vrot.slane %v1454, %v1469
      %v1472 = vunpack.c.l.s4 1966171168
      %v1473 = vunpack.c.0.s8 %v1472
      %v1474 = vlaneseq
      %v1475 = vshrl.u32 %v1474, 7
      %v1476 = vsub.s32 %v1473, %v1475
      %v1477 = vrot.slane %v1455, %v1476
      %v1479 = vunpack.c.l.s4 1966171168
      %v1480 = vunpack.c.0.s8 %v1479
      %v1481 = vlaneseq
      %v1482 = vshrl.u32 %v1481, 7
      %v1483 = vsub.s32 %v1480, %v1482
      %v1484 = vrot.slane %v1456, %v1483
      %v1485 = vcombine.low %v1463, %v1470
      %v1486 = vcombine.low %v1477, %v1484
      %v1488 = vunpack.c.l.s4 1966171168
      %v1489 = vunpack.c.0.s8 %v1488
      %v1490 = vlaneseq
      %v1491 = vshrl.u32 %v1490, 7
      %v1492 = vsub.s32 %v1489, %v1491
      %v1493 = vrot.slane %v1485, %v1492
      %v1495 = vunpack.c.l.s4 1966171168
      %v1496 = vunpack.c.0.s8 %v1495
      %v1497 = vlaneseq
      %v1498 = vshrl.u32 %v1497, 7
      %v1499 = vsub.s32 %v1496, %v1498
      %v1500 = vrot.slane %v1486, %v1499
      %v1501 = vcombine.low %v1493, %v1500
      %v1521 = vunpack.c.l.b16 %v1339
      %v1522 = vunpack.c.h.b16 %v1339
      %v1523 = vunpack.c.l.b16 %v1340
      %v1524 = vunpack.c.h.b16 %v1340
      %v1525 = vunpack.c.l.b16 %v1341
      %v1526 = vunpack.c.h.b16 %v1341
      %v1527 = vunpack.c.l.b16 %v1342
      %v1528 = vunpack.c.h.b16 %v1342
      %v1529 = vunpack.c.l.b16 %v1343
      %v1530 = vunpack.c.h.b16 %v1343
      %v1531 = vunpack.c.l.b16 %v1344
      %v1532 = vunpack.c.h.b16 %v1344
      %v1533 = vunpack.c.l.b16 %v1345
      %v1534 = vunpack.c.h.b16 %v1345
      %v1535 = vunpack.c.l.b16 %v1346
      %v1536 = vunpack.c.h.b16 %v1346
      %v1537 = vunpack.c.l.b16 %v1347
      %v1538 = vunpack.c.h.b16 %v1347
      %v1539 = vunpack.c.l.b16 %v1348
      %v1540 = vunpack.c.h.b16 %v1348
      %v1541 = vunpack.c.l.b16 %v1349
      %v1542 = vunpack.c.h.b16 %v1349
      %v1543 = vunpack.c.l.b16 %v1350
      %v1544 = vunpack.c.h.b16 %v1350
      %v1545 = vunpack.c.l.b16 %v1351
      %v1546 = vunpack.c.h.b16 %v1351
      %v1547 = vunpack.c.l.b16 %v1352
      %v1548 = vunpack.c.h.b16 %v1352
      %v1549 = vunpack.c.l.b16 %v1353
      %v1550 = vunpack.c.h.b16 %v1353
      %v1551 = vunpack.c.l.b16 %v1354
      %v1552 = vunpack.c.h.b16 %v1354
      %v1553 = vpack.c.b16 %v1523, %v1521
      %v1554 = vpack.c.b16 %v1524, %v1522
      %v1555 = vpack.c.b16 %v1527, %v1525
      %v1556 = vpack.c.b16 %v1528, %v1526
      %v1557 = vpack.c.b16 %v1531, %v1529
      %v1558 = vpack.c.b16 %v1532, %v1530
      %v1559 = vpack.c.b16 %v1535, %v1533
      %v1560 = vpack.c.b16 %v1536, %v1534
      %v1561 = vpack.c.b16 %v1539, %v1537
      %v1562 = vpack.c.b16 %v1540, %v1538
      %v1563 = vpack.c.b16 %v1543, %v1541
      %v1564 = vpack.c.b16 %v1544, %v1542
      %v1565 = vpack.c.b16 %v1547, %v1545
      %v1566 = vpack.c.b16 %v1548, %v1546
      %v1567 = vpack.c.b16 %v1551, %v1549
      %v1568 = vpack.c.b16 %v1552, %v1550
      %1585 = vmatprep.subr.bf16.mxu0 %v1554
      %1586 = vmatpush1.bf16.msra.mxu0 %v1553
      %1587 = vmatprep.subr.bf16.mxu0 %v1556
      %1588 = vmatpush1.bf16.msra.mxu0 %v1555
      %1589 = vmatprep.subr.bf16.mxu0 %v1558
      %1590 = vmatpush1.bf16.msra.mxu0 %v1557
      %1591 = vmatprep.subr.bf16.mxu0 %v1560
      %1592 = vmatpush1.bf16.msra.mxu0 %v1559
      %1593 = vmatprep.subr.bf16.mxu0 %v1562
      %1594 = vmatpush1.bf16.msra.mxu0 %v1561
      %1595 = vmatprep.subr.bf16.mxu0 %v1564
      %1596 = vmatpush1.bf16.msra.mxu0 %v1563
      %1597 = vmatprep.subr.bf16.mxu0 %v1566
      %1598 = vmatpush1.bf16.msra.mxu0 %v1565
      %1599 = vmatprep.subr.bf16.mxu0 %v1568
      %1600 = vmatpush1.bf16.msra.mxu0 %v1567
      %1601 = vmatprep.subr.bf16.mxu0 0
      %1602 = vmatpush1.bf16.msra.mxu0 0
      %1603 = vmatprep.subr.bf16.mxu0 0
      %1604 = vmatpush1.bf16.msra.mxu0 0
      %1605 = vmatprep.subr.bf16.mxu0 0
      %1606 = vmatpush1.bf16.msra.mxu0 0
      %1607 = vmatprep.subr.bf16.mxu0 0
      %1608 = vmatpush1.bf16.msra.mxu0 0
      %1609 = vmatprep.subr.bf16.mxu0 0
      %1610 = vmatpush1.bf16.msra.mxu0 0
      %1611 = vmatprep.subr.bf16.mxu0 0
      %1612 = vmatpush1.bf16.msra.mxu0 0
      %1613 = vmatprep.subr.bf16.mxu0 0
      %1614 = vmatpush1.bf16.msra.mxu0 0
      %1615 = vmatprep.subr.bf16.mxu0 0
      %1616 = vmatpush1.bf16.msra.mxu0 0
      %1617 = vmatprep.mubr.bf16.mxu0 0
      %1618 = vmatmul.mubr.bf16.gmra.mrb[0].mxu0 %v1403
      %v1619 = vpop.f32.mrb[0].mxu0
      %v1620 = vadd.f32 0.0, %v1619
      %v1621 = vpop.f32.mrb[0].mxu0
      %v1622 = vadd.f32 0.0, %v1621
      %v1623 = vpop.f32.mrb[0].mxu0
      %v1624 = vadd.f32 0.0, %v1623
      %v1625 = vpop.f32.mrb[0].mxu0
      %v1626 = vadd.f32 0.0, %v1625
      %1627 = vmatprep.mubr.bf16.mxu0 0
      %1628 = vmatmul.mubr.bf16.gmra.mrb[0].mxu0 %v1452
      %v1629 = vpop.f32.mrb[0].mxu0
      %v1630 = vadd.f32 0.0, %v1629
      %v1631 = vpop.f32.mrb[0].mxu0
      %v1632 = vadd.f32 0.0, %v1631
      %v1633 = vpop.f32.mrb[0].mxu0
      %v1634 = vadd.f32 0.0, %v1633
      %v1635 = vpop.f32.mrb[0].mxu0
      %v1636 = vadd.f32 0.0, %v1635
      %1637 = vmatprep.mubr.bf16.mxu0 0
      %1638 = vmatmul.mubr.bf16.gmra.mrb[0].mxu0 %v1501
      %v1639 = vpop.f32.mrb[0].mxu0
      %v1640 = vadd.f32 0.0, %v1639
      %v1641 = vpop.f32.mrb[0].mxu0
      %v1642 = vadd.f32 0.0, %v1641
      %v1643 = vpop.f32.mrb[0].mxu0
      %v1644 = vadd.f32 0.0, %v1643
      %v1645 = vpop.f32.mrb[0].mxu0
      %v1646 = vadd.f32 0.0, %v1645
      %1647 = vdwg.mxu0
      %v1648 = vcombine.low %v929, %v936
      %v1649 = vcombine.low %v937, %v952
      %v1650 = vcombine.low %v959, %v960
      %v1651 = vcombine.low %v975, %v982
      %v1653 = vunpack.c.l.s4 1966171168
      %v1654 = vunpack.c.0.s8 %v1653
      %v1655 = vlaneseq
      %v1656 = vshrl.u32 %v1655, 7
      %v1657 = vsub.s32 %v1654, %v1656
      %v1658 = vrot.slane %v1648, %v1657
      %v1660 = vunpack.c.l.s4 1966171168
      %v1661 = vunpack.c.0.s8 %v1660
      %v1662 = vlaneseq
      %v1663 = vshrl.u32 %v1662, 7
      %v1664 = vsub.s32 %v1661, %v1663
      %v1665 = vrot.slane %v1649, %v1664
      %v1667 = vunpack.c.l.s4 1966171168
      %v1668 = vunpack.c.0.s8 %v1667
      %v1669 = vlaneseq
      %v1670 = vshrl.u32 %v1669, 7
      %v1671 = vsub.s32 %v1668, %v1670
      %v1672 = vrot.slane %v1650, %v1671
      %v1674 = vunpack.c.l.s4 1966171168
      %v1675 = vunpack.c.0.s8 %v1674
      %v1676 = vlaneseq
      %v1677 = vshrl.u32 %v1676, 7
      %v1678 = vsub.s32 %v1675, %v1677
      %v1679 = vrot.slane %v1651, %v1678
      %v1680 = vcombine.low %v1658, %v1665
      %v1681 = vcombine.low %v1672, %v1679
      %v1683 = vunpack.c.l.s4 1966171168
      %v1684 = vunpack.c.0.s8 %v1683
      %v1685 = vlaneseq
      %v1686 = vshrl.u32 %v1685, 7
      %v1687 = vsub.s32 %v1684, %v1686
      %v1688 = vrot.slane %v1680, %v1687
      %v1690 = vunpack.c.l.s4 1966171168
      %v1691 = vunpack.c.0.s8 %v1690
      %v1692 = vlaneseq
      %v1693 = vshrl.u32 %v1692, 7
      %v1694 = vsub.s32 %v1691, %v1693
      %v1695 = vrot.slane %v1681, %v1694
      %v1696 = vcombine.low %v1688, %v1695
      %v1697 = vcombine.low %v983, %v998
      %v1698 = vcombine.low %v1005, %v1006
      %v1699 = vcombine.low %v1021, %v1028
      %v1700 = vcombine.low %v1029, %v1044
      %v1702 = vunpack.c.l.s4 1966171168
      %v1703 = vunpack.c.0.s8 %v1702
      %v1704 = vlaneseq
      %v1705 = vshrl.u32 %v1704, 7
      %v1706 = vsub.s32 %v1703, %v1705
      %v1707 = vrot.slane %v1697, %v1706
      %v1709 = vunpack.c.l.s4 1966171168
      %v1710 = vunpack.c.0.s8 %v1709
      %v1711 = vlaneseq
      %v1712 = vshrl.u32 %v1711, 7
      %v1713 = vsub.s32 %v1710, %v1712
      %v1714 = vrot.slane %v1698, %v1713
      %v1716 = vunpack.c.l.s4 1966171168
      %v1717 = vunpack.c.0.s8 %v1716
      %v1718 = vlaneseq
      %v1719 = vshrl.u32 %v1718, 7
      %v1720 = vsub.s32 %v1717, %v1719
      %v1721 = vrot.slane %v1699, %v1720
      %v1723 = vunpack.c.l.s4 1966171168
      %v1724 = vunpack.c.0.s8 %v1723
      %v1725 = vlaneseq
      %v1726 = vshrl.u32 %v1725, 7
      %v1727 = vsub.s32 %v1724, %v1726
      %v1728 = vrot.slane %v1700, %v1727
      %v1729 = vcombine.low %v1707, %v1714
      %v1730 = vcombine.low %v1721, %v1728
      %v1732 = vunpack.c.l.s4 1966171168
      %v1733 = vunpack.c.0.s8 %v1732
      %v1734 = vlaneseq
      %v1735 = vshrl.u32 %v1734, 7
      %v1736 = vsub.s32 %v1733, %v1735
      %v1737 = vrot.slane %v1729, %v1736
      %v1739 = vunpack.c.l.s4 1966171168
      %v1740 = vunpack.c.0.s8 %v1739
      %v1741 = vlaneseq
      %v1742 = vshrl.u32 %v1741, 7
      %v1743 = vsub.s32 %v1740, %v1742
      %v1744 = vrot.slane %v1730, %v1743
      %v1745 = vcombine.low %v1737, %v1744
      %v1746 = vcombine.low %v1051, %v1052
      %v1747 = vcombine.low %v1067, %v1074
      %v1748 = vcombine.low %v1075, %v1090
      %v1749 = vcombine.low %v1097, %v1098
      %v1751 = vunpack.c.l.s4 1966171168
      %v1752 = vunpack.c.0.s8 %v1751
      %v1753 = vlaneseq
      %v1754 = vshrl.u32 %v1753, 7
      %v1755 = vsub.s32 %v1752, %v1754
      %v1756 = vrot.slane %v1746, %v1755
      %v1758 = vunpack.c.l.s4 1966171168
      %v1759 = vunpack.c.0.s8 %v1758
      %v1760 = vlaneseq
      %v1761 = vshrl.u32 %v1760, 7
      %v1762 = vsub.s32 %v1759, %v1761
      %v1763 = vrot.slane %v1747, %v1762
      %v1765 = vunpack.c.l.s4 1966171168
      %v1766 = vunpack.c.0.s8 %v1765
      %v1767 = vlaneseq
      %v1768 = vshrl.u32 %v1767, 7
      %v1769 = vsub.s32 %v1766, %v1768
      %v1770 = vrot.slane %v1748, %v1769
      %v1772 = vunpack.c.l.s4 1966171168
      %v1773 = vunpack.c.0.s8 %v1772
      %v1774 = vlaneseq
      %v1775 = vshrl.u32 %v1774, 7
      %v1776 = vsub.s32 %v1773, %v1775
      %v1777 = vrot.slane %v1749, %v1776
      %v1778 = vcombine.low %v1756, %v1763
      %v1779 = vcombine.low %v1770, %v1777
      %v1781 = vunpack.c.l.s4 1966171168
      %v1782 = vunpack.c.0.s8 %v1781
      %v1783 = vlaneseq
      %v1784 = vshrl.u32 %v1783, 7
      %v1785 = vsub.s32 %v1782, %v1784
      %v1786 = vrot.slane %v1778, %v1785
      %v1788 = vunpack.c.l.s4 1966171168
      %v1789 = vunpack.c.0.s8 %v1788
      %v1790 = vlaneseq
      %v1791 = vshrl.u32 %v1790, 7
      %v1792 = vsub.s32 %v1789, %v1791
      %v1793 = vrot.slane %v1779, %v1792
      %v1794 = vcombine.low %v1786, %v1793
      %v1814 = vunpack.c.l.b16 %v1099
      %v1815 = vunpack.c.h.b16 %v1099
      %v1816 = vunpack.c.l.b16 %v1100
      %v1817 = vunpack.c.h.b16 %v1100
      %v1818 = vunpack.c.l.b16 %v1101
      %v1819 = vunpack.c.h.b16 %v1101
      %v1820 = vunpack.c.l.b16 %v1102
      %v1821 = vunpack.c.h.b16 %v1102
      %v1822 = vunpack.c.l.b16 %v1103
      %v1823 = vunpack.c.h.b16 %v1103
      %v1824 = vunpack.c.l.b16 %v1104
      %v1825 = vunpack.c.h.b16 %v1104
      %v1826 = vunpack.c.l.b16 %v1105
      %v1827 = vunpack.c.h.b16 %v1105
      %v1828 = vunpack.c.l.b16 %v1106
      %v1829 = vunpack.c.h.b16 %v1106
      %v1830 = vunpack.c.l.b16 %v1107
      %v1831 = vunpack.c.h.b16 %v1107
      %v1832 = vunpack.c.l.b16 %v1108
      %v1833 = vunpack.c.h.b16 %v1108
      %v1834 = vunpack.c.l.b16 %v1109
      %v1835 = vunpack.c.h.b16 %v1109
      %v1836 = vunpack.c.l.b16 %v1110
      %v1837 = vunpack.c.h.b16 %v1110
      %v1838 = vunpack.c.l.b16 %v1111
      %v1839 = vunpack.c.h.b16 %v1111
      %v1840 = vunpack.c.l.b16 %v1112
      %v1841 = vunpack.c.h.b16 %v1112
      %v1842 = vunpack.c.l.b16 %v1113
      %v1843 = vunpack.c.h.b16 %v1113
      %v1844 = vunpack.c.l.b16 %v1114
      %v1845 = vunpack.c.h.b16 %v1114
      %v1846 = vpack.c.b16 %v1816, %v1814
      %v1847 = vpack.c.b16 %v1817, %v1815
      %v1848 = vpack.c.b16 %v1820, %v1818
      %v1849 = vpack.c.b16 %v1821, %v1819
      %v1850 = vpack.c.b16 %v1824, %v1822
      %v1851 = vpack.c.b16 %v1825, %v1823
      %v1852 = vpack.c.b16 %v1828, %v1826
      %v1853 = vpack.c.b16 %v1829, %v1827
      %v1854 = vpack.c.b16 %v1832, %v1830
      %v1855 = vpack.c.b16 %v1833, %v1831
      %v1856 = vpack.c.b16 %v1836, %v1834
      %v1857 = vpack.c.b16 %v1837, %v1835
      %v1858 = vpack.c.b16 %v1840, %v1838
      %v1859 = vpack.c.b16 %v1841, %v1839
      %v1860 = vpack.c.b16 %v1844, %v1842
      %v1861 = vpack.c.b16 %v1845, %v1843
      %1878 = vmatprep.subr.bf16.mxu0 %v1847
      %1879 = vmatpush1.bf16.msra.mxu0 %v1846
      %1880 = vmatprep.subr.bf16.mxu0 %v1849
      %1881 = vmatpush1.bf16.msra.mxu0 %v1848
      %1882 = vmatprep.subr.bf16.mxu0 %v1851
      %1883 = vmatpush1.bf16.msra.mxu0 %v1850
      %1884 = vmatprep.subr.bf16.mxu0 %v1853
      %1885 = vmatpush1.bf16.msra.mxu0 %v1852
      %1886 = vmatprep.subr.bf16.mxu0 %v1855
      %1887 = vmatpush1.bf16.msra.mxu0 %v1854
      %1888 = vmatprep.subr.bf16.mxu0 %v1857
      %1889 = vmatpush1.bf16.msra.mxu0 %v1856
      %1890 = vmatprep.subr.bf16.mxu0 %v1859
      %1891 = vmatpush1.bf16.msra.mxu0 %v1858
      %1892 = vmatprep.subr.bf16.mxu0 %v1861
      %1893 = vmatpush1.bf16.msra.mxu0 %v1860
      %1894 = vmatprep.subr.bf16.mxu0 0
      %1895 = vmatpush1.bf16.msra.mxu0 0
      %1896 = vmatprep.subr.bf16.mxu0 0
      %1897 = vmatpush1.bf16.msra.mxu0 0
      %1898 = vmatprep.subr.bf16.mxu0 0
      %1899 = vmatpush1.bf16.msra.mxu0 0
      %1900 = vmatprep.subr.bf16.mxu0 0
      %1901 = vmatpush1.bf16.msra.mxu0 0
      %1902 = vmatprep.subr.bf16.mxu0 0
      %1903 = vmatpush1.bf16.msra.mxu0 0
      %1904 = vmatprep.subr.bf16.mxu0 0
      %1905 = vmatpush1.bf16.msra.mxu0 0
      %1906 = vmatprep.subr.bf16.mxu0 0
      %1907 = vmatpush1.bf16.msra.mxu0 0
      %1908 = vmatprep.subr.bf16.mxu0 0
      %1909 = vmatpush1.bf16.msra.mxu0 0
      %1910 = vmatprep.mubr.bf16.mxu0 0
      %1911 = vmatmul.mubr.bf16.gmra.mrb[0].mxu0 %v1696
      %v1912 = vpop.f32.mrb[0].mxu0
      %v1913 = vadd.f32 %v1620, %v1912
      %v1914 = vpop.f32.mrb[0].mxu0
      %v1915 = vadd.f32 %v1622, %v1914
      %v1916 = vpop.f32.mrb[0].mxu0
      %v1917 = vadd.f32 %v1624, %v1916
      %v1918 = vpop.f32.mrb[0].mxu0
      %v1919 = vadd.f32 %v1626, %v1918
      %1920 = vmatprep.mubr.bf16.mxu0 0
      %1921 = vmatmul.mubr.bf16.gmra.mrb[0].mxu0 %v1745
      %v1922 = vpop.f32.mrb[0].mxu0
      %v1923 = vadd.f32 %v1630, %v1922
      %v1924 = vpop.f32.mrb[0].mxu0
      %v1925 = vadd.f32 %v1632, %v1924
      %v1926 = vpop.f32.mrb[0].mxu0
      %v1927 = vadd.f32 %v1634, %v1926
      %v1928 = vpop.f32.mrb[0].mxu0
      %v1929 = vadd.f32 %v1636, %v1928
      %1930 = vmatprep.mubr.bf16.mxu0 0
      %1931 = vmatmul.mubr.bf16.gmra.mrb[0].mxu0 %v1794
      %v1932 = vpop.f32.mrb[0].mxu0
      %v1933 = vadd.f32 %v1640, %v1932
      %v1934 = vpop.f32.mrb[0].mxu0
      %v1935 = vadd.f32 %v1642, %v1934
      %v1936 = vpop.f32.mrb[0].mxu0
      %v1937 = vadd.f32 %v1644, %v1936
      %v1938 = vpop.f32.mrb[0].mxu0
      %v1939 = vadd.f32 %v1646, %v1938
      %1940 = vdwg.mxu0
      %s1941 = scalar_lea.vmem %s3, 256
      %v1942 = vld [vmem:[%s1941] sm:$0xff]
      %v1943 = vld [vmem:[%s1941 + $0x8] sm:$0xff]
      %v1944 = vld [vmem:[%s1941 + $0x10] sm:$0xff]
      %v1945 = vld [vmem:[%s1941 + $0x18] sm:$0xff]
      %v1946 = vld [vmem:[%s1941 + $0x20] sm:$0xff]
      %v1947 = vld [vmem:[%s1941 + $0x28] sm:$0xff]
      %v1948 = vld [vmem:[%s1941 + $0x30] sm:$0xff]
      %v1949 = vld [vmem:[%s1941 + $0x38] sm:$0xff]
      %v1950 = vld [vmem:[%s1941 + $0x40] sm:$0xff]
      %v1951 = vld [vmem:[%s1941 + $0x48] sm:$0xff]
      %v1952 = vld [vmem:[%s1941 + $0x50] sm:$0xff]
      %v1953 = vld [vmem:[%s1941 + $0x58] sm:$0xff]
      %v1954 = vld [vmem:[%s1941 + $0x60] sm:$0xff]
      %v1955 = vld [vmem:[%s1941 + $0x68] sm:$0xff]
      %v1956 = vld [vmem:[%s1941 + $0x70] sm:$0xff]
      %v1957 = vld [vmem:[%s1941 + $0x78] sm:$0xff]
      %v1958 = vcombine.low %v936, %v937
      %v1959 = vcombine.low %v1115, %v959
      %v1960 = vcombine.low %v960, %v1116
      %v1961 = vcombine.low %v982, %v983
      %v1963 = vunpack.c.l.s4 1966171168
      %v1964 = vunpack.c.0.s8 %v1963
      %v1965 = vlaneseq
      %v1966 = vshrl.u32 %v1965, 7
      %v1967 = vsub.s32 %v1964, %v1966
      %v1968 = vrot.slane %v1958, %v1967
      %v1970 = vunpack.c.l.s4 1966171168
      %v1971 = vunpack.c.0.s8 %v1970
      %v1972 = vlaneseq
      %v1973 = vshrl.u32 %v1972, 7
      %v1974 = vsub.s32 %v1971, %v1973
      %v1975 = vrot.slane %v1959, %v1974
      %v1977 = vunpack.c.l.s4 1966171168
      %v1978 = vunpack.c.0.s8 %v1977
      %v1979 = vlaneseq
      %v1980 = vshrl.u32 %v1979, 7
      %v1981 = vsub.s32 %v1978, %v1980
      %v1982 = vrot.slane %v1960, %v1981
      %v1984 = vunpack.c.l.s4 1966171168
      %v1985 = vunpack.c.0.s8 %v1984
      %v1986 = vlaneseq
      %v1987 = vshrl.u32 %v1986, 7
      %v1988 = vsub.s32 %v1985, %v1987
      %v1989 = vrot.slane %v1961, %v1988
      %v1990 = vcombine.low %v1968, %v1975
      %v1991 = vcombine.low %v1982, %v1989
      %v1993 = vunpack.c.l.s4 1966171168
      %v1994 = vunpack.c.0.s8 %v1993
      %v1995 = vlaneseq
      %v1996 = vshrl.u32 %v1995, 7
      %v1997 = vsub.s32 %v1994, %v1996
      %v1998 = vrot.slane %v1990, %v1997
      %v2000 = vunpack.c.l.s4 1966171168
      %v2001 = vunpack.c.0.s8 %v2000
      %v2002 = vlaneseq
      %v2003 = vshrl.u32 %v2002, 7
      %v2004 = vsub.s32 %v2001, %v2003
      %v2005 = vrot.slane %v1991, %v2004
      %v2006 = vcombine.low %v1998, %v2005
      %v2007 = vcombine.low %v1117, %v1005
      %v2008 = vcombine.low %v1006, %v1118
      %v2009 = vcombine.low %v1028, %v1029
      %v2010 = vcombine.low %v1119, %v1051
      %v2012 = vunpack.c.l.s4 1966171168
      %v2013 = vunpack.c.0.s8 %v2012
      %v2014 = vlaneseq
      %v2015 = vshrl.u32 %v2014, 7
      %v2016 = vsub.s32 %v2013, %v2015
      %v2017 = vrot.slane %v2007, %v2016
      %v2019 = vunpack.c.l.s4 1966171168
      %v2020 = vunpack.c.0.s8 %v2019
      %v2021 = vlaneseq
      %v2022 = vshrl.u32 %v2021, 7
      %v2023 = vsub.s32 %v2020, %v2022
      %v2024 = vrot.slane %v2008, %v2023
      %v2026 = vunpack.c.l.s4 1966171168
      %v2027 = vunpack.c.0.s8 %v2026
      %v2028 = vlaneseq
      %v2029 = vshrl.u32 %v2028, 7
      %v2030 = vsub.s32 %v2027, %v2029
      %v2031 = vrot.slane %v2009, %v2030
      %v2033 = vunpack.c.l.s4 1966171168
      %v2034 = vunpack.c.0.s8 %v2033
      %v2035 = vlaneseq
      %v2036 = vshrl.u32 %v2035, 7
      %v2037 = vsub.s32 %v2034, %v2036
      %v2038 = vrot.slane %v2010, %v2037
      %v2039 = vcombine.low %v2017, %v2024
      %v2040 = vcombine.low %v2031, %v2038
      %v2042 = vunpack.c.l.s4 1966171168
      %v2043 = vunpack.c.0.s8 %v2042
      %v2044 = vlaneseq
      %v2045 = vshrl.u32 %v2044, 7
      %v2046 = vsub.s32 %v2043, %v2045
      %v2047 = vrot.slane %v2039, %v2046
      %v2049 = vunpack.c.l.s4 1966171168
      %v2050 = vunpack.c.0.s8 %v2049
      %v2051 = vlaneseq
      %v2052 = vshrl.u32 %v2051, 7
      %v2053 = vsub.s32 %v2050, %v2052
      %v2054 = vrot.slane %v2040, %v2053
      %v2055 = vcombine.low %v2047, %v2054
      %v2056 = vcombine.low %v1052, %v1120
      %v2057 = vcombine.low %v1074, %v1075
      %v2058 = vcombine.low %v1121, %v1097
      %v2059 = vcombine.low %v1098, %v1122
      %v2061 = vunpack.c.l.s4 1966171168
      %v2062 = vunpack.c.0.s8 %v2061
      %v2063 = vlaneseq
      %v2064 = vshrl.u32 %v2063, 7
      %v2065 = vsub.s32 %v2062, %v2064
      %v2066 = vrot.slane %v2056, %v2065
      %v2068 = vunpack.c.l.s4 1966171168
      %v2069 = vunpack.c.0.s8 %v2068
      %v2070 = vlaneseq
      %v2071 = vshrl.u32 %v2070, 7
      %v2072 = vsub.s32 %v2069, %v2071
      %v2073 = vrot.slane %v2057, %v2072
      %v2075 = vunpack.c.l.s4 1966171168
      %v2076 = vunpack.c.0.s8 %v2075
      %v2077 = vlaneseq
      %v2078 = vshrl.u32 %v2077, 7
      %v2079 = vsub.s32 %v2076, %v2078
      %v2080 = vrot.slane %v2058, %v2079
      %v2082 = vunpack.c.l.s4 1966171168
      %v2083 = vunpack.c.0.s8 %v2082
      %v2084 = vlaneseq
      %v2085 = vshrl.u32 %v2084, 7
      %v2086 = vsub.s32 %v2083, %v2085
      %v2087 = vrot.slane %v2059, %v2086
      %v2088 = vcombine.low %v2066, %v2073
      %v2089 = vcombine.low %v2080, %v2087
      %v2091 = vunpack.c.l.s4 1966171168
      %v2092 = vunpack.c.0.s8 %v2091
      %v2093 = vlaneseq
      %v2094 = vshrl.u32 %v2093, 7
      %v2095 = vsub.s32 %v2092, %v2094
      %v2096 = vrot.slane %v2088, %v2095
      %v2098 = vunpack.c.l.s4 1966171168
      %v2099 = vunpack.c.0.s8 %v2098
      %v2100 = vlaneseq
      %v2101 = vshrl.u32 %v2100, 7
      %v2102 = vsub.s32 %v2099, %v2101
      %v2103 = vrot.slane %v2089, %v2102
      %v2104 = vcombine.low %v2096, %v2103
      %v2124 = vunpack.c.l.b16 %v1942
      %v2125 = vunpack.c.h.b16 %v1942
      %v2126 = vunpack.c.l.b16 %v1943
      %v2127 = vunpack.c.h.b16 %v1943
      %v2128 = vunpack.c.l.b16 %v1944
      %v2129 = vunpack.c.h.b16 %v1944
      %v2130 = vunpack.c.l.b16 %v1945
      %v2131 = vunpack.c.h.b16 %v1945
      %v2132 = vunpack.c.l.b16 %v1946
      %v2133 = vunpack.c.h.b16 %v1946
      %v2134 = vunpack.c.l.b16 %v1947
      %v2135 = vunpack.c.h.b16 %v1947
      %v2136 = vunpack.c.l.b16 %v1948
      %v2137 = vunpack.c.h.b16 %v1948
      %v2138 = vunpack.c.l.b16 %v1949
      %v2139 = vunpack.c.h.b16 %v1949
      %v2140 = vunpack.c.l.b16 %v1950
      %v2141 = vunpack.c.h.b16 %v1950
      %v2142 = vunpack.c.l.b16 %v1951
      %v2143 = vunpack.c.h.b16 %v1951
      %v2144 = vunpack.c.l.b16 %v1952
      %v2145 = vunpack.c.h.b16 %v1952
      %v2146 = vunpack.c.l.b16 %v1953
      %v2147 = vunpack.c.h.b16 %v1953
      %v2148 = vunpack.c.l.b16 %v1954
      %v2149 = vunpack.c.h.b16 %v1954
      %v2150 = vunpack.c.l.b16 %v1955
      %v2151 = vunpack.c.h.b16 %v1955
      %v2152 = vunpack.c.l.b16 %v1956
      %v2153 = vunpack.c.h.b16 %v1956
      %v2154 = vunpack.c.l.b16 %v1957
      %v2155 = vunpack.c.h.b16 %v1957
      %v2156 = vpack.c.b16 %v2126, %v2124
      %v2157 = vpack.c.b16 %v2127, %v2125
      %v2158 = vpack.c.b16 %v2130, %v2128
      %v2159 = vpack.c.b16 %v2131, %v2129
      %v2160 = vpack.c.b16 %v2134, %v2132
      %v2161 = vpack.c.b16 %v2135, %v2133
      %v2162 = vpack.c.b16 %v2138, %v2136
      %v2163 = vpack.c.b16 %v2139, %v2137
      %v2164 = vpack.c.b16 %v2142, %v2140
      %v2165 = vpack.c.b16 %v2143, %v2141
      %v2166 = vpack.c.b16 %v2146, %v2144
      %v2167 = vpack.c.b16 %v2147, %v2145
      %v2168 = vpack.c.b16 %v2150, %v2148
      %v2169 = vpack.c.b16 %v2151, %v2149
      %v2170 = vpack.c.b16 %v2154, %v2152
      %v2171 = vpack.c.b16 %v2155, %v2153
      %2188 = vmatprep.subr.bf16.mxu0 %v2157
      %2189 = vmatpush1.bf16.msra.mxu0 %v2156
      %2190 = vmatprep.subr.bf16.mxu0 %v2159
      %2191 = vmatpush1.bf16.msra.mxu0 %v2158
      %2192 = vmatprep.subr.bf16.mxu0 %v2161
      %2193 = vmatpush1.bf16.msra.mxu0 %v2160
      %2194 = vmatprep.subr.bf16.mxu0 %v2163
      %2195 = vmatpush1.bf16.msra.mxu0 %v2162
      %2196 = vmatprep.subr.bf16.mxu0 %v2165
      %2197 = vmatpush1.bf16.msra.mxu0 %v2164
      %2198 = vmatprep.subr.bf16.mxu0 %v2167
      %2199 = vmatpush1.bf16.msra.mxu0 %v2166
      %2200 = vmatprep.subr.bf16.mxu0 %v2169
      %2201 = vmatpush1.bf16.msra.mxu0 %v2168
      %2202 = vmatprep.subr.bf16.mxu0 %v2171
      %2203 = vmatpush1.bf16.msra.mxu0 %v2170
      %2204 = vmatprep.subr.bf16.mxu0 0
      %2205 = vmatpush1.bf16.msra.mxu0 0
      %2206 = vmatprep.subr.bf16.mxu0 0
      %2207 = vmatpush1.bf16.msra.mxu0 0
      %2208 = vmatprep.subr.bf16.mxu0 0
      %2209 = vmatpush1.bf16.msra.mxu0 0
      %2210 = vmatprep.subr.bf16.mxu0 0
      %2211 = vmatpush1.bf16.msra.mxu0 0
      %2212 = vmatprep.subr.bf16.mxu0 0
      %2213 = vmatpush1.bf16.msra.mxu0 0
      %2214 = vmatprep.subr.bf16.mxu0 0
      %2215 = vmatpush1.bf16.msra.mxu0 0
      %2216 = vmatprep.subr.bf16.mxu0 0
      %2217 = vmatpush1.bf16.msra.mxu0 0
      %2218 = vmatprep.subr.bf16.mxu0 0
      %2219 = vmatpush1.bf16.msra.mxu0 0
      %2220 = vmatprep.mubr.bf16.mxu0 0
      %2221 = vmatmul.mubr.bf16.gmra.mrb[0].mxu0 %v2006
      %v2222 = vpop.f32.mrb[0].mxu0
      %v2223 = vadd.f32 0.0, %v2222
      %v2224 = vpop.f32.mrb[0].mxu0
      %v2225 = vadd.f32 0.0, %v2224
      %v2226 = vpop.f32.mrb[0].mxu0
      %v2227 = vadd.f32 0.0, %v2226
      %v2228 = vpop.f32.mrb[0].mxu0
      %v2229 = vadd.f32 0.0, %v2228
      %2230 = vmatprep.mubr.bf16.mxu0 0
      %2231 = vmatmul.mubr.bf16.gmra.mrb[0].mxu0 %v2055
      %v2232 = vpop.f32.mrb[0].mxu0
      %v2233 = vadd.f32 0.0, %v2232
      %v2234 = vpop.f32.mrb[0].mxu0
      %v2235 = vadd.f32 0.0, %v2234
      %v2236 = vpop.f32.mrb[0].mxu0
      %v2237 = vadd.f32 0.0, %v2236
      %v2238 = vpop.f32.mrb[0].mxu0
      %v2239 = vadd.f32 0.0, %v2238
      %2240 = vmatprep.mubr.bf16.mxu0 0
      %2241 = vmatmul.mubr.bf16.gmra.mrb[0].mxu0 %v2104
      %v2242 = vpop.f32.mrb[0].mxu0
      %v2243 = vadd.f32 0.0, %v2242
      %v2244 = vpop.f32.mrb[0].mxu0
      %v2245 = vadd.f32 0.0, %v2244
      %v2246 = vpop.f32.mrb[0].mxu0
      %v2247 = vadd.f32 0.0, %v2246
      %v2248 = vpop.f32.mrb[0].mxu0
      %v2249 = vadd.f32 0.0, %v2248
      %2250 = vdwg.mxu0
      %v2251 = vadd.f32 %v1913, %v2223
      %v2252 = vadd.f32 %v1915, %v2225
      %v2253 = vadd.f32 %v1917, %v2227
      %v2254 = vadd.f32 %v1919, %v2229
      %v2255 = vadd.f32 %v1923, %v2233
      %v2256 = vadd.f32 %v1925, %v2235
      %v2257 = vadd.f32 %v1927, %v2237
      %v2258 = vadd.f32 %v1929, %v2239
      %v2259 = vadd.f32 %v1933, %v2243
      %v2260 = vadd.f32 %v1935, %v2245
      %v2261 = vadd.f32 %v1937, %v2247
      %v2262 = vadd.f32 %v1939, %v2249
      %v2263 = vld [vmem:[%s4] sm:$0x3]
      %v2265 = vlaneseq
      %v2266 = vshrl.u32 %v2265, 7
      %v2267 = vsub.s32 0, %v2266
      %v2268 = vrot.slane %v2263, %v2267
      %v2269 = vlaneseq
      %v2270 = vshrl.u32 %v2269, 7
      %v2271 = vsub.s32 1, %v2270
      %v2272 = vrot.slane %v2263, %v2271
      %v2275 = vadd.f32 %v2251, %v2268
      %v2276 = vadd.f32 %v2252, %v2272
      %v2277 = vadd.f32 %v2253, %v2268
      %v2278 = vadd.f32 %v2254, %v2272
      %v2279 = vadd.f32 %v2255, %v2268
      %v2280 = vadd.f32 %v2256, %v2272
      %v2281 = vadd.f32 %v2257, %v2268
      %v2282 = vadd.f32 %v2258, %v2272
      %v2283 = vadd.f32 %v2259, %v2268
      %v2284 = vadd.f32 %v2260, %v2272
      %v2285 = vadd.f32 %v2261, %v2268
      %v2286 = vadd.f32 %v2262, %v2272
      %v2287 = vmax.f32 %v2275, 0.0
      %v2288 = vmax.f32 %v2276, 0.0
      %v2289 = vmax.f32 %v2277, 0.0
      %v2290 = vmax.f32 %v2278, 0.0
      %v2291 = vmax.f32 %v2279, 0.0
      %v2292 = vmax.f32 %v2280, 0.0
      %v2293 = vmax.f32 %v2281, 0.0
      %v2294 = vmax.f32 %v2282, 0.0
      %v2295 = vmax.f32 %v2283, 0.0
      %v2296 = vmax.f32 %v2284, 0.0
      %v2297 = vmax.f32 %v2285, 0.0
      %v2298 = vmax.f32 %v2286, 0.0
      %v2299 = vpack.c.bf16 %v2289, %v2287
      %v2300 = vpack.c.bf16 %v2290, %v2288
      %v2301 = vpack.c.bf16 %v2293, %v2291
      %v2302 = vpack.c.bf16 %v2294, %v2292
      %v2303 = vpack.c.bf16 %v2297, %v2295
      %v2304 = vpack.c.bf16 %v2298, %v2296
      %v2311 = vcombine.low %v2299, %v2300
      %v2312 = vcombine.high %v2299, %v2300
      %v2314 = vunpack.c.l.s4 1966171168
      %v2315 = vunpack.c.0.s8 %v2314
      %v2316 = vlaneseq
      %v2317 = vshrl.u32 %v2316, 7
      %v2318 = vsub.s32 %v2315, %v2317
      %v2319 = vrot.slane %v2311, %v2318
      %v2321 = vunpack.c.l.s4 1966171168
      %v2322 = vunpack.c.0.s8 %v2321
      %v2323 = vlaneseq
      %v2324 = vshrl.u32 %v2323, 7
      %v2325 = vsub.s32 %v2322, %v2324
      %v2326 = vrot.slane %v2312, %v2325
      %v2327 = vcombine.high %v2319, %v2319
      %v2328 = vcombine.high %v2326, %v2326
      %v2330 = vunpack.c.l.s4 1966171168
      %v2331 = vunpack.c.0.s8 %v2330
      %v2332 = vlaneseq
      %v2333 = vshrl.u32 %v2332, 7
      %v2334 = vsub.s32 %v2331, %v2333
      %v2335 = vrot.slane %v2319, %v2334
      %v2337 = vunpack.c.l.s4 1966171168
      %v2338 = vunpack.c.0.s8 %v2337
      %v2339 = vlaneseq
      %v2340 = vshrl.u32 %v2339, 7
      %v2341 = vsub.s32 %v2338, %v2340
      %v2342 = vrot.slane %v2326, %v2341
      %v2344 = vunpack.c.l.s4 1966171168
      %v2345 = vunpack.c.0.s8 %v2344
      %v2346 = vlaneseq
      %v2347 = vshrl.u32 %v2346, 7
      %v2348 = vsub.s32 %v2345, %v2347
      %v2349 = vrot.slane %v2327, %v2348
      %v2351 = vunpack.c.l.s4 1966171168
      %v2352 = vunpack.c.0.s8 %v2351
      %v2353 = vlaneseq
      %v2354 = vshrl.u32 %v2353, 7
      %v2355 = vsub.s32 %v2352, %v2354
      %v2356 = vrot.slane %v2328, %v2355
      %v2357 = vcombine.high %v2335, %v2335
      %v2358 = vcombine.high %v2342, %v2342
      %v2359 = vcombine.high %v2349, %v2349
      %v2360 = vcombine.high %v2356, %v2356
      %v2361 = vcombine.low %v2301, %v2302
      %v2362 = vcombine.high %v2301, %v2302
      %v2364 = vunpack.c.l.s4 1966171168
      %v2365 = vunpack.c.0.s8 %v2364
      %v2366 = vlaneseq
      %v2367 = vshrl.u32 %v2366, 7
      %v2368 = vsub.s32 %v2365, %v2367
      %v2369 = vrot.slane %v2361, %v2368
      %v2371 = vunpack.c.l.s4 1966171168
      %v2372 = vunpack.c.0.s8 %v2371
      %v2373 = vlaneseq
      %v2374 = vshrl.u32 %v2373, 7
      %v2375 = vsub.s32 %v2372, %v2374
      %v2376 = vrot.slane %v2362, %v2375
      %v2377 = vcombine.high %v2369, %v2369
      %v2378 = vcombine.high %v2376, %v2376
      %v2380 = vunpack.c.l.s4 1966171168
      %v2381 = vunpack.c.0.s8 %v2380
      %v2382 = vlaneseq
      %v2383 = vshrl.u32 %v2382, 7
      %v2384 = vsub.s32 %v2381, %v2383
      %v2385 = vrot.slane %v2369, %v2384
      %v2387 = vunpack.c.l.s4 1966171168
      %v2388 = vunpack.c.0.s8 %v2387
      %v2389 = vlaneseq
      %v2390 = vshrl.u32 %v2389, 7
      %v2391 = vsub.s32 %v2388, %v2390
      %v2392 = vrot.slane %v2376, %v2391
      %v2394 = vunpack.c.l.s4 1966171168
      %v2395 = vunpack.c.0.s8 %v2394
      %v2396 = vlaneseq
      %v2397 = vshrl.u32 %v2396, 7
      %v2398 = vsub.s32 %v2395, %v2397
      %v2399 = vrot.slane %v2377, %v2398
      %v2401 = vunpack.c.l.s4 1966171168
      %v2402 = vunpack.c.0.s8 %v2401
      %v2403 = vlaneseq
      %v2404 = vshrl.u32 %v2403, 7
      %v2405 = vsub.s32 %v2402, %v2404
      %v2406 = vrot.slane %v2378, %v2405
      %v2407 = vcombine.high %v2385, %v2385
      %v2408 = vcombine.high %v2392, %v2392
      %v2409 = vcombine.high %v2399, %v2399
      %v2410 = vcombine.high %v2406, %v2406
      %v2411 = vcombine.low %v2303, %v2304
      %v2412 = vcombine.high %v2303, %v2304
      %v2414 = vunpack.c.l.s4 1966171168
      %v2415 = vunpack.c.0.s8 %v2414
      %v2416 = vlaneseq
      %v2417 = vshrl.u32 %v2416, 7
      %v2418 = vsub.s32 %v2415, %v2417
      %v2419 = vrot.slane %v2411, %v2418
      %v2421 = vunpack.c.l.s4 1966171168
      %v2422 = vunpack.c.0.s8 %v2421
      %v2423 = vlaneseq
      %v2424 = vshrl.u32 %v2423, 7
      %v2425 = vsub.s32 %v2422, %v2424
      %v2426 = vrot.slane %v2412, %v2425
      %v2427 = vcombine.high %v2419, %v2419
      %v2428 = vcombine.high %v2426, %v2426
      %v2430 = vunpack.c.l.s4 1966171168
      %v2431 = vunpack.c.0.s8 %v2430
      %v2432 = vlaneseq
      %v2433 = vshrl.u32 %v2432, 7
      %v2434 = vsub.s32 %v2431, %v2433
      %v2435 = vrot.slane %v2419, %v2434
      %v2437 = vunpack.c.l.s4 1966171168
      %v2438 = vunpack.c.0.s8 %v2437
      %v2439 = vlaneseq
      %v2440 = vshrl.u32 %v2439, 7
      %v2441 = vsub.s32 %v2438, %v2440
      %v2442 = vrot.slane %v2426, %v2441
      %v2444 = vunpack.c.l.s4 1966171168
      %v2445 = vunpack.c.0.s8 %v2444
      %v2446 = vlaneseq
      %v2447 = vshrl.u32 %v2446, 7
      %v2448 = vsub.s32 %v2445, %v2447
      %v2449 = vrot.slane %v2427, %v2448
      %v2451 = vunpack.c.l.s4 1966171168
      %v2452 = vunpack.c.0.s8 %v2451
      %v2453 = vlaneseq
      %v2454 = vshrl.u32 %v2453, 7
      %v2455 = vsub.s32 %v2452, %v2454
      %v2456 = vrot.slane %v2428, %v2455
      %v2457 = vcombine.high %v2435, %v2435
      %v2458 = vcombine.high %v2442, %v2442
      %v2459 = vcombine.high %v2449, %v2449
      %v2460 = vcombine.high %v2456, %v2456
      %v2461 = vld [vmem:[%s5] sm:$0xff]
      %v2462 = vld [vmem:[%s5 + $0x8] sm:$0xff]
      %v2463 = vld [vmem:[%s5 + $0x10] sm:$0xff]
      %v2464 = vld [vmem:[%s5 + $0x18] sm:$0xff]
      %v2465 = vld [vmem:[%s5 + $0x20] sm:$0xff]
      %v2466 = vld [vmem:[%s5 + $0x28] sm:$0xff]
      %v2467 = vld [vmem:[%s5 + $0x30] sm:$0xff]
      %v2468 = vld [vmem:[%s5 + $0x38] sm:$0xff]
      %v2469 = vld [vmem:[%s5 + $0x40] sm:$0xff]
      %v2470 = vld [vmem:[%s5 + $0x48] sm:$0xff]
      %v2471 = vld [vmem:[%s5 + $0x50] sm:$0xff]
      %v2472 = vld [vmem:[%s5 + $0x58] sm:$0xff]
      %v2473 = vld [vmem:[%s5 + $0x60] sm:$0xff]
      %v2474 = vld [vmem:[%s5 + $0x68] sm:$0xff]
      %v2475 = vld [vmem:[%s5 + $0x70] sm:$0xff]
      %v2476 = vld [vmem:[%s5 + $0x78] sm:$0xff]
      %v2477 = vld [vmem:[%s5 + $0x80] sm:$0xff]
      %v2478 = vld [vmem:[%s5 + $0x88] sm:$0xff]
      %v2479 = vld [vmem:[%s5 + $0x90] sm:$0xff]
      %v2480 = vld [vmem:[%s5 + $0x98] sm:$0xff]
      %v2481 = vld [vmem:[%s5 + $0xa0] sm:$0xff]
      %v2482 = vld [vmem:[%s5 + $0xa8] sm:$0xff]
      %v2483 = vld [vmem:[%s5 + $0xb0] sm:$0xff]
      %v2484 = vld [vmem:[%s5 + $0xb8] sm:$0xff]
      %s2485 = scalar_lea.vmem %s5, 192
      %v2486 = vld [vmem:[%s2485] sm:$0xff]
      %v2487 = vld [vmem:[%s2485 + $0x8] sm:$0xff]
      %v2488 = vld [vmem:[%s2485 + $0x10] sm:$0xff]
      %v2489 = vld [vmem:[%s2485 + $0x18] sm:$0xff]
      %v2490 = vld [vmem:[%s2485 + $0x20] sm:$0xff]
      %v2491 = vld [vmem:[%s2485 + $0x28] sm:$0xff]
      %v2492 = vld [vmem:[%s2485 + $0x30] sm:$0xff]
      %v2493 = vld [vmem:[%s2485 + $0x38] sm:$0xff]
      %v2494 = vld [vmem:[%s2485 + $0x40] sm:$0xff]
      %v2495 = vld [vmem:[%s2485 + $0x48] sm:$0xff]
      %v2496 = vld [vmem:[%s2485 + $0x50] sm:$0xff]
      %v2497 = vld [vmem:[%s2485 + $0x58] sm:$0xff]
      %v2498 = vld [vmem:[%s2485 + $0x60] sm:$0xff]
      %v2499 = vld [vmem:[%s2485 + $0x68] sm:$0xff]
      %v2500 = vld [vmem:[%s2485 + $0x70] sm:$0xff]
      %v2501 = vld [vmem:[%s2485 + $0x78] sm:$0xff]
      %v2502 = vld [vmem:[%s2485 + $0x80] sm:$0xff]
      %v2503 = vld [vmem:[%s2485 + $0x88] sm:$0xff]
      %v2504 = vld [vmem:[%s2485 + $0x90] sm:$0xff]
      %v2505 = vld [vmem:[%s2485 + $0x98] sm:$0xff]
      %v2506 = vld [vmem:[%s2485 + $0xa0] sm:$0xff]
      %v2507 = vld [vmem:[%s2485 + $0xa8] sm:$0xff]
      %v2508 = vld [vmem:[%s2485 + $0xb0] sm:$0xff]
      %v2509 = vld [vmem:[%s2485 + $0xb8] sm:$0xff]
      %v2511 = vunpack.c.l.s4 1966171168
      %v2512 = vunpack.c.0.s8 %v2511
      %v2513 = vlaneseq
      %v2514 = vshrl.u32 %v2513, 7
      %v2515 = vsub.s32 %v2512, %v2514
      %v2516 = vrot.slane %v2335, %v2515
      %v2517 = vcombine.high %v2516, %v2516
      %v2519 = vunpack.c.l.s4 1966171168
      %v2520 = vunpack.c.0.s8 %v2519
      %v2521 = vlaneseq
      %v2522 = vshrl.u32 %v2521, 7
      %v2523 = vsub.s32 %v2520, %v2522
      %v2524 = vrot.slane %v2516, %v2523
      %v2526 = vunpack.c.l.s4 1966171168
      %v2527 = vunpack.c.0.s8 %v2526
      %v2528 = vlaneseq
      %v2529 = vshrl.u32 %v2528, 7
      %v2530 = vsub.s32 %v2527, %v2529
      %v2531 = vrot.slane %v2517, %v2530
      %v2533 = vunpack.c.l.s4 1966171168
      %v2534 = vunpack.c.0.s8 %v2533
      %v2535 = vlaneseq
      %v2536 = vshrl.u32 %v2535, 7
      %v2537 = vsub.s32 %v2534, %v2536
      %v2538 = vrot.slane %v2359, %v2537
      %v2539 = vcombine.high %v2538, %v2538
      %v2541 = vunpack.c.l.s4 1966171168
      %v2542 = vunpack.c.0.s8 %v2541
      %v2543 = vlaneseq
      %v2544 = vshrl.u32 %v2543, 7
      %v2545 = vsub.s32 %v2542, %v2544
      %v2546 = vrot.slane %v2538, %v2545
      %v2548 = vunpack.c.l.s4 1966171168
      %v2549 = vunpack.c.0.s8 %v2548
      %v2550 = vlaneseq
      %v2551 = vshrl.u32 %v2550, 7
      %v2552 = vsub.s32 %v2549, %v2551
      %v2553 = vrot.slane %v2539, %v2552
      %v2555 = vunpack.c.l.s4 1966171168
      %v2556 = vunpack.c.0.s8 %v2555
      %v2557 = vlaneseq
      %v2558 = vshrl.u32 %v2557, 7
      %v2559 = vsub.s32 %v2556, %v2558
      %v2560 = vrot.slane %v2358, %v2559
      %v2561 = vcombine.high %v2560, %v2560
      %v2563 = vunpack.c.l.s4 1966171168
      %v2564 = vunpack.c.0.s8 %v2563
      %v2565 = vlaneseq
      %v2566 = vshrl.u32 %v2565, 7
      %v2567 = vsub.s32 %v2564, %v2566
      %v2568 = vrot.slane %v2560, %v2567
      %v2570 = vunpack.c.l.s4 1966171168
      %v2571 = vunpack.c.0.s8 %v2570
      %v2572 = vlaneseq
      %v2573 = vshrl.u32 %v2572, 7
      %v2574 = vsub.s32 %v2571, %v2573
      %v2575 = vrot.slane %v2561, %v2574
      %v2577 = vunpack.c.l.s4 1966171168
      %v2578 = vunpack.c.0.s8 %v2577
      %v2579 = vlaneseq
      %v2580 = vshrl.u32 %v2579, 7
      %v2581 = vsub.s32 %v2578, %v2580
      %v2582 = vrot.slane %v2399, %v2581
      %v2583 = vcombine.high %v2582, %v2582
      %v2585 = vunpack.c.l.s4 1966171168
      %v2586 = vunpack.c.0.s8 %v2585
      %v2587 = vlaneseq
      %v2588 = vshrl.u32 %v2587, 7
      %v2589 = vsub.s32 %v2586, %v2588
      %v2590 = vrot.slane %v2582, %v2589
      %v2592 = vunpack.c.l.s4 1966171168
      %v2593 = vunpack.c.0.s8 %v2592
      %v2594 = vlaneseq
      %v2595 = vshrl.u32 %v2594, 7
      %v2596 = vsub.s32 %v2593, %v2595
      %v2597 = vrot.slane %v2583, %v2596
      %v2599 = vunpack.c.l.s4 1966171168
      %v2600 = vunpack.c.0.s8 %v2599
      %v2601 = vlaneseq
      %v2602 = vshrl.u32 %v2601, 7
      %v2603 = vsub.s32 %v2600, %v2602
      %v2604 = vrot.slane %v2392, %v2603
      %v2605 = vcombine.high %v2604, %v2604
      %v2607 = vunpack.c.l.s4 1966171168
      %v2608 = vunpack.c.0.s8 %v2607
      %v2609 = vlaneseq
      %v2610 = vshrl.u32 %v2609, 7
      %v2611 = vsub.s32 %v2608, %v2610
      %v2612 = vrot.slane %v2604, %v2611
      %v2614 = vunpack.c.l.s4 1966171168
      %v2615 = vunpack.c.0.s8 %v2614
      %v2616 = vlaneseq
      %v2617 = vshrl.u32 %v2616, 7
      %v2618 = vsub.s32 %v2615, %v2617
      %v2619 = vrot.slane %v2605, %v2618
      %v2621 = vunpack.c.l.s4 1966171168
      %v2622 = vunpack.c.0.s8 %v2621
      %v2623 = vlaneseq
      %v2624 = vshrl.u32 %v2623, 7
      %v2625 = vsub.s32 %v2622, %v2624
      %v2626 = vrot.slane %v2410, %v2625
      %v2627 = vcombine.high %v2626, %v2626
      %v2629 = vunpack.c.l.s4 1966171168
      %v2630 = vunpack.c.0.s8 %v2629
      %v2631 = vlaneseq
      %v2632 = vshrl.u32 %v2631, 7
      %v2633 = vsub.s32 %v2630, %v2632
      %v2634 = vrot.slane %v2626, %v2633
      %v2636 = vunpack.c.l.s4 1966171168
      %v2637 = vunpack.c.0.s8 %v2636
      %v2638 = vlaneseq
      %v2639 = vshrl.u32 %v2638, 7
      %v2640 = vsub.s32 %v2637, %v2639
      %v2641 = vrot.slane %v2627, %v2640
      %v2643 = vunpack.c.l.s4 1966171168
      %v2644 = vunpack.c.0.s8 %v2643
      %v2645 = vlaneseq
      %v2646 = vshrl.u32 %v2645, 7
      %v2647 = vsub.s32 %v2644, %v2646
      %v2648 = vrot.slane %v2457, %v2647
      %v2649 = vcombine.high %v2648, %v2648
      %v2651 = vunpack.c.l.s4 1966171168
      %v2652 = vunpack.c.0.s8 %v2651
      %v2653 = vlaneseq
      %v2654 = vshrl.u32 %v2653, 7
      %v2655 = vsub.s32 %v2652, %v2654
      %v2656 = vrot.slane %v2648, %v2655
      %v2658 = vunpack.c.l.s4 1966171168
      %v2659 = vunpack.c.0.s8 %v2658
      %v2660 = vlaneseq
      %v2661 = vshrl.u32 %v2660, 7
      %v2662 = vsub.s32 %v2659, %v2661
      %v2663 = vrot.slane %v2649, %v2662
      %v2665 = vunpack.c.l.s4 1966171168
      %v2666 = vunpack.c.0.s8 %v2665
      %v2667 = vlaneseq
      %v2668 = vshrl.u32 %v2667, 7
      %v2669 = vsub.s32 %v2666, %v2668
      %v2670 = vrot.slane %v2456, %v2669
      %v2671 = vcombine.high %v2670, %v2670
      %v2673 = vunpack.c.l.s4 1966171168
      %v2674 = vunpack.c.0.s8 %v2673
      %v2675 = vlaneseq
      %v2676 = vshrl.u32 %v2675, 7
      %v2677 = vsub.s32 %v2674, %v2676
      %v2678 = vrot.slane %v2670, %v2677
      %v2680 = vunpack.c.l.s4 1966171168
      %v2681 = vunpack.c.0.s8 %v2680
      %v2682 = vlaneseq
      %v2683 = vshrl.u32 %v2682, 7
      %v2684 = vsub.s32 %v2681, %v2683
      %v2685 = vrot.slane %v2671, %v2684
      %v2686 = vunpack.c.l.b16 %v2524
      %v2687 = vunpack.c.l.b16 %v2531
      %v2688 = vunpack.c.l.b16 %v2546
      %v2689 = vunpack.c.l.b16 %v2553
      %v2690 = vunpack.c.l.b16 %v2568
      %v2691 = vunpack.c.l.b16 %v2575
      %v2692 = vunpack.c.l.b16 %v2590
      %v2693 = vunpack.c.l.b16 %v2597
      %v2694 = vunpack.c.l.b16 %v2612
      %v2695 = vunpack.c.l.b16 %v2619
      %v2696 = vunpack.c.l.b16 %v2634
      %v2697 = vunpack.c.l.b16 %v2641
      %v2698 = vunpack.c.l.b16 %v2656
      %v2699 = vunpack.c.l.b16 %v2663
      %v2700 = vunpack.c.l.b16 %v2678
      %v2701 = vunpack.c.l.b16 %v2685
      %v2702 = vrot.slane %v2686, 1
      %vm2703 = vcmask 1041409
      %v2704 = vsel %vm2703, %v2688, %v2702
      %v2705 = vrot.slane %v2690, 7
      %vm2706 = vcmask 1042434
      %v2707 = vsel %vm2706, %v2705, %v2704
      %v2708 = vrot.slane %v2692, 6
      %vm2709 = vcmask 1043459
      %v2710 = vsel %vm2709, %v2708, %v2707
      %v2711 = vrot.slane %v2694, 5
      %vm2712 = vcmask 1044484
      %v2713 = vsel %vm2712, %v2711, %v2710
      %v2714 = vrot.slane %v2696, 4
      %vm2715 = vcmask 1045509
      %v2716 = vsel %vm2715, %v2714, %v2713
      %v2717 = vrot.slane %v2698, 3
      %vm2718 = vcmask 1046534
      %v2719 = vsel %vm2718, %v2717, %v2716
      %v2720 = vrot.slane %v2700, 2
      %vm2721 = vcmask 1047559
      %v2722 = vsel %vm2721, %v2720, %v2719
      %v2723 = vrot.slane %v2687, 1
      %v2724 = vsel %vm2703, %v2689, %v2723
      %v2725 = vrot.slane %v2691, 7
      %v2726 = vsel %vm2706, %v2725, %v2724
      %v2727 = vrot.slane %v2693, 6
      %v2728 = vsel %vm2709, %v2727, %v2726
      %v2729 = vrot.slane %v2695, 5
      %v2730 = vsel %vm2712, %v2729, %v2728
      %v2731 = vrot.slane %v2697, 4
      %v2732 = vsel %vm2715, %v2731, %v2730
      %v2733 = vrot.slane %v2699, 3
      %v2734 = vsel %vm2718, %v2733, %v2732
      %v2735 = vrot.slane %v2701, 2
      %v2736 = vsel %vm2721, %v2735, %v2734
      %v2737 = vpack.c.b16 %v2722, %v2722
      %v2738 = vpack.c.b16 %v2736, %v2736
      %v2764 = vunpack.c.l.b16 %v2486
      %v2765 = vunpack.c.h.b16 %v2486
      %v2766 = vunpack.c.l.b16 %v2487
      %v2767 = vunpack.c.h.b16 %v2487
      %v2768 = vunpack.c.l.b16 %v2488
      %v2769 = vunpack.c.h.b16 %v2488
      %v2770 = vunpack.c.l.b16 %v2489
      %v2771 = vunpack.c.h.b16 %v2489
      %v2772 = vunpack.c.l.b16 %v2490
      %v2773 = vunpack.c.h.b16 %v2490
      %v2774 = vunpack.c.l.b16 %v2491
      %v2775 = vunpack.c.h.b16 %v2491
      %v2776 = vunpack.c.l.b16 %v2492
      %v2777 = vunpack.c.h.b16 %v2492
      %v2778 = vunpack.c.l.b16 %v2493
      %v2779 = vunpack.c.h.b16 %v2493
      %v2780 = vunpack.c.l.b16 %v2494
      %v2781 = vunpack.c.h.b16 %v2494
      %v2782 = vunpack.c.l.b16 %v2495
      %v2783 = vunpack.c.h.b16 %v2495
      %v2784 = vunpack.c.l.b16 %v2496
      %v2785 = vunpack.c.h.b16 %v2496
      %v2786 = vunpack.c.l.b16 %v2497
      %v2787 = vunpack.c.h.b16 %v2497
      %v2788 = vunpack.c.l.b16 %v2498
      %v2789 = vunpack.c.h.b16 %v2498
      %v2790 = vunpack.c.l.b16 %v2499
      %v2791 = vunpack.c.h.b16 %v2499
      %v2792 = vunpack.c.l.b16 %v2500
      %v2793 = vunpack.c.h.b16 %v2500
      %v2794 = vunpack.c.l.b16 %v2501
      %v2795 = vunpack.c.h.b16 %v2501
      %v2796 = vunpack.c.l.b16 %v2502
      %v2797 = vunpack.c.h.b16 %v2502
      %v2798 = vunpack.c.l.b16 %v2503
      %v2799 = vunpack.c.h.b16 %v2503
      %v2800 = vunpack.c.l.b16 %v2504
      %v2801 = vunpack.c.h.b16 %v2504
      %v2802 = vunpack.c.l.b16 %v2505
      %v2803 = vunpack.c.h.b16 %v2505
      %v2804 = vunpack.c.l.b16 %v2506
      %v2805 = vunpack.c.h.b16 %v2506
      %v2806 = vunpack.c.l.b16 %v2507
      %v2807 = vunpack.c.h.b16 %v2507
      %v2808 = vunpack.c.l.b16 %v2508
      %v2809 = vunpack.c.h.b16 %v2508
      %v2810 = vunpack.c.l.b16 %v2509
      %v2811 = vunpack.c.h.b16 %v2509
      %v2812 = vpack.c.b16 %v2766, %v2764
      %v2813 = vpack.c.b16 %v2767, %v2765
      %v2814 = vpack.c.b16 %v2770, %v2768
      %v2815 = vpack.c.b16 %v2771, %v2769
      %v2816 = vpack.c.b16 %v2774, %v2772
      %v2817 = vpack.c.b16 %v2775, %v2773
      %v2818 = vpack.c.b16 %v2778, %v2776
      %v2819 = vpack.c.b16 %v2779, %v2777
      %v2820 = vpack.c.b16 %v2782, %v2780
      %v2821 = vpack.c.b16 %v2783, %v2781
      %v2822 = vpack.c.b16 %v2786, %v2784
      %v2823 = vpack.c.b16 %v2787, %v2785
      %v2824 = vpack.c.b16 %v2790, %v2788
      %v2825 = vpack.c.b16 %v2791, %v2789
      %v2826 = vpack.c.b16 %v2794, %v2792
      %v2827 = vpack.c.b16 %v2795, %v2793
      %v2828 = vpack.c.b16 %v2798, %v2796
      %v2829 = vpack.c.b16 %v2799, %v2797
      %v2830 = vpack.c.b16 %v2802, %v2800
      %v2831 = vpack.c.b16 %v2803, %v2801
      %v2832 = vpack.c.b16 %v2806, %v2804
      %v2833 = vpack.c.b16 %v2807, %v2805
      %v2834 = vpack.c.b16 %v2810, %v2808
      %v2835 = vpack.c.b16 %v2811, %v2809
      %vm2860 = vcmask 523264
      %v2862 = vsel %vm2860, %v2738, 0
      %2864 = vmatprep.subr.bf16.mxu0 %v2813
      %2865 = vmatpush1.bf16.msra.mxu0 %v2812
      %2866 = vmatprep.subr.bf16.mxu0 %v2815
      %2867 = vmatpush1.bf16.msra.mxu0 %v2814
      %2868 = vmatprep.subr.bf16.mxu0 %v2817
      %2869 = vmatpush1.bf16.msra.mxu0 %v2816
      %2870 = vmatprep.subr.bf16.mxu0 %v2819
      %2871 = vmatpush1.bf16.msra.mxu0 %v2818
      %2872 = vmatprep.subr.bf16.mxu0 %v2821
      %2873 = vmatpush1.bf16.msra.mxu0 %v2820
      %2874 = vmatprep.subr.bf16.mxu0 %v2823
      %2875 = vmatpush1.bf16.msra.mxu0 %v2822
      %2876 = vmatprep.subr.bf16.mxu0 %v2825
      %2877 = vmatpush1.bf16.msra.mxu0 %v2824
      %2878 = vmatprep.subr.bf16.mxu0 %v2827
      %2879 = vmatpush1.bf16.msra.mxu0 %v2826
      %2880 = vmatprep.subr.bf16.mxu0 %v2829
      %2881 = vmatpush1.bf16.msra.mxu0 %v2828
      %2882 = vmatprep.subr.bf16.mxu0 %v2831
      %2883 = vmatpush1.bf16.msra.mxu0 %v2830
      %2884 = vmatprep.subr.bf16.mxu0 %v2833
      %2885 = vmatpush1.bf16.msra.mxu0 %v2832
      %2886 = vmatprep.subr.bf16.mxu0 %v2835
      %2887 = vmatpush1.bf16.msra.mxu0 %v2834
      %2888 = vmatprep.subr.bf16.mxu0 0
      %2889 = vmatpush1.bf16.msra.mxu0 0
      %2890 = vmatprep.subr.bf16.mxu0 0
      %2891 = vmatpush1.bf16.msra.mxu0 0
      %2892 = vmatprep.subr.bf16.mxu0 0
      %2893 = vmatpush1.bf16.msra.mxu0 0
      %2894 = vmatprep.subr.bf16.mxu0 0
      %2895 = vmatpush1.bf16.msra.mxu0 0
      %2896 = vmatprep.mubr.bf16.mxu0 %v2862
      %2897 = vmatmul.mubr.bf16.gmra.mrb[0].mxu0 %v2737
      %v2898 = vpop.f32.mrb[0].mxu0
      %v2899 = vadd.f32 0.0, %v2898
      %v2900 = vpop.f32.mrb[0].mxu0
      %v2901 = vadd.f32 0.0, %v2900
      %v2902 = vpop.f32.mrb[0].mxu0
      %v2903 = vpop.f32.mrb[0].mxu0
      %2904 = vdwg.mxu0
      %v2905 = vrot.slane %v2688, 7
      %v2906 = vsel %vm2703, %v2905, %v2686
      %v2907 = vrot.slane %v2690, 6
      %v2908 = vsel %vm2706, %v2907, %v2906
      %v2909 = vrot.slane %v2692, 5
      %v2910 = vsel %vm2709, %v2909, %v2908
      %v2911 = vrot.slane %v2694, 4
      %v2912 = vsel %vm2712, %v2911, %v2910
      %v2913 = vrot.slane %v2696, 3
      %v2914 = vsel %vm2715, %v2913, %v2912
      %v2915 = vrot.slane %v2698, 2
      %v2916 = vsel %vm2718, %v2915, %v2914
      %v2917 = vrot.slane %v2700, 1
      %v2918 = vsel %vm2721, %v2917, %v2916
      %v2919 = vrot.slane %v2689, 7
      %v2920 = vsel %vm2703, %v2919, %v2687
      %v2921 = vrot.slane %v2691, 6
      %v2922 = vsel %vm2706, %v2921, %v2920
      %v2923 = vrot.slane %v2693, 5
      %v2924 = vsel %vm2709, %v2923, %v2922
      %v2925 = vrot.slane %v2695, 4
      %v2926 = vsel %vm2712, %v2925, %v2924
      %v2927 = vrot.slane %v2697, 3
      %v2928 = vsel %vm2715, %v2927, %v2926
      %v2929 = vrot.slane %v2699, 2
      %v2930 = vsel %vm2718, %v2929, %v2928
      %v2931 = vrot.slane %v2701, 1
      %v2932 = vsel %vm2721, %v2931, %v2930
      %v2933 = vpack.c.b16 %v2918, %v2918
      %v2934 = vpack.c.b16 %v2932, %v2932
      %v2960 = vunpack.c.l.b16 %v2461
      %v2961 = vunpack.c.h.b16 %v2461
      %v2962 = vunpack.c.l.b16 %v2462
      %v2963 = vunpack.c.h.b16 %v2462
      %v2964 = vunpack.c.l.b16 %v2463
      %v2965 = vunpack.c.h.b16 %v2463
      %v2966 = vunpack.c.l.b16 %v2464
      %v2967 = vunpack.c.h.b16 %v2464
      %v2968 = vunpack.c.l.b16 %v2465
      %v2969 = vunpack.c.h.b16 %v2465
      %v2970 = vunpack.c.l.b16 %v2466
      %v2971 = vunpack.c.h.b16 %v2466
      %v2972 = vunpack.c.l.b16 %v2467
      %v2973 = vunpack.c.h.b16 %v2467
      %v2974 = vunpack.c.l.b16 %v2468
      %v2975 = vunpack.c.h.b16 %v2468
      %v2976 = vunpack.c.l.b16 %v2469
      %v2977 = vunpack.c.h.b16 %v2469
      %v2978 = vunpack.c.l.b16 %v2470
      %v2979 = vunpack.c.h.b16 %v2470
      %v2980 = vunpack.c.l.b16 %v2471
      %v2981 = vunpack.c.h.b16 %v2471
      %v2982 = vunpack.c.l.b16 %v2472
      %v2983 = vunpack.c.h.b16 %v2472
      %v2984 = vunpack.c.l.b16 %v2473
      %v2985 = vunpack.c.h.b16 %v2473
      %v2986 = vunpack.c.l.b16 %v2474
      %v2987 = vunpack.c.h.b16 %v2474
      %v2988 = vunpack.c.l.b16 %v2475
      %v2989 = vunpack.c.h.b16 %v2475
      %v2990 = vunpack.c.l.b16 %v2476
      %v2991 = vunpack.c.h.b16 %v2476
      %v2992 = vunpack.c.l.b16 %v2477
      %v2993 = vunpack.c.h.b16 %v2477
      %v2994 = vunpack.c.l.b16 %v2478
      %v2995 = vunpack.c.h.b16 %v2478
      %v2996 = vunpack.c.l.b16 %v2479
      %v2997 = vunpack.c.h.b16 %v2479
      %v2998 = vunpack.c.l.b16 %v2480
      %v2999 = vunpack.c.h.b16 %v2480
      %v3000 = vunpack.c.l.b16 %v2481
      %v3001 = vunpack.c.h.b16 %v2481
      %v3002 = vunpack.c.l.b16 %v2482
      %v3003 = vunpack.c.h.b16 %v2482
      %v3004 = vunpack.c.l.b16 %v2483
      %v3005 = vunpack.c.h.b16 %v2483
      %v3006 = vunpack.c.l.b16 %v2484
      %v3007 = vunpack.c.h.b16 %v2484
      %v3008 = vpack.c.b16 %v2962, %v2960
      %v3009 = vpack.c.b16 %v2963, %v2961
      %v3010 = vpack.c.b16 %v2966, %v2964
      %v3011 = vpack.c.b16 %v2967, %v2965
      %v3012 = vpack.c.b16 %v2970, %v2968
      %v3013 = vpack.c.b16 %v2971, %v2969
      %v3014 = vpack.c.b16 %v2974, %v2972
      %v3015 = vpack.c.b16 %v2975, %v2973
      %v3016 = vpack.c.b16 %v2978, %v2976
      %v3017 = vpack.c.b16 %v2979, %v2977
      %v3018 = vpack.c.b16 %v2982, %v2980
      %v3019 = vpack.c.b16 %v2983, %v2981
      %v3020 = vpack.c.b16 %v2986, %v2984
      %v3021 = vpack.c.b16 %v2987, %v2985
      %v3022 = vpack.c.b16 %v2990, %v2988
      %v3023 = vpack.c.b16 %v2991, %v2989
      %v3024 = vpack.c.b16 %v2994, %v2992
      %v3025 = vpack.c.b16 %v2995, %v2993
      %v3026 = vpack.c.b16 %v2998, %v2996
      %v3027 = vpack.c.b16 %v2999, %v2997
      %v3028 = vpack.c.b16 %v3002, %v3000
      %v3029 = vpack.c.b16 %v3003, %v3001
      %v3030 = vpack.c.b16 %v3006, %v3004
      %v3031 = vpack.c.b16 %v3007, %v3005
      %v3057 = vsel %vm2860, %v2934, 0
      %3059 = vmatprep.subr.bf16.mxu0 %v3009
      %3060 = vmatpush1.bf16.msra.mxu0 %v3008
      %3061 = vmatprep.subr.bf16.mxu0 %v3011
      %3062 = vmatpush1.bf16.msra.mxu0 %v3010
      %3063 = vmatprep.subr.bf16.mxu0 %v3013
      %3064 = vmatpush1.bf16.msra.mxu0 %v3012
      %3065 = vmatprep.subr.bf16.mxu0 %v3015
      %3066 = vmatpush1.bf16.msra.mxu0 %v3014
      %3067 = vmatprep.subr.bf16.mxu0 %v3017
      %3068 = vmatpush1.bf16.msra.mxu0 %v3016
      %3069 = vmatprep.subr.bf16.mxu0 %v3019
      %3070 = vmatpush1.bf16.msra.mxu0 %v3018
      %3071 = vmatprep.subr.bf16.mxu0 %v3021
      %3072 = vmatpush1.bf16.msra.mxu0 %v3020
      %3073 = vmatprep.subr.bf16.mxu0 %v3023
      %3074 = vmatpush1.bf16.msra.mxu0 %v3022
      %3075 = vmatprep.subr.bf16.mxu0 %v3025
      %3076 = vmatpush1.bf16.msra.mxu0 %v3024
      %3077 = vmatprep.subr.bf16.mxu0 %v3027
      %3078 = vmatpush1.bf16.msra.mxu0 %v3026
      %3079 = vmatprep.subr.bf16.mxu0 %v3029
      %3080 = vmatpush1.bf16.msra.mxu0 %v3028
      %3081 = vmatprep.subr.bf16.mxu0 %v3031
      %3082 = vmatpush1.bf16.msra.mxu0 %v3030
      %3083 = vmatprep.subr.bf16.mxu0 0
      %3084 = vmatpush1.bf16.msra.mxu0 0
      %3085 = vmatprep.subr.bf16.mxu0 0
      %3086 = vmatpush1.bf16.msra.mxu0 0
      %3087 = vmatprep.subr.bf16.mxu0 0
      %3088 = vmatpush1.bf16.msra.mxu0 0
      %3089 = vmatprep.subr.bf16.mxu0 0
      %3090 = vmatpush1.bf16.msra.mxu0 0
      %3091 = vmatprep.mubr.bf16.mxu0 %v3057
      %3092 = vmatmul.mubr.bf16.gmra.mrb[0].mxu0 %v2933
      %v3093 = vpop.f32.mrb[0].mxu0
      %v3094 = vadd.f32 %v2899, %v3093
      %v3095 = vpop.f32.mrb[0].mxu0
      %v3096 = vadd.f32 %v2901, %v3095
      %v3097 = vpop.f32.mrb[0].mxu0
      %v3098 = vpop.f32.mrb[0].mxu0
      %3099 = vdwg.mxu0
      %s3100 = scalar_lea.vmem %s5, 384
      %v3101 = vld [vmem:[%s3100] sm:$0xff]
      %v3102 = vld [vmem:[%s3100 + $0x8] sm:$0xff]
      %v3103 = vld [vmem:[%s3100 + $0x10] sm:$0xff]
      %v3104 = vld [vmem:[%s3100 + $0x18] sm:$0xff]
      %v3105 = vld [vmem:[%s3100 + $0x20] sm:$0xff]
      %v3106 = vld [vmem:[%s3100 + $0x28] sm:$0xff]
      %v3107 = vld [vmem:[%s3100 + $0x30] sm:$0xff]
      %v3108 = vld [vmem:[%s3100 + $0x38] sm:$0xff]
      %v3109 = vld [vmem:[%s3100 + $0x40] sm:$0xff]
      %v3110 = vld [vmem:[%s3100 + $0x48] sm:$0xff]
      %v3111 = vld [vmem:[%s3100 + $0x50] sm:$0xff]
      %v3112 = vld [vmem:[%s3100 + $0x58] sm:$0xff]
      %v3113 = vld [vmem:[%s3100 + $0x60] sm:$0xff]
      %v3114 = vld [vmem:[%s3100 + $0x68] sm:$0xff]
      %v3115 = vld [vmem:[%s3100 + $0x70] sm:$0xff]
      %v3116 = vld [vmem:[%s3100 + $0x78] sm:$0xff]
      %v3117 = vld [vmem:[%s3100 + $0x80] sm:$0xff]
      %v3118 = vld [vmem:[%s3100 + $0x88] sm:$0xff]
      %v3119 = vld [vmem:[%s3100 + $0x90] sm:$0xff]
      %v3120 = vld [vmem:[%s3100 + $0x98] sm:$0xff]
      %v3121 = vld [vmem:[%s3100 + $0xa0] sm:$0xff]
      %v3122 = vld [vmem:[%s3100 + $0xa8] sm:$0xff]
      %v3123 = vld [vmem:[%s3100 + $0xb0] sm:$0xff]
      %v3124 = vld [vmem:[%s3100 + $0xb8] sm:$0xff]
      %v3126 = vunpack.c.l.s4 1966171168
      %v3127 = vunpack.c.0.s8 %v3126
      %v3128 = vlaneseq
      %v3129 = vshrl.u32 %v3128, 7
      %v3130 = vsub.s32 %v3127, %v3129
      %v3131 = vrot.slane %v2349, %v3130
      %v3132 = vcombine.high %v3131, %v3131
      %v3134 = vunpack.c.l.s4 1966171168
      %v3135 = vunpack.c.0.s8 %v3134
      %v3136 = vlaneseq
      %v3137 = vshrl.u32 %v3136, 7
      %v3138 = vsub.s32 %v3135, %v3137
      %v3139 = vrot.slane %v3131, %v3138
      %v3141 = vunpack.c.l.s4 1966171168
      %v3142 = vunpack.c.0.s8 %v3141
      %v3143 = vlaneseq
      %v3144 = vshrl.u32 %v3143, 7
      %v3145 = vsub.s32 %v3142, %v3144
      %v3146 = vrot.slane %v3132, %v3145
      %v3148 = vunpack.c.l.s4 1966171168
      %v3149 = vunpack.c.0.s8 %v3148
      %v3150 = vlaneseq
      %v3151 = vshrl.u32 %v3150, 7
      %v3152 = vsub.s32 %v3149, %v3151
      %v3153 = vrot.slane %v2342, %v3152
      %v3154 = vcombine.high %v3153, %v3153
      %v3156 = vunpack.c.l.s4 1966171168
      %v3157 = vunpack.c.0.s8 %v3156
      %v3158 = vlaneseq
      %v3159 = vshrl.u32 %v3158, 7
      %v3160 = vsub.s32 %v3157, %v3159
      %v3161 = vrot.slane %v3153, %v3160
      %v3163 = vunpack.c.l.s4 1966171168
      %v3164 = vunpack.c.0.s8 %v3163
      %v3165 = vlaneseq
      %v3166 = vshrl.u32 %v3165, 7
      %v3167 = vsub.s32 %v3164, %v3166
      %v3168 = vrot.slane %v3154, %v3167
      %v3170 = vunpack.c.l.s4 1966171168
      %v3171 = vunpack.c.0.s8 %v3170
      %v3172 = vlaneseq
      %v3173 = vshrl.u32 %v3172, 7
      %v3174 = vsub.s32 %v3171, %v3173
      %v3175 = vrot.slane %v2360, %v3174
      %v3176 = vcombine.high %v3175, %v3175
      %v3178 = vunpack.c.l.s4 1966171168
      %v3179 = vunpack.c.0.s8 %v3178
      %v3180 = vlaneseq
      %v3181 = vshrl.u32 %v3180, 7
      %v3182 = vsub.s32 %v3179, %v3181
      %v3183 = vrot.slane %v3175, %v3182
      %v3185 = vunpack.c.l.s4 1966171168
      %v3186 = vunpack.c.0.s8 %v3185
      %v3187 = vlaneseq
      %v3188 = vshrl.u32 %v3187, 7
      %v3189 = vsub.s32 %v3186, %v3188
      %v3190 = vrot.slane %v3176, %v3189
      %v3192 = vunpack.c.l.s4 1966171168
      %v3193 = vunpack.c.0.s8 %v3192
      %v3194 = vlaneseq
      %v3195 = vshrl.u32 %v3194, 7
      %v3196 = vsub.s32 %v3193, %v3195
      %v3197 = vrot.slane %v2407, %v3196
      %v3198 = vcombine.high %v3197, %v3197
      %v3200 = vunpack.c.l.s4 1966171168
      %v3201 = vunpack.c.0.s8 %v3200
      %v3202 = vlaneseq
      %v3203 = vshrl.u32 %v3202, 7
      %v3204 = vsub.s32 %v3201, %v3203
      %v3205 = vrot.slane %v3197, %v3204
      %v3207 = vunpack.c.l.s4 1966171168
      %v3208 = vunpack.c.0.s8 %v3207
      %v3209 = vlaneseq
      %v3210 = vshrl.u32 %v3209, 7
      %v3211 = vsub.s32 %v3208, %v3210
      %v3212 = vrot.slane %v3198, %v3211
      %v3214 = vunpack.c.l.s4 1966171168
      %v3215 = vunpack.c.0.s8 %v3214
      %v3216 = vlaneseq
      %v3217 = vshrl.u32 %v3216, 7
      %v3218 = vsub.s32 %v3215, %v3217
      %v3219 = vrot.slane %v2406, %v3218
      %v3220 = vcombine.high %v3219, %v3219
      %v3222 = vunpack.c.l.s4 1966171168
      %v3223 = vunpack.c.0.s8 %v3222
      %v3224 = vlaneseq
      %v3225 = vshrl.u32 %v3224, 7
      %v3226 = vsub.s32 %v3223, %v3225
      %v3227 = vrot.slane %v3219, %v3226
      %v3229 = vunpack.c.l.s4 1966171168
      %v3230 = vunpack.c.0.s8 %v3229
      %v3231 = vlaneseq
      %v3232 = vshrl.u32 %v3231, 7
      %v3233 = vsub.s32 %v3230, %v3232
      %v3234 = vrot.slane %v3220, %v3233
      %v3236 = vunpack.c.l.s4 1966171168
      %v3237 = vunpack.c.0.s8 %v3236
      %v3238 = vlaneseq
      %v3239 = vshrl.u32 %v3238, 7
      %v3240 = vsub.s32 %v3237, %v3239
      %v3241 = vrot.slane %v2435, %v3240
      %v3242 = vcombine.high %v3241, %v3241
      %v3244 = vunpack.c.l.s4 1966171168
      %v3245 = vunpack.c.0.s8 %v3244
      %v3246 = vlaneseq
      %v3247 = vshrl.u32 %v3246, 7
      %v3248 = vsub.s32 %v3245, %v3247
      %v3249 = vrot.slane %v3241, %v3248
      %v3251 = vunpack.c.l.s4 1966171168
      %v3252 = vunpack.c.0.s8 %v3251
      %v3253 = vlaneseq
      %v3254 = vshrl.u32 %v3253, 7
      %v3255 = vsub.s32 %v3252, %v3254
      %v3256 = vrot.slane %v3242, %v3255
      %v3258 = vunpack.c.l.s4 1966171168
      %v3259 = vunpack.c.0.s8 %v3258
      %v3260 = vlaneseq
      %v3261 = vshrl.u32 %v3260, 7
      %v3262 = vsub.s32 %v3259, %v3261
      %v3263 = vrot.slane %v2459, %v3262
      %v3264 = vcombine.high %v3263, %v3263
      %v3266 = vunpack.c.l.s4 1966171168
      %v3267 = vunpack.c.0.s8 %v3266
      %v3268 = vlaneseq
      %v3269 = vshrl.u32 %v3268, 7
      %v3270 = vsub.s32 %v3267, %v3269
      %v3271 = vrot.slane %v3263, %v3270
      %v3273 = vunpack.c.l.s4 1966171168
      %v3274 = vunpack.c.0.s8 %v3273
      %v3275 = vlaneseq
      %v3276 = vshrl.u32 %v3275, 7
      %v3277 = vsub.s32 %v3274, %v3276
      %v3278 = vrot.slane %v3264, %v3277
      %v3280 = vunpack.c.l.s4 1966171168
      %v3281 = vunpack.c.0.s8 %v3280
      %v3282 = vlaneseq
      %v3283 = vshrl.u32 %v3282, 7
      %v3284 = vsub.s32 %v3281, %v3283
      %v3285 = vrot.slane %v2458, %v3284
      %v3286 = vcombine.high %v3285, %v3285
      %v3288 = vunpack.c.l.s4 1966171168
      %v3289 = vunpack.c.0.s8 %v3288
      %v3290 = vlaneseq
      %v3291 = vshrl.u32 %v3290, 7
      %v3292 = vsub.s32 %v3289, %v3291
      %v3293 = vrot.slane %v3285, %v3292
      %v3295 = vunpack.c.l.s4 1966171168
      %v3296 = vunpack.c.0.s8 %v3295
      %v3297 = vlaneseq
      %v3298 = vshrl.u32 %v3297, 7
      %v3299 = vsub.s32 %v3296, %v3298
      %v3300 = vrot.slane %v3286, %v3299
      %v3301 = vunpack.c.l.b16 %v3139
      %v3302 = vunpack.c.l.b16 %v3146
      %v3303 = vunpack.c.l.b16 %v3161
      %v3304 = vunpack.c.l.b16 %v3168
      %v3305 = vunpack.c.l.b16 %v3183
      %v3306 = vunpack.c.l.b16 %v3190
      %v3307 = vunpack.c.l.b16 %v3205
      %v3308 = vunpack.c.l.b16 %v3212
      %v3309 = vunpack.c.l.b16 %v3227
      %v3310 = vunpack.c.l.b16 %v3234
      %v3311 = vunpack.c.l.b16 %v3249
      %v3312 = vunpack.c.l.b16 %v3256
      %v3313 = vunpack.c.l.b16 %v3271
      %v3314 = vunpack.c.l.b16 %v3278
      %v3315 = vunpack.c.l.b16 %v3293
      %v3316 = vunpack.c.l.b16 %v3300
      %v3317 = vrot.slane %v3303, 7
      %v3318 = vsel %vm2703, %v3317, %v3301
      %v3319 = vrot.slane %v3305, 6
      %v3320 = vsel %vm2706, %v3319, %v3318
      %v3321 = vrot.slane %v3307, 5
      %v3322 = vsel %vm2709, %v3321, %v3320
      %v3323 = vrot.slane %v3309, 4
      %v3324 = vsel %vm2712, %v3323, %v3322
      %v3325 = vrot.slane %v3311, 3
      %v3326 = vsel %vm2715, %v3325, %v3324
      %v3327 = vrot.slane %v3313, 2
      %v3328 = vsel %vm2718, %v3327, %v3326
      %v3329 = vrot.slane %v3315, 1
      %v3330 = vsel %vm2721, %v3329, %v3328
      %v3331 = vrot.slane %v3304, 7
      %v3332 = vsel %vm2703, %v3331, %v3302
      %v3333 = vrot.slane %v3306, 6
      %v3334 = vsel %vm2706, %v3333, %v3332
      %v3335 = vrot.slane %v3308, 5
      %v3336 = vsel %vm2709, %v3335, %v3334
      %v3337 = vrot.slane %v3310, 4
      %v3338 = vsel %vm2712, %v3337, %v3336
      %v3339 = vrot.slane %v3312, 3
      %v3340 = vsel %vm2715, %v3339, %v3338
      %v3341 = vrot.slane %v3314, 2
      %v3342 = vsel %vm2718, %v3341, %v3340
      %v3343 = vrot.slane %v3316, 1
      %v3344 = vsel %vm2721, %v3343, %v3342
      %v3345 = vpack.c.b16 %v3330, %v3330
      %v3346 = vpack.c.b16 %v3344, %v3344
      %v3372 = vunpack.c.l.b16 %v3101
      %v3373 = vunpack.c.h.b16 %v3101
      %v3374 = vunpack.c.l.b16 %v3102
      %v3375 = vunpack.c.h.b16 %v3102
      %v3376 = vunpack.c.l.b16 %v3103
      %v3377 = vunpack.c.h.b16 %v3103
      %v3378 = vunpack.c.l.b16 %v3104
      %v3379 = vunpack.c.h.b16 %v3104
      %v3380 = vunpack.c.l.b16 %v3105
      %v3381 = vunpack.c.h.b16 %v3105
      %v3382 = vunpack.c.l.b16 %v3106
      %v3383 = vunpack.c.h.b16 %v3106
      %v3384 = vunpack.c.l.b16 %v3107
      %v3385 = vunpack.c.h.b16 %v3107
      %v3386 = vunpack.c.l.b16 %v3108
      %v3387 = vunpack.c.h.b16 %v3108
      %v3388 = vunpack.c.l.b16 %v3109
      %v3389 = vunpack.c.h.b16 %v3109
      %v3390 = vunpack.c.l.b16 %v3110
      %v3391 = vunpack.c.h.b16 %v3110
      %v3392 = vunpack.c.l.b16 %v3111
      %v3393 = vunpack.c.h.b16 %v3111
      %v3394 = vunpack.c.l.b16 %v3112
      %v3395 = vunpack.c.h.b16 %v3112
      %v3396 = vunpack.c.l.b16 %v3113
      %v3397 = vunpack.c.h.b16 %v3113
      %v3398 = vunpack.c.l.b16 %v3114
      %v3399 = vunpack.c.h.b16 %v3114
      %v3400 = vunpack.c.l.b16 %v3115
      %v3401 = vunpack.c.h.b16 %v3115
      %v3402 = vunpack.c.l.b16 %v3116
      %v3403 = vunpack.c.h.b16 %v3116
      %v3404 = vunpack.c.l.b16 %v3117
      %v3405 = vunpack.c.h.b16 %v3117
      %v3406 = vunpack.c.l.b16 %v3118
      %v3407 = vunpack.c.h.b16 %v3118
      %v3408 = vunpack.c.l.b16 %v3119
      %v3409 = vunpack.c.h.b16 %v3119
      %v3410 = vunpack.c.l.b16 %v3120
      %v3411 = vunpack.c.h.b16 %v3120
      %v3412 = vunpack.c.l.b16 %v3121
      %v3413 = vunpack.c.h.b16 %v3121
      %v3414 = vunpack.c.l.b16 %v3122
      %v3415 = vunpack.c.h.b16 %v3122
      %v3416 = vunpack.c.l.b16 %v3123
      %v3417 = vunpack.c.h.b16 %v3123
      %v3418 = vunpack.c.l.b16 %v3124
      %v3419 = vunpack.c.h.b16 %v3124
      %v3420 = vpack.c.b16 %v3374, %v3372
      %v3421 = vpack.c.b16 %v3375, %v3373
      %v3422 = vpack.c.b16 %v3378, %v3376
      %v3423 = vpack.c.b16 %v3379, %v3377
      %v3424 = vpack.c.b16 %v3382, %v3380
      %v3425 = vpack.c.b16 %v3383, %v3381
      %v3426 = vpack.c.b16 %v3386, %v3384
      %v3427 = vpack.c.b16 %v3387, %v3385
      %v3428 = vpack.c.b16 %v3390, %v3388
      %v3429 = vpack.c.b16 %v3391, %v3389
      %v3430 = vpack.c.b16 %v3394, %v3392
      %v3431 = vpack.c.b16 %v3395, %v3393
      %v3432 = vpack.c.b16 %v3398, %v3396
      %v3433 = vpack.c.b16 %v3399, %v3397
      %v3434 = vpack.c.b16 %v3402, %v3400
      %v3435 = vpack.c.b16 %v3403, %v3401
      %v3436 = vpack.c.b16 %v3406, %v3404
      %v3437 = vpack.c.b16 %v3407, %v3405
      %v3438 = vpack.c.b16 %v3410, %v3408
      %v3439 = vpack.c.b16 %v3411, %v3409
      %v3440 = vpack.c.b16 %v3414, %v3412
      %v3441 = vpack.c.b16 %v3415, %v3413
      %v3442 = vpack.c.b16 %v3418, %v3416
      %v3443 = vpack.c.b16 %v3419, %v3417
      %v3469 = vsel %vm2860, %v3346, 0
      %3471 = vmatprep.subr.bf16.mxu0 %v3421
      %3472 = vmatpush1.bf16.msra.mxu0 %v3420
      %3473 = vmatprep.subr.bf16.mxu0 %v3423
      %3474 = vmatpush1.bf16.msra.mxu0 %v3422
      %3475 = vmatprep.subr.bf16.mxu0 %v3425
      %3476 = vmatpush1.bf16.msra.mxu0 %v3424
      %3477 = vmatprep.subr.bf16.mxu0 %v3427
      %3478 = vmatpush1.bf16.msra.mxu0 %v3426
      %3479 = vmatprep.subr.bf16.mxu0 %v3429
      %3480 = vmatpush1.bf16.msra.mxu0 %v3428
      %3481 = vmatprep.subr.bf16.mxu0 %v3431
      %3482 = vmatpush1.bf16.msra.mxu0 %v3430
      %3483 = vmatprep.subr.bf16.mxu0 %v3433
      %3484 = vmatpush1.bf16.msra.mxu0 %v3432
      %3485 = vmatprep.subr.bf16.mxu0 %v3435
      %3486 = vmatpush1.bf16.msra.mxu0 %v3434
      %3487 = vmatprep.subr.bf16.mxu0 %v3437
      %3488 = vmatpush1.bf16.msra.mxu0 %v3436
      %3489 = vmatprep.subr.bf16.mxu0 %v3439
      %3490 = vmatpush1.bf16.msra.mxu0 %v3438
      %3491 = vmatprep.subr.bf16.mxu0 %v3441
      %3492 = vmatpush1.bf16.msra.mxu0 %v3440
      %3493 = vmatprep.subr.bf16.mxu0 %v3443
      %3494 = vmatpush1.bf16.msra.mxu0 %v3442
      %3495 = vmatprep.subr.bf16.mxu0 0
      %3496 = vmatpush1.bf16.msra.mxu0 0
      %3497 = vmatprep.subr.bf16.mxu0 0
      %3498 = vmatpush1.bf16.msra.mxu0 0
      %3499 = vmatprep.subr.bf16.mxu0 0
      %3500 = vmatpush1.bf16.msra.mxu0 0
      %3501 = vmatprep.subr.bf16.mxu0 0
      %3502 = vmatpush1.bf16.msra.mxu0 0
      %3503 = vmatprep.mubr.bf16.mxu0 %v3469
      %3504 = vmatmul.mubr.bf16.gmra.mrb[0].mxu0 %v3345
      %v3505 = vpop.f32.mrb[0].mxu0
      %v3506 = vadd.f32 0.0, %v3505
      %v3507 = vpop.f32.mrb[0].mxu0
      %v3508 = vadd.f32 0.0, %v3507
      %v3509 = vpop.f32.mrb[0].mxu0
      %v3510 = vpop.f32.mrb[0].mxu0
      %3511 = vdwg.mxu0
      %v3512 = vadd.f32 %v3094, %v3506
      %v3513 = vadd.f32 %v3096, %v3508
      %s3514 = scalar_lea.vmem %s5, 576
      %v3515 = vld [vmem:[%s3514] sm:$0xff]
      %v3516 = vld [vmem:[%s3514 + $0x8] sm:$0xff]
      %v3517 = vld [vmem:[%s3514 + $0x10] sm:$0xff]
      %v3518 = vld [vmem:[%s3514 + $0x18] sm:$0xff]
      %v3519 = vld [vmem:[%s3514 + $0x20] sm:$0xff]
      %v3520 = vld [vmem:[%s3514 + $0x28] sm:$0xff]
      %v3521 = vld [vmem:[%s3514 + $0x30] sm:$0xff]
      %v3522 = vld [vmem:[%s3514 + $0x38] sm:$0xff]
      %v3523 = vld [vmem:[%s3514 + $0x40] sm:$0xff]
      %v3524 = vld [vmem:[%s3514 + $0x48] sm:$0xff]
      %v3525 = vld [vmem:[%s3514 + $0x50] sm:$0xff]
      %v3526 = vld [vmem:[%s3514 + $0x58] sm:$0xff]
      %v3527 = vld [vmem:[%s3514 + $0x60] sm:$0xff]
      %v3528 = vld [vmem:[%s3514 + $0x68] sm:$0xff]
      %v3529 = vld [vmem:[%s3514 + $0x70] sm:$0xff]
      %v3530 = vld [vmem:[%s3514 + $0x78] sm:$0xff]
      %v3531 = vld [vmem:[%s3514 + $0x80] sm:$0xff]
      %v3532 = vld [vmem:[%s3514 + $0x88] sm:$0xff]
      %v3533 = vld [vmem:[%s3514 + $0x90] sm:$0xff]
      %v3534 = vld [vmem:[%s3514 + $0x98] sm:$0xff]
      %v3535 = vld [vmem:[%s3514 + $0xa0] sm:$0xff]
      %v3536 = vld [vmem:[%s3514 + $0xa8] sm:$0xff]
      %v3537 = vld [vmem:[%s3514 + $0xb0] sm:$0xff]
      %v3538 = vld [vmem:[%s3514 + $0xb8] sm:$0xff]
      %v3539 = vrot.slane %v3301, 1
      %v3540 = vsel %vm2703, %v3303, %v3539
      %v3541 = vrot.slane %v3305, 7
      %v3542 = vsel %vm2706, %v3541, %v3540
      %v3543 = vrot.slane %v3307, 6
      %v3544 = vsel %vm2709, %v3543, %v3542
      %v3545 = vrot.slane %v3309, 5
      %v3546 = vsel %vm2712, %v3545, %v3544
      %v3547 = vrot.slane %v3311, 4
      %v3548 = vsel %vm2715, %v3547, %v3546
      %v3549 = vrot.slane %v3313, 3
      %v3550 = vsel %vm2718, %v3549, %v3548
      %v3551 = vrot.slane %v3315, 2
      %v3552 = vsel %vm2721, %v3551, %v3550
      %v3553 = vrot.slane %v3302, 1
      %v3554 = vsel %vm2703, %v3304, %v3553
      %v3555 = vrot.slane %v3306, 7
      %v3556 = vsel %vm2706, %v3555, %v3554
      %v3557 = vrot.slane %v3308, 6
      %v3558 = vsel %vm2709, %v3557, %v3556
      %v3559 = vrot.slane %v3310, 5
      %v3560 = vsel %vm2712, %v3559, %v3558
      %v3561 = vrot.slane %v3312, 4
      %v3562 = vsel %vm2715, %v3561, %v3560
      %v3563 = vrot.slane %v3314, 3
      %v3564 = vsel %vm2718, %v3563, %v3562
      %v3565 = vrot.slane %v3316, 2
      %v3566 = vsel %vm2721, %v3565, %v3564
      %v3567 = vpack.c.b16 %v3552, %v3552
      %v3568 = vpack.c.b16 %v3566, %v3566
      %v3594 = vunpack.c.l.b16 %v3515
      %v3595 = vunpack.c.h.b16 %v3515
      %v3596 = vunpack.c.l.b16 %v3516
      %v3597 = vunpack.c.h.b16 %v3516
      %v3598 = vunpack.c.l.b16 %v3517
      %v3599 = vunpack.c.h.b16 %v3517
      %v3600 = vunpack.c.l.b16 %v3518
      %v3601 = vunpack.c.h.b16 %v3518
      %v3602 = vunpack.c.l.b16 %v3519
      %v3603 = vunpack.c.h.b16 %v3519
      %v3604 = vunpack.c.l.b16 %v3520
      %v3605 = vunpack.c.h.b16 %v3520
      %v3606 = vunpack.c.l.b16 %v3521
      %v3607 = vunpack.c.h.b16 %v3521
      %v3608 = vunpack.c.l.b16 %v3522
      %v3609 = vunpack.c.h.b16 %v3522
      %v3610 = vunpack.c.l.b16 %v3523
      %v3611 = vunpack.c.h.b16 %v3523
      %v3612 = vunpack.c.l.b16 %v3524
      %v3613 = vunpack.c.h.b16 %v3524
      %v3614 = vunpack.c.l.b16 %v3525
      %v3615 = vunpack.c.h.b16 %v3525
      %v3616 = vunpack.c.l.b16 %v3526
      %v3617 = vunpack.c.h.b16 %v3526
      %v3618 = vunpack.c.l.b16 %v3527
      %v3619 = vunpack.c.h.b16 %v3527
      %v3620 = vunpack.c.l.b16 %v3528
      %v3621 = vunpack.c.h.b16 %v3528
      %v3622 = vunpack.c.l.b16 %v3529
      %v3623 = vunpack.c.h.b16 %v3529
      %v3624 = vunpack.c.l.b16 %v3530
      %v3625 = vunpack.c.h.b16 %v3530
      %v3626 = vunpack.c.l.b16 %v3531
      %v3627 = vunpack.c.h.b16 %v3531
      %v3628 = vunpack.c.l.b16 %v3532
      %v3629 = vunpack.c.h.b16 %v3532
      %v3630 = vunpack.c.l.b16 %v3533
      %v3631 = vunpack.c.h.b16 %v3533
      %v3632 = vunpack.c.l.b16 %v3534
      %v3633 = vunpack.c.h.b16 %v3534
      %v3634 = vunpack.c.l.b16 %v3535
      %v3635 = vunpack.c.h.b16 %v3535
      %v3636 = vunpack.c.l.b16 %v3536
      %v3637 = vunpack.c.h.b16 %v3536
      %v3638 = vunpack.c.l.b16 %v3537
      %v3639 = vunpack.c.h.b16 %v3537
      %v3640 = vunpack.c.l.b16 %v3538
      %v3641 = vunpack.c.h.b16 %v3538
      %v3642 = vpack.c.b16 %v3596, %v3594
      %v3643 = vpack.c.b16 %v3597, %v3595
      %v3644 = vpack.c.b16 %v3600, %v3598
      %v3645 = vpack.c.b16 %v3601, %v3599
      %v3646 = vpack.c.b16 %v3604, %v3602
      %v3647 = vpack.c.b16 %v3605, %v3603
      %v3648 = vpack.c.b16 %v3608, %v3606
      %v3649 = vpack.c.b16 %v3609, %v3607
      %v3650 = vpack.c.b16 %v3612, %v3610
      %v3651 = vpack.c.b16 %v3613, %v3611
      %v3652 = vpack.c.b16 %v3616, %v3614
      %v3653 = vpack.c.b16 %v3617, %v3615
      %v3654 = vpack.c.b16 %v3620, %v3618
      %v3655 = vpack.c.b16 %v3621, %v3619
      %v3656 = vpack.c.b16 %v3624, %v3622
      %v3657 = vpack.c.b16 %v3625, %v3623
      %v3658 = vpack.c.b16 %v3628, %v3626
      %v3659 = vpack.c.b16 %v3629, %v3627
      %v3660 = vpack.c.b16 %v3632, %v3630
      %v3661 = vpack.c.b16 %v3633, %v3631
      %v3662 = vpack.c.b16 %v3636, %v3634
      %v3663 = vpack.c.b16 %v3637, %v3635
      %v3664 = vpack.c.b16 %v3640, %v3638
      %v3665 = vpack.c.b16 %v3641, %v3639
      %v3691 = vsel %vm2860, %v3568, 0
      %3693 = vmatprep.subr.bf16.mxu0 %v3643
      %3694 = vmatpush1.bf16.msra.mxu0 %v3642
      %3695 = vmatprep.subr.bf16.mxu0 %v3645
      %3696 = vmatpush1.bf16.msra.mxu0 %v3644
      %3697 = vmatprep.subr.bf16.mxu0 %v3647
      %3698 = vmatpush1.bf16.msra.mxu0 %v3646
      %3699 = vmatprep.subr.bf16.mxu0 %v3649
      %3700 = vmatpush1.bf16.msra.mxu0 %v3648
      %3701 = vmatprep.subr.bf16.mxu0 %v3651
      %3702 = vmatpush1.bf16.msra.mxu0 %v3650
      %3703 = vmatprep.subr.bf16.mxu0 %v3653
      %3704 = vmatpush1.bf16.msra.mxu0 %v3652
      %3705 = vmatprep.subr.bf16.mxu0 %v3655
      %3706 = vmatpush1.bf16.msra.mxu0 %v3654
      %3707 = vmatprep.subr.bf16.mxu0 %v3657
      %3708 = vmatpush1.bf16.msra.mxu0 %v3656
      %3709 = vmatprep.subr.bf16.mxu0 %v3659
      %3710 = vmatpush1.bf16.msra.mxu0 %v3658
      %3711 = vmatprep.subr.bf16.mxu0 %v3661
      %3712 = vmatpush1.bf16.msra.mxu0 %v3660
      %3713 = vmatprep.subr.bf16.mxu0 %v3663
      %3714 = vmatpush1.bf16.msra.mxu0 %v3662
      %3715 = vmatprep.subr.bf16.mxu0 %v3665
      %3716 = vmatpush1.bf16.msra.mxu0 %v3664
      %3717 = vmatprep.subr.bf16.mxu0 0
      %3718 = vmatpush1.bf16.msra.mxu0 0
      %3719 = vmatprep.subr.bf16.mxu0 0
      %3720 = vmatpush1.bf16.msra.mxu0 0
      %3721 = vmatprep.subr.bf16.mxu0 0
      %3722 = vmatpush1.bf16.msra.mxu0 0
      %3723 = vmatprep.subr.bf16.mxu0 0
      %3724 = vmatpush1.bf16.msra.mxu0 0
      %3725 = vmatprep.mubr.bf16.mxu0 %v3691
      %3726 = vmatmul.mubr.bf16.gmra.mrb[0].mxu0 %v3567
      %v3727 = vpop.f32.mrb[0].mxu0
      %v3728 = vadd.f32 0.0, %v3727
      %v3729 = vpop.f32.mrb[0].mxu0
      %v3730 = vadd.f32 0.0, %v3729
      %v3731 = vpop.f32.mrb[0].mxu0
      %v3732 = vpop.f32.mrb[0].mxu0
      %3733 = vdwg.mxu0
      %v3734 = vadd.f32 %v3512, %v3728
      %v3735 = vadd.f32 %v3513, %v3730
      %s3736 = scalar_lea.vmem %s5, 768
      %v3737 = vld [vmem:[%s3736] sm:$0xff]
      %v3738 = vld [vmem:[%s3736 + $0x8] sm:$0xff]
      %v3739 = vld [vmem:[%s3736 + $0x10] sm:$0xff]
      %v3740 = vld [vmem:[%s3736 + $0x18] sm:$0xff]
      %v3741 = vld [vmem:[%s3736 + $0x20] sm:$0xff]
      %v3742 = vld [vmem:[%s3736 + $0x28] sm:$0xff]
      %v3743 = vld [vmem:[%s3736 + $0x30] sm:$0xff]
      %v3744 = vld [vmem:[%s3736 + $0x38] sm:$0xff]
      %v3745 = vld [vmem:[%s3736 + $0x40] sm:$0xff]
      %v3746 = vld [vmem:[%s3736 + $0x48] sm:$0xff]
      %v3747 = vld [vmem:[%s3736 + $0x50] sm:$0xff]
      %v3748 = vld [vmem:[%s3736 + $0x58] sm:$0xff]
      %v3749 = vld [vmem:[%s3736 + $0x60] sm:$0xff]
      %v3750 = vld [vmem:[%s3736 + $0x68] sm:$0xff]
      %v3751 = vld [vmem:[%s3736 + $0x70] sm:$0xff]
      %v3752 = vld [vmem:[%s3736 + $0x78] sm:$0xff]
      %v3753 = vld [vmem:[%s3736 + $0x80] sm:$0xff]
      %v3754 = vld [vmem:[%s3736 + $0x88] sm:$0xff]
      %v3755 = vld [vmem:[%s3736 + $0x90] sm:$0xff]
      %v3756 = vld [vmem:[%s3736 + $0x98] sm:$0xff]
      %v3757 = vld [vmem:[%s3736 + $0xa0] sm:$0xff]
      %v3758 = vld [vmem:[%s3736 + $0xa8] sm:$0xff]
      %v3759 = vld [vmem:[%s3736 + $0xb0] sm:$0xff]
      %v3760 = vld [vmem:[%s3736 + $0xb8] sm:$0xff]
      %v3762 = vunpack.c.l.s4 1966171168
      %v3763 = vunpack.c.0.s8 %v3762
      %v3764 = vlaneseq
      %v3765 = vshrl.u32 %v3764, 7
      %v3766 = vsub.s32 %v3763, %v3765
      %v3767 = vrot.slane %v2357, %v3766
      %v3768 = vcombine.high %v3767, %v3767
      %v3770 = vunpack.c.l.s4 1966171168
      %v3771 = vunpack.c.0.s8 %v3770
      %v3772 = vlaneseq
      %v3773 = vshrl.u32 %v3772, 7
      %v3774 = vsub.s32 %v3771, %v3773
      %v3775 = vrot.slane %v3767, %v3774
      %v3777 = vunpack.c.l.s4 1966171168
      %v3778 = vunpack.c.0.s8 %v3777
      %v3779 = vlaneseq
      %v3780 = vshrl.u32 %v3779, 7
      %v3781 = vsub.s32 %v3778, %v3780
      %v3782 = vrot.slane %v3768, %v3781
      %v3784 = vunpack.c.l.s4 1966171168
      %v3785 = vunpack.c.0.s8 %v3784
      %v3786 = vlaneseq
      %v3787 = vshrl.u32 %v3786, 7
      %v3788 = vsub.s32 %v3785, %v3787
      %v3789 = vrot.slane %v2356, %v3788
      %v3790 = vcombine.high %v3789, %v3789
      %v3792 = vunpack.c.l.s4 1966171168
      %v3793 = vunpack.c.0.s8 %v3792
      %v3794 = vlaneseq
      %v3795 = vshrl.u32 %v3794, 7
      %v3796 = vsub.s32 %v3793, %v3795
      %v3797 = vrot.slane %v3789, %v3796
      %v3799 = vunpack.c.l.s4 1966171168
      %v3800 = vunpack.c.0.s8 %v3799
      %v3801 = vlaneseq
      %v3802 = vshrl.u32 %v3801, 7
      %v3803 = vsub.s32 %v3800, %v3802
      %v3804 = vrot.slane %v3790, %v3803
      %v3806 = vunpack.c.l.s4 1966171168
      %v3807 = vunpack.c.0.s8 %v3806
      %v3808 = vlaneseq
      %v3809 = vshrl.u32 %v3808, 7
      %v3810 = vsub.s32 %v3807, %v3809
      %v3811 = vrot.slane %v2385, %v3810
      %v3812 = vcombine.high %v3811, %v3811
      %v3814 = vunpack.c.l.s4 1966171168
      %v3815 = vunpack.c.0.s8 %v3814
      %v3816 = vlaneseq
      %v3817 = vshrl.u32 %v3816, 7
      %v3818 = vsub.s32 %v3815, %v3817
      %v3819 = vrot.slane %v3811, %v3818
      %v3821 = vunpack.c.l.s4 1966171168
      %v3822 = vunpack.c.0.s8 %v3821
      %v3823 = vlaneseq
      %v3824 = vshrl.u32 %v3823, 7
      %v3825 = vsub.s32 %v3822, %v3824
      %v3826 = vrot.slane %v3812, %v3825
      %v3828 = vunpack.c.l.s4 1966171168
      %v3829 = vunpack.c.0.s8 %v3828
      %v3830 = vlaneseq
      %v3831 = vshrl.u32 %v3830, 7
      %v3832 = vsub.s32 %v3829, %v3831
      %v3833 = vrot.slane %v2409, %v3832
      %v3834 = vcombine.high %v3833, %v3833
      %v3836 = vunpack.c.l.s4 1966171168
      %v3837 = vunpack.c.0.s8 %v3836
      %v3838 = vlaneseq
      %v3839 = vshrl.u32 %v3838, 7
      %v3840 = vsub.s32 %v3837, %v3839
      %v3841 = vrot.slane %v3833, %v3840
      %v3843 = vunpack.c.l.s4 1966171168
      %v3844 = vunpack.c.0.s8 %v3843
      %v3845 = vlaneseq
      %v3846 = vshrl.u32 %v3845, 7
      %v3847 = vsub.s32 %v3844, %v3846
      %v3848 = vrot.slane %v3834, %v3847
      %v3850 = vunpack.c.l.s4 1966171168
      %v3851 = vunpack.c.0.s8 %v3850
      %v3852 = vlaneseq
      %v3853 = vshrl.u32 %v3852, 7
      %v3854 = vsub.s32 %v3851, %v3853
      %v3855 = vrot.slane %v2408, %v3854
      %v3856 = vcombine.high %v3855, %v3855
      %v3858 = vunpack.c.l.s4 1966171168
      %v3859 = vunpack.c.0.s8 %v3858
      %v3860 = vlaneseq
      %v3861 = vshrl.u32 %v3860, 7
      %v3862 = vsub.s32 %v3859, %v3861
      %v3863 = vrot.slane %v3855, %v3862
      %v3865 = vunpack.c.l.s4 1966171168
      %v3866 = vunpack.c.0.s8 %v3865
      %v3867 = vlaneseq
      %v3868 = vshrl.u32 %v3867, 7
      %v3869 = vsub.s32 %v3866, %v3868
      %v3870 = vrot.slane %v3856, %v3869
      %v3872 = vunpack.c.l.s4 1966171168
      %v3873 = vunpack.c.0.s8 %v3872
      %v3874 = vlaneseq
      %v3875 = vshrl.u32 %v3874, 7
      %v3876 = vsub.s32 %v3873, %v3875
      %v3877 = vrot.slane %v2449, %v3876
      %v3878 = vcombine.high %v3877, %v3877
      %v3880 = vunpack.c.l.s4 1966171168
      %v3881 = vunpack.c.0.s8 %v3880
      %v3882 = vlaneseq
      %v3883 = vshrl.u32 %v3882, 7
      %v3884 = vsub.s32 %v3881, %v3883
      %v3885 = vrot.slane %v3877, %v3884
      %v3887 = vunpack.c.l.s4 1966171168
      %v3888 = vunpack.c.0.s8 %v3887
      %v3889 = vlaneseq
      %v3890 = vshrl.u32 %v3889, 7
      %v3891 = vsub.s32 %v3888, %v3890
      %v3892 = vrot.slane %v3878, %v3891
      %v3894 = vunpack.c.l.s4 1966171168
      %v3895 = vunpack.c.0.s8 %v3894
      %v3896 = vlaneseq
      %v3897 = vshrl.u32 %v3896, 7
      %v3898 = vsub.s32 %v3895, %v3897
      %v3899 = vrot.slane %v2442, %v3898
      %v3900 = vcombine.high %v3899, %v3899
      %v3902 = vunpack.c.l.s4 1966171168
      %v3903 = vunpack.c.0.s8 %v3902
      %v3904 = vlaneseq
      %v3905 = vshrl.u32 %v3904, 7
      %v3906 = vsub.s32 %v3903, %v3905
      %v3907 = vrot.slane %v3899, %v3906
      %v3909 = vunpack.c.l.s4 1966171168
      %v3910 = vunpack.c.0.s8 %v3909
      %v3911 = vlaneseq
      %v3912 = vshrl.u32 %v3911, 7
      %v3913 = vsub.s32 %v3910, %v3912
      %v3914 = vrot.slane %v3900, %v3913
      %v3916 = vunpack.c.l.s4 1966171168
      %v3917 = vunpack.c.0.s8 %v3916
      %v3918 = vlaneseq
      %v3919 = vshrl.u32 %v3918, 7
      %v3920 = vsub.s32 %v3917, %v3919
      %v3921 = vrot.slane %v2460, %v3920
      %v3922 = vcombine.high %v3921, %v3921
      %v3924 = vunpack.c.l.s4 1966171168
      %v3925 = vunpack.c.0.s8 %v3924
      %v3926 = vlaneseq
      %v3927 = vshrl.u32 %v3926, 7
      %v3928 = vsub.s32 %v3925, %v3927
      %v3929 = vrot.slane %v3921, %v3928
      %v3931 = vunpack.c.l.s4 1966171168
      %v3932 = vunpack.c.0.s8 %v3931
      %v3933 = vlaneseq
      %v3934 = vshrl.u32 %v3933, 7
      %v3935 = vsub.s32 %v3932, %v3934
      %v3936 = vrot.slane %v3922, %v3935
      %v3937 = vunpack.c.l.b16 %v3775
      %v3938 = vunpack.c.l.b16 %v3782
      %v3939 = vunpack.c.l.b16 %v3797
      %v3940 = vunpack.c.l.b16 %v3804
      %v3941 = vunpack.c.l.b16 %v3819
      %v3942 = vunpack.c.l.b16 %v3826
      %v3943 = vunpack.c.l.b16 %v3841
      %v3944 = vunpack.c.l.b16 %v3848
      %v3945 = vunpack.c.l.b16 %v3863
      %v3946 = vunpack.c.l.b16 %v3870
      %v3947 = vunpack.c.l.b16 %v3885
      %v3948 = vunpack.c.l.b16 %v3892
      %v3949 = vunpack.c.l.b16 %v3907
      %v3950 = vunpack.c.l.b16 %v3914
      %v3951 = vunpack.c.l.b16 %v3929
      %v3952 = vunpack.c.l.b16 %v3936
      %v3953 = vrot.slane %v3939, 7
      %v3954 = vsel %vm2703, %v3953, %v3937
      %v3955 = vrot.slane %v3941, 6
      %v3956 = vsel %vm2706, %v3955, %v3954
      %v3957 = vrot.slane %v3943, 5
      %v3958 = vsel %vm2709, %v3957, %v3956
      %v3959 = vrot.slane %v3945, 4
      %v3960 = vsel %vm2712, %v3959, %v3958
      %v3961 = vrot.slane %v3947, 3
      %v3962 = vsel %vm2715, %v3961, %v3960
      %v3963 = vrot.slane %v3949, 2
      %v3964 = vsel %vm2718, %v3963, %v3962
      %v3965 = vrot.slane %v3951, 1
      %v3966 = vsel %vm2721, %v3965, %v3964
      %v3967 = vrot.slane %v3940, 7
      %v3968 = vsel %vm2703, %v3967, %v3938
      %v3969 = vrot.slane %v3942, 6
      %v3970 = vsel %vm2706, %v3969, %v3968
      %v3971 = vrot.slane %v3944, 5
      %v3972 = vsel %vm2709, %v3971, %v3970
      %v3973 = vrot.slane %v3946, 4
      %v3974 = vsel %vm2712, %v3973, %v3972
      %v3975 = vrot.slane %v3948, 3
      %v3976 = vsel %vm2715, %v3975, %v3974
      %v3977 = vrot.slane %v3950, 2
      %v3978 = vsel %vm2718, %v3977, %v3976
      %v3979 = vrot.slane %v3952, 1
      %v3980 = vsel %vm2721, %v3979, %v3978
      %v3981 = vpack.c.b16 %v3966, %v3966
      %v3982 = vpack.c.b16 %v3980, %v3980
      %v4008 = vunpack.c.l.b16 %v3737
      %v4009 = vunpack.c.h.b16 %v3737
      %v4010 = vunpack.c.l.b16 %v3738
      %v4011 = vunpack.c.h.b16 %v3738
      %v4012 = vunpack.c.l.b16 %v3739
      %v4013 = vunpack.c.h.b16 %v3739
      %v4014 = vunpack.c.l.b16 %v3740
      %v4015 = vunpack.c.h.b16 %v3740
      %v4016 = vunpack.c.l.b16 %v3741
      %v4017 = vunpack.c.h.b16 %v3741
      %v4018 = vunpack.c.l.b16 %v3742
      %v4019 = vunpack.c.h.b16 %v3742
      %v4020 = vunpack.c.l.b16 %v3743
      %v4021 = vunpack.c.h.b16 %v3743
      %v4022 = vunpack.c.l.b16 %v3744
      %v4023 = vunpack.c.h.b16 %v3744
      %v4024 = vunpack.c.l.b16 %v3745
      %v4025 = vunpack.c.h.b16 %v3745
      %v4026 = vunpack.c.l.b16 %v3746
      %v4027 = vunpack.c.h.b16 %v3746
      %v4028 = vunpack.c.l.b16 %v3747
      %v4029 = vunpack.c.h.b16 %v3747
      %v4030 = vunpack.c.l.b16 %v3748
      %v4031 = vunpack.c.h.b16 %v3748
      %v4032 = vunpack.c.l.b16 %v3749
      %v4033 = vunpack.c.h.b16 %v3749
      %v4034 = vunpack.c.l.b16 %v3750
      %v4035 = vunpack.c.h.b16 %v3750
      %v4036 = vunpack.c.l.b16 %v3751
      %v4037 = vunpack.c.h.b16 %v3751
      %v4038 = vunpack.c.l.b16 %v3752
      %v4039 = vunpack.c.h.b16 %v3752
      %v4040 = vunpack.c.l.b16 %v3753
      %v4041 = vunpack.c.h.b16 %v3753
      %v4042 = vunpack.c.l.b16 %v3754
      %v4043 = vunpack.c.h.b16 %v3754
      %v4044 = vunpack.c.l.b16 %v3755
      %v4045 = vunpack.c.h.b16 %v3755
      %v4046 = vunpack.c.l.b16 %v3756
      %v4047 = vunpack.c.h.b16 %v3756
      %v4048 = vunpack.c.l.b16 %v3757
      %v4049 = vunpack.c.h.b16 %v3757
      %v4050 = vunpack.c.l.b16 %v3758
      %v4051 = vunpack.c.h.b16 %v3758
      %v4052 = vunpack.c.l.b16 %v3759
      %v4053 = vunpack.c.h.b16 %v3759
      %v4054 = vunpack.c.l.b16 %v3760
      %v4055 = vunpack.c.h.b16 %v3760
      %v4056 = vpack.c.b16 %v4010, %v4008
      %v4057 = vpack.c.b16 %v4011, %v4009
      %v4058 = vpack.c.b16 %v4014, %v4012
      %v4059 = vpack.c.b16 %v4015, %v4013
      %v4060 = vpack.c.b16 %v4018, %v4016
      %v4061 = vpack.c.b16 %v4019, %v4017
      %v4062 = vpack.c.b16 %v4022, %v4020
      %v4063 = vpack.c.b16 %v4023, %v4021
      %v4064 = vpack.c.b16 %v4026, %v4024
      %v4065 = vpack.c.b16 %v4027, %v4025
      %v4066 = vpack.c.b16 %v4030, %v4028
      %v4067 = vpack.c.b16 %v4031, %v4029
      %v4068 = vpack.c.b16 %v4034, %v4032
      %v4069 = vpack.c.b16 %v4035, %v4033
      %v4070 = vpack.c.b16 %v4038, %v4036
      %v4071 = vpack.c.b16 %v4039, %v4037
      %v4072 = vpack.c.b16 %v4042, %v4040
      %v4073 = vpack.c.b16 %v4043, %v4041
      %v4074 = vpack.c.b16 %v4046, %v4044
      %v4075 = vpack.c.b16 %v4047, %v4045
      %v4076 = vpack.c.b16 %v4050, %v4048
      %v4077 = vpack.c.b16 %v4051, %v4049
      %v4078 = vpack.c.b16 %v4054, %v4052
      %v4079 = vpack.c.b16 %v4055, %v4053
      %v4105 = vsel %vm2860, %v3982, 0
      %4107 = vmatprep.subr.bf16.mxu0 %v4057
      %4108 = vmatpush1.bf16.msra.mxu0 %v4056
      %4109 = vmatprep.subr.bf16.mxu0 %v4059
      %4110 = vmatpush1.bf16.msra.mxu0 %v4058
      %4111 = vmatprep.subr.bf16.mxu0 %v4061
      %4112 = vmatpush1.bf16.msra.mxu0 %v4060
      %4113 = vmatprep.subr.bf16.mxu0 %v4063
      %4114 = vmatpush1.bf16.msra.mxu0 %v4062
      %4115 = vmatprep.subr.bf16.mxu0 %v4065
      %4116 = vmatpush1.bf16.msra.mxu0 %v4064
      %4117 = vmatprep.subr.bf16.mxu0 %v4067
      %4118 = vmatpush1.bf16.msra.mxu0 %v4066
      %4119 = vmatprep.subr.bf16.mxu0 %v4069
      %4120 = vmatpush1.bf16.msra.mxu0 %v4068
      %4121 = vmatprep.subr.bf16.mxu0 %v4071
      %4122 = vmatpush1.bf16.msra.mxu0 %v4070
      %4123 = vmatprep.subr.bf16.mxu0 %v4073
      %4124 = vmatpush1.bf16.msra.mxu0 %v4072
      %4125 = vmatprep.subr.bf16.mxu0 %v4075
      %4126 = vmatpush1.bf16.msra.mxu0 %v4074
      %4127 = vmatprep.subr.bf16.mxu0 %v4077
      %4128 = vmatpush1.bf16.msra.mxu0 %v4076
      %4129 = vmatprep.subr.bf16.mxu0 %v4079
      %4130 = vmatpush1.bf16.msra.mxu0 %v4078
      %4131 = vmatprep.subr.bf16.mxu0 0
      %4132 = vmatpush1.bf16.msra.mxu0 0
      %4133 = vmatprep.subr.bf16.mxu0 0
      %4134 = vmatpush1.bf16.msra.mxu0 0
      %4135 = vmatprep.subr.bf16.mxu0 0
      %4136 = vmatpush1.bf16.msra.mxu0 0
      %4137 = vmatprep.subr.bf16.mxu0 0
      %4138 = vmatpush1.bf16.msra.mxu0 0
      %4139 = vmatprep.mubr.bf16.mxu0 %v4105
      %4140 = vmatmul.mubr.bf16.gmra.mrb[0].mxu0 %v3981
      %v4141 = vpop.f32.mrb[0].mxu0
      %v4142 = vadd.f32 0.0, %v4141
      %v4143 = vpop.f32.mrb[0].mxu0
      %v4144 = vadd.f32 0.0, %v4143
      %v4145 = vpop.f32.mrb[0].mxu0
      %v4146 = vpop.f32.mrb[0].mxu0
      %4147 = vdwg.mxu0
      %v4148 = vadd.f32 %v3734, %v4142
      %v4149 = vadd.f32 %v3735, %v4144
      %s4150 = scalar_lea.vmem %s5, 960
      %v4151 = vld [vmem:[%s4150] sm:$0xff]
      %v4152 = vld [vmem:[%s4150 + $0x8] sm:$0xff]
      %v4153 = vld [vmem:[%s4150 + $0x10] sm:$0xff]
      %v4154 = vld [vmem:[%s4150 + $0x18] sm:$0xff]
      %v4155 = vld [vmem:[%s4150 + $0x20] sm:$0xff]
      %v4156 = vld [vmem:[%s4150 + $0x28] sm:$0xff]
      %v4157 = vld [vmem:[%s4150 + $0x30] sm:$0xff]
      %v4158 = vld [vmem:[%s4150 + $0x38] sm:$0xff]
      %v4159 = vld [vmem:[%s4150 + $0x40] sm:$0xff]
      %v4160 = vld [vmem:[%s4150 + $0x48] sm:$0xff]
      %v4161 = vld [vmem:[%s4150 + $0x50] sm:$0xff]
      %v4162 = vld [vmem:[%s4150 + $0x58] sm:$0xff]
      %v4163 = vld [vmem:[%s4150 + $0x60] sm:$0xff]
      %v4164 = vld [vmem:[%s4150 + $0x68] sm:$0xff]
      %v4165 = vld [vmem:[%s4150 + $0x70] sm:$0xff]
      %v4166 = vld [vmem:[%s4150 + $0x78] sm:$0xff]
      %v4167 = vld [vmem:[%s4150 + $0x80] sm:$0xff]
      %v4168 = vld [vmem:[%s4150 + $0x88] sm:$0xff]
      %v4169 = vld [vmem:[%s4150 + $0x90] sm:$0xff]
      %v4170 = vld [vmem:[%s4150 + $0x98] sm:$0xff]
      %v4171 = vld [vmem:[%s4150 + $0xa0] sm:$0xff]
      %v4172 = vld [vmem:[%s4150 + $0xa8] sm:$0xff]
      %v4173 = vld [vmem:[%s4150 + $0xb0] sm:$0xff]
      %v4174 = vld [vmem:[%s4150 + $0xb8] sm:$0xff]
      %v4175 = vrot.slane %v3937, 1
      %v4176 = vsel %vm2703, %v3939, %v4175
      %v4177 = vrot.slane %v3941, 7
      %v4178 = vsel %vm2706, %v4177, %v4176
      %v4179 = vrot.slane %v3943, 6
      %v4180 = vsel %vm2709, %v4179, %v4178
      %v4181 = vrot.slane %v3945, 5
      %v4182 = vsel %vm2712, %v4181, %v4180
      %v4183 = vrot.slane %v3947, 4
      %v4184 = vsel %vm2715, %v4183, %v4182
      %v4185 = vrot.slane %v3949, 3
      %v4186 = vsel %vm2718, %v4185, %v4184
      %v4187 = vrot.slane %v3951, 2
      %v4188 = vsel %vm2721, %v4187, %v4186
      %v4189 = vrot.slane %v3938, 1
      %v4190 = vsel %vm2703, %v3940, %v4189
      %v4191 = vrot.slane %v3942, 7
      %v4192 = vsel %vm2706, %v4191, %v4190
      %v4193 = vrot.slane %v3944, 6
      %v4194 = vsel %vm2709, %v4193, %v4192
      %v4195 = vrot.slane %v3946, 5
      %v4196 = vsel %vm2712, %v4195, %v4194
      %v4197 = vrot.slane %v3948, 4
      %v4198 = vsel %vm2715, %v4197, %v4196
      %v4199 = vrot.slane %v3950, 3
      %v4200 = vsel %vm2718, %v4199, %v4198
      %v4201 = vrot.slane %v3952, 2
      %v4202 = vsel %vm2721, %v4201, %v4200
      %v4203 = vpack.c.b16 %v4188, %v4188
      %v4204 = vpack.c.b16 %v4202, %v4202
      %v4230 = vunpack.c.l.b16 %v4151
      %v4231 = vunpack.c.h.b16 %v4151
      %v4232 = vunpack.c.l.b16 %v4152
      %v4233 = vunpack.c.h.b16 %v4152
      %v4234 = vunpack.c.l.b16 %v4153
      %v4235 = vunpack.c.h.b16 %v4153
      %v4236 = vunpack.c.l.b16 %v4154
      %v4237 = vunpack.c.h.b16 %v4154
      %v4238 = vunpack.c.l.b16 %v4155
      %v4239 = vunpack.c.h.b16 %v4155
      %v4240 = vunpack.c.l.b16 %v4156
      %v4241 = vunpack.c.h.b16 %v4156
      %v4242 = vunpack.c.l.b16 %v4157
      %v4243 = vunpack.c.h.b16 %v4157
      %v4244 = vunpack.c.l.b16 %v4158
      %v4245 = vunpack.c.h.b16 %v4158
      %v4246 = vunpack.c.l.b16 %v4159
      %v4247 = vunpack.c.h.b16 %v4159
      %v4248 = vunpack.c.l.b16 %v4160
      %v4249 = vunpack.c.h.b16 %v4160
      %v4250 = vunpack.c.l.b16 %v4161
      %v4251 = vunpack.c.h.b16 %v4161
      %v4252 = vunpack.c.l.b16 %v4162
      %v4253 = vunpack.c.h.b16 %v4162
      %v4254 = vunpack.c.l.b16 %v4163
      %v4255 = vunpack.c.h.b16 %v4163
      %v4256 = vunpack.c.l.b16 %v4164
      %v4257 = vunpack.c.h.b16 %v4164
      %v4258 = vunpack.c.l.b16 %v4165
      %v4259 = vunpack.c.h.b16 %v4165
      %v4260 = vunpack.c.l.b16 %v4166
      %v4261 = vunpack.c.h.b16 %v4166
      %v4262 = vunpack.c.l.b16 %v4167
      %v4263 = vunpack.c.h.b16 %v4167
      %v4264 = vunpack.c.l.b16 %v4168
      %v4265 = vunpack.c.h.b16 %v4168
      %v4266 = vunpack.c.l.b16 %v4169
      %v4267 = vunpack.c.h.b16 %v4169
      %v4268 = vunpack.c.l.b16 %v4170
      %v4269 = vunpack.c.h.b16 %v4170
      %v4270 = vunpack.c.l.b16 %v4171
      %v4271 = vunpack.c.h.b16 %v4171
      %v4272 = vunpack.c.l.b16 %v4172
      %v4273 = vunpack.c.h.b16 %v4172
      %v4274 = vunpack.c.l.b16 %v4173
      %v4275 = vunpack.c.h.b16 %v4173
      %v4276 = vunpack.c.l.b16 %v4174
      %v4277 = vunpack.c.h.b16 %v4174
      %v4278 = vpack.c.b16 %v4232, %v4230
      %v4279 = vpack.c.b16 %v4233, %v4231
      %v4280 = vpack.c.b16 %v4236, %v4234
      %v4281 = vpack.c.b16 %v4237, %v4235
      %v4282 = vpack.c.b16 %v4240, %v4238
      %v4283 = vpack.c.b16 %v4241, %v4239
      %v4284 = vpack.c.b16 %v4244, %v4242
      %v4285 = vpack.c.b16 %v4245, %v4243
      %v4286 = vpack.c.b16 %v4248, %v4246
      %v4287 = vpack.c.b16 %v4249, %v4247
      %v4288 = vpack.c.b16 %v4252, %v4250
      %v4289 = vpack.c.b16 %v4253, %v4251
      %v4290 = vpack.c.b16 %v4256, %v4254
      %v4291 = vpack.c.b16 %v4257, %v4255
      %v4292 = vpack.c.b16 %v4260, %v4258
      %v4293 = vpack.c.b16 %v4261, %v4259
      %v4294 = vpack.c.b16 %v4264, %v4262
      %v4295 = vpack.c.b16 %v4265, %v4263
      %v4296 = vpack.c.b16 %v4268, %v4266
      %v4297 = vpack.c.b16 %v4269, %v4267
      %v4298 = vpack.c.b16 %v4272, %v4270
      %v4299 = vpack.c.b16 %v4273, %v4271
      %v4300 = vpack.c.b16 %v4276, %v4274
      %v4301 = vpack.c.b16 %v4277, %v4275
      %v4327 = vsel %vm2860, %v4204, 0
      %4329 = vmatprep.subr.bf16.mxu0 %v4279
      %4330 = vmatpush1.bf16.msra.mxu0 %v4278
      %4331 = vmatprep.subr.bf16.mxu0 %v4281
      %4332 = vmatpush1.bf16.msra.mxu0 %v4280
      %4333 = vmatprep.subr.bf16.mxu0 %v4283
      %4334 = vmatpush1.bf16.msra.mxu0 %v4282
      %4335 = vmatprep.subr.bf16.mxu0 %v4285
      %4336 = vmatpush1.bf16.msra.mxu0 %v4284
      %4337 = vmatprep.subr.bf16.mxu0 %v4287
      %4338 = vmatpush1.bf16.msra.mxu0 %v4286
      %4339 = vmatprep.subr.bf16.mxu0 %v4289
      %4340 = vmatpush1.bf16.msra.mxu0 %v4288
      %4341 = vmatprep.subr.bf16.mxu0 %v4291
      %4342 = vmatpush1.bf16.msra.mxu0 %v4290
      %4343 = vmatprep.subr.bf16.mxu0 %v4293
      %4344 = vmatpush1.bf16.msra.mxu0 %v4292
      %4345 = vmatprep.subr.bf16.mxu0 %v4295
      %4346 = vmatpush1.bf16.msra.mxu0 %v4294
      %4347 = vmatprep.subr.bf16.mxu0 %v4297
      %4348 = vmatpush1.bf16.msra.mxu0 %v4296
      %4349 = vmatprep.subr.bf16.mxu0 %v4299
      %4350 = vmatpush1.bf16.msra.mxu0 %v4298
      %4351 = vmatprep.subr.bf16.mxu0 %v4301
      %4352 = vmatpush1.bf16.msra.mxu0 %v4300
      %4353 = vmatprep.subr.bf16.mxu0 0
      %4354 = vmatpush1.bf16.msra.mxu0 0
      %4355 = vmatprep.subr.bf16.mxu0 0
      %4356 = vmatpush1.bf16.msra.mxu0 0
      %4357 = vmatprep.subr.bf16.mxu0 0
      %4358 = vmatpush1.bf16.msra.mxu0 0
      %4359 = vmatprep.subr.bf16.mxu0 0
      %4360 = vmatpush1.bf16.msra.mxu0 0
      %4361 = vmatprep.mubr.bf16.mxu0 %v4327
      %4362 = vmatmul.mubr.bf16.gmra.mrb[0].mxu0 %v4203
      %v4363 = vpop.f32.mrb[0].mxu0
      %v4364 = vadd.f32 0.0, %v4363
      %v4365 = vpop.f32.mrb[0].mxu0
      %v4366 = vadd.f32 0.0, %v4365
      %v4367 = vpop.f32.mrb[0].mxu0
      %v4368 = vpop.f32.mrb[0].mxu0
      %4369 = vdwg.mxu0
      %v4370 = vadd.f32 %v4148, %v4364
      %v4371 = vadd.f32 %v4149, %v4366
      %v4372 = vld [vmem:[%s6] sm:$0x3]
      %v4374 = vlaneseq
      %v4375 = vshrl.u32 %v4374, 7
      %v4376 = vsub.s32 0, %v4375
      %v4377 = vrot.slane %v4372, %v4376
      %v4378 = vlaneseq
      %v4379 = vshrl.u32 %v4378, 7
      %v4380 = vsub.s32 1, %v4379
      %v4381 = vrot.slane %v4372, %v4380
      %v4384 = vadd.f32 %v4370, %v4377
      %v4385 = vadd.f32 %v4371, %v4381
      %v4386 = vmax.f32 %v4384, 0.0
      %v4387 = vmax.f32 %v4385, 0.0
      %v4388 = vpack.c.bf16 %v4386, %v4386
      %v4389 = vpack.c.bf16 %v4387, %v4387
      %v4390 = vld [vmem:[%s7] sm:$0xf]
      %v4391 = vld [vmem:[%s7 + $0x4] sm:$0xf]
      %v4392 = vld [vmem:[%s7 + $0x8] sm:$0xf]
      %v4393 = vld [vmem:[%s7 + $0xc] sm:$0xf]
      %v4394 = vld [vmem:[%s7 + $0x10] sm:$0xf]
      %v4395 = vld [vmem:[%s7 + $0x14] sm:$0xf]
      %v4396 = vld [vmem:[%s7 + $0x18] sm:$0xf]
      %v4397 = vld [vmem:[%s7 + $0x1c] sm:$0xf]
      %v4398 = vld [vmem:[%s7 + $0x20] sm:$0xf]
      %v4399 = vld [vmem:[%s7 + $0x24] sm:$0xf]
      %v4400 = vld [vmem:[%s7 + $0x28] sm:$0xf]
      %v4401 = vld [vmem:[%s7 + $0x2c] sm:$0xf]
      %v4402 = vld [vmem:[%s7 + $0x30] sm:$0xf]
      %v4403 = vld [vmem:[%s7 + $0x34] sm:$0xf]
      %v4404 = vld [vmem:[%s7 + $0x38] sm:$0xf]
      %v4405 = vld [vmem:[%s7 + $0x3c] sm:$0xf]
      %v4406 = vld [vmem:[%s7 + $0x40] sm:$0xf]
      %v4407 = vld [vmem:[%s7 + $0x44] sm:$0xf]
      %v4408 = vld [vmem:[%s7 + $0x48] sm:$0xf]
      %v4409 = vld [vmem:[%s7 + $0x4c] sm:$0xf]
      %v4410 = vld [vmem:[%s7 + $0x50] sm:$0xf]
      %v4411 = vld [vmem:[%s7 + $0x54] sm:$0xf]
      %v4412 = vld [vmem:[%s7 + $0x58] sm:$0xf]
      %v4413 = vld [vmem:[%s7 + $0x5c] sm:$0xf]
      %v4414 = vld [vmem:[%s7 + $0x60] sm:$0xf]
      %v4415 = vld [vmem:[%s7 + $0x64] sm:$0xf]
      %v4416 = vld [vmem:[%s7 + $0x68] sm:$0xf]
      %v4417 = vld [vmem:[%s7 + $0x6c] sm:$0xf]
      %v4418 = vld [vmem:[%s7 + $0x70] sm:$0xf]
      %v4419 = vld [vmem:[%s7 + $0x74] sm:$0xf]
      %v4420 = vld [vmem:[%s7 + $0x78] sm:$0xf]
      %v4421 = vld [vmem:[%s7 + $0x7c] sm:$0xf]
      %v4422 = vld [vmem:[%s8] sm:$0x1]
      %v4424 = vlaneseq
      %v4425 = vshrl.u32 %v4424, 7
      %v4426 = vsub.s32 0, %v4425
      %v4427 = vrot.slane %v4422, %v4426
      %v4461 = vunpack.c.l.b16 %v4390
      %v4462 = vunpack.c.l.b16 %v4391
      %v4463 = vunpack.c.l.b16 %v4392
      %v4464 = vunpack.c.l.b16 %v4393
      %v4465 = vunpack.c.l.b16 %v4394
      %v4466 = vunpack.c.l.b16 %v4395
      %v4467 = vunpack.c.l.b16 %v4396
      %v4468 = vunpack.c.l.b16 %v4397
      %v4469 = vunpack.c.l.b16 %v4398
      %v4470 = vunpack.c.l.b16 %v4399
      %v4471 = vunpack.c.l.b16 %v4400
      %v4472 = vunpack.c.l.b16 %v4401
      %v4473 = vunpack.c.l.b16 %v4402
      %v4474 = vunpack.c.l.b16 %v4403
      %v4475 = vunpack.c.l.b16 %v4404
      %v4476 = vunpack.c.l.b16 %v4405
      %v4477 = vunpack.c.l.b16 %v4406
      %v4478 = vunpack.c.l.b16 %v4407
      %v4479 = vunpack.c.l.b16 %v4408
      %v4480 = vunpack.c.l.b16 %v4409
      %v4481 = vunpack.c.l.b16 %v4410
      %v4482 = vunpack.c.l.b16 %v4411
      %v4483 = vunpack.c.l.b16 %v4412
      %v4484 = vunpack.c.l.b16 %v4413
      %v4485 = vunpack.c.l.b16 %v4414
      %v4486 = vunpack.c.l.b16 %v4415
      %v4487 = vunpack.c.l.b16 %v4416
      %v4488 = vunpack.c.l.b16 %v4417
      %v4489 = vunpack.c.l.b16 %v4418
      %v4490 = vunpack.c.l.b16 %v4419
      %v4491 = vunpack.c.l.b16 %v4420
      %v4492 = vunpack.c.l.b16 %v4421
      %v4493 = vpack.c.b16 %v4462, %v4461
      %v4494 = vpack.c.b16 %v4464, %v4463
      %v4495 = vpack.c.b16 %v4466, %v4465
      %v4496 = vpack.c.b16 %v4468, %v4467
      %v4497 = vpack.c.b16 %v4470, %v4469
      %v4498 = vpack.c.b16 %v4472, %v4471
      %v4499 = vpack.c.b16 %v4474, %v4473
      %v4500 = vpack.c.b16 %v4476, %v4475
      %v4501 = vpack.c.b16 %v4478, %v4477
      %v4502 = vpack.c.b16 %v4480, %v4479
      %v4503 = vpack.c.b16 %v4482, %v4481
      %v4504 = vpack.c.b16 %v4484, %v4483
      %v4505 = vpack.c.b16 %v4486, %v4485
      %v4506 = vpack.c.b16 %v4488, %v4487
      %v4507 = vpack.c.b16 %v4490, %v4489
      %v4508 = vpack.c.b16 %v4492, %v4491
      %4525 = vmatprep.subr.bf16.mxu0 0
      %4526 = vmatpush1.bf16.msra.mxu0 %v4493
      %4527 = vmatprep.subr.bf16.mxu0 0
      %4528 = vmatpush1.bf16.msra.mxu0 %v4494
      %4529 = vmatprep.subr.bf16.mxu0 0
      %4530 = vmatpush1.bf16.msra.mxu0 %v4495
      %4531 = vmatprep.subr.bf16.mxu0 0
      %4532 = vmatpush1.bf16.msra.mxu0 %v4496
      %4533 = vmatprep.subr.bf16.mxu0 0
      %4534 = vmatpush1.bf16.msra.mxu0 %v4497
      %4535 = vmatprep.subr.bf16.mxu0 0
      %4536 = vmatpush1.bf16.msra.mxu0 %v4498
      %4537 = vmatprep.subr.bf16.mxu0 0
      %4538 = vmatpush1.bf16.msra.mxu0 %v4499
      %4539 = vmatprep.subr.bf16.mxu0 0
      %4540 = vmatpush1.bf16.msra.mxu0 %v4500
      %4541 = vmatprep.subr.bf16.mxu0 0
      %4542 = vmatpush1.bf16.msra.mxu0 %v4501
      %4543 = vmatprep.subr.bf16.mxu0 0
      %4544 = vmatpush1.bf16.msra.mxu0 %v4502
      %4545 = vmatprep.subr.bf16.mxu0 0
      %4546 = vmatpush1.bf16.msra.mxu0 %v4503
      %4547 = vmatprep.subr.bf16.mxu0 0
      %4548 = vmatpush1.bf16.msra.mxu0 %v4504
      %4549 = vmatprep.subr.bf16.mxu0 0
      %4550 = vmatpush1.bf16.msra.mxu0 %v4505
      %4551 = vmatprep.subr.bf16.mxu0 0
      %4552 = vmatpush1.bf16.msra.mxu0 %v4506
      %4553 = vmatprep.subr.bf16.mxu0 0
      %4554 = vmatpush1.bf16.msra.mxu0 %v4507
      %4555 = vmatprep.subr.bf16.mxu0 0
      %4556 = vmatpush1.bf16.msra.mxu0 %v4508
      %4557 = vmatprep.mubr.bf16.mxu0 %v4389
      %4558 = vmatmul.mubr.bf16.gmra.mrb[0].mxu0 %v4388
      %v4559 = vpop.f32.mrb[0].mxu0
      %v4560 = vadd.f32 %v4427, %v4559
      %v4561 = vpop.f32.mrb[0].mxu0
      %v4562 = vpop.f32.mrb[0].mxu0
      %v4563 = vpop.f32.mrb[0].mxu0
      %4564 = vdwg.mxu0
      %4565 = vst [vmem:[%s335] sm:$0xff] %v4560
      %p4566 = scmp.lt.s32.totalorder %s20, 1
      %s4567 = scalar_select %p4566, %s20, 1
      %s4568 = smul.addr %s4567, 8
      %s4569 = scalar_lea.vmem %s9, %s4568
      // Predicated region
      $region57: #{dqn_forward.1} parent=55 // pred_check
        %p4570 = pneg %p232
      $region58: #{dqn_forward.1} parent=55 // pred_check_branch
        %4572 = sbr.rel (%p4570) target = $region60
      $region59: #{dqn_forward.1} parent=55 // pred_region
        _
      $region60: #{dqn_forward.1} parent=55 // pred_fallthru
        _
    $region56: #{dqn_forward.1} parent=5 // pred_fallthru
      _
    %p4573 = scmp.le.s32.totalorder 2, %s15
    // Predicated region
    $region61: #{dqn_forward.1} parent=5 // pred_check
      %p4574 = pneg %p4573
    $region62: #{dqn_forward.1} parent=5 // pred_check_branch
      %4576 = sbr.rel (%p4574) target = $region64
    $region63: #{dqn_forward.1} parent=5 // pred_region
      %s4577 = ssub.s32 %s15, 2
      // Predicated region
      $region65: #{dqn_forward.1} parent=63 // pred_check
        %p4578 = pneg %p238
      $region66: #{dqn_forward.1} parent=63 // pred_check_branch
        %4580 = sbr.rel (%p4578) target = $region68
      $region67: #{dqn_forward.1} parent=63 // pred_region
        %p4581 = scmp.lt.s32.totalorder %s21, 1
        %s4582 = scalar_select %p4581, %s21, 1
        %s4583 = smul.addr %s4582, 8
        %s4584 = scalar_lea.vmem %s9, %s4583
      $region68: #{dqn_forward.1} parent=63 // pred_fallthru
        _
    $region64: #{dqn_forward.1} parent=5 // pred_fallthru
      _
  $region6: #{dqn_forward.1} parent=0 // loop_footer
    %s19 = sadd.s32 1, %s15
  $region7: #{dqn_forward.1} parent=0 // loop_footer_branch
    %14 = sbr.rel target = $region3
  $region8: #{dqn_forward.1} parent=0 // loop_exit
    _

</llo_original>
